<compile_context>
chip_gen: v7x
topology: tpu7x:2x2x1
jax: 0.10.0
libtpu: 0.0.40
codegen_flags: <defaults>
</compile_context>

<pallas_src>
import functools

import jax
import jax.numpy as jnp
from jax.experimental import pallas as pl
from jax.experimental.pallas import tpu as pltpu

_MIB = 1024 * 1024


def _round_up(n, m):
    return ((n + m - 1) // m) * m


def _tile(n_pad, preferred):
    """Largest preferred tile that divides n_pad (n_pad is a multiple of 128)."""
    for t in preferred:
        if n_pad % t == 0:
            return t
    return 128


def _compiler_params(sem, est_bytes):
    # Explicit VMEM budget: v5e's default scoped limit is only 16 MiB, while
    # v7x's physical VMEM is 64 MiB, so never request more than that.
    limit = int(min(max(est_bytes, 32 * _MIB), 64 * _MIB))
    return pltpu.CompilerParams(dimension_semantics=sem, vmem_limit_bytes=limit)


# ---------------------------------------------------------------------------
# Kernel 1: feature projection  XW = X @ W   (bf16 in, f32 MXU acc, bf16 out)
# ---------------------------------------------------------------------------
def xw_kernel(x_ref, w_ref, out_ref):
    out_ref[...] = jnp.dot(
        x_ref[...], w_ref[...], preferred_element_type=jnp.float32
    ).astype(out_ref.dtype)


def project_features(x_bf16, w_bf16, *, tm):
    n, f = x_bf16.shape
    h = w_bf16.shape[1]
    est = 2 * (tm * f * 2 + f * h * 2 + tm * h * 2)
    return pl.pallas_call(
        xw_kernel,
        out_shape=jax.ShapeDtypeStruct((n, h), jnp.bfloat16),
        grid=(n // tm,),
        in_specs=[
            pl.BlockSpec((tm, f), lambda i: (i, 0)),
            pl.BlockSpec((f, h), lambda i: (0, 0)),
        ],
        out_specs=pl.BlockSpec((tm, h), lambda i: (i, 0)),
        compiler_params=_compiler_params(("parallel",), est),
    )(x_bf16, w_bf16)


# ---------------------------------------------------------------------------
# Kernel 2: fused pos/neg GCN encoder
#   acc += A_hat[i,k] @ [XW | XW[perm]][k]      (reduction over k)
#   last k:  + bias, PReLU, mask padded rows, bf16 write, summary partials
# ---------------------------------------------------------------------------
def encoder_kernel(a_ref, xw_ref, b2_ref, alpha2_ref, h_ref, colsum_ref, acc_ref,
                   *, h_dim, tm, tk, n_valid, n_pad):
    i = pl.program_id(0)
    k = pl.program_id(1)

    @pl.when(k == 0)
    def _():
        acc_ref[...] = jnp.zeros_like(acc_ref)

    # RHS is VMEM-resident (DMA'd once); slice the (tk, 2H) slab in-kernel.
    # One fused dot covers both views, so the A_hat tile is read once per step.
    start = pl.multiple_of(k * tk, tk)
    xw_slab = xw_ref[pl.ds(start, tk), :]                       # (tk, 2H) bf16
    acc_ref[...] += jnp.dot(a_ref[...], xw_slab,
                            preferred_element_type=jnp.float32)

    @pl.when(k == pl.num_programs(1) - 1)
    def _():
        # f32 scratch accumulator is kept (instead of accumulating into the
        # output ref) because the handoff to kernel 3 is bf16.
        z = acc_ref[...] + b2_ref[...]                          # (tm, 2H)
        hv = jnp.where(z >= 0.0, z, alpha2_ref[...] * z)        # per-channel PReLU
        if n_pad != n_valid:                                    # zero padded rows
            row = i * tm + jax.lax.broadcasted_iota(jnp.int32, hv.shape, 0)
            hv = jnp.where(row < n_valid, hv, 0.0)
        h_ref[...] = hv.astype(h_ref.dtype)
        # Fused summary reduction: per-row-tile column sums of the positive half
        # (computed from the f32 values, before the bf16 cast).
        colsum_ref[...] = jnp.sum(hv[:, :h_dim], axis=0,
                                  keepdims=True).reshape(1, 1, h_dim)


def encoder_forward(a_hat, xw_comb, b2, alpha2, *, tm, tk, h_dim, n_valid):
    n_pad = a_hat.shape[0]
    h2 = xw_comb.shape[1]
    n_row_tiles = n_pad // tm

    kernel = functools.partial(encoder_kernel, h_dim=h_dim, tm=tm, tk=tk,
                               n_valid=n_valid, n_pad=n_pad)

    est = (2 * tm * tk * 2          # A_hat tile, double-buffered, bf16
           + 2 * n_pad * h2 * 2     # resident XW (budget 2 buffers), bf16
           + tm * h2 * 4            # f32 accumulator scratch
           + 2 * tm * h2 * 2        # bf16 output tile, double-buffered
           + 2 * h_dim * 4          # colsum output tile
           + 4 * h2 * 4)            # bias / PReLU alpha
    # TODO(synk): for very large N the resident XW (4*N*H bytes) exceeds v7x's
    # 64 MiB VMEM; switch to a big-tk (512-1024) streamed RHS in that regime.

    return pl.pallas_call(
        kernel,
        out_shape=(jax.ShapeDtypeStruct((n_pad, h2), jnp.bfloat16),
                   jax.ShapeDtypeStruct((n_row_tiles, 1, h_dim), jnp.float32)),
        grid_spec=pltpu.PrefetchScalarGridSpec(
            num_scalar_prefetch=0,
            grid=(n_pad // tm, n_pad // tk),
            in_specs=[
                pl.BlockSpec((tm, tk), lambda i, k: (i, k)),     # A_hat tile
                pl.BlockSpec((n_pad, h2), lambda i, k: (0, 0)),  # resident [XW|XWperm]
                pl.BlockSpec((1, h2), lambda i, k: (0, 0)),      # bias (dup'd)
                pl.BlockSpec((1, h2), lambda i, k: (0, 0)),      # PReLU alpha (dup'd)
            ],
            out_specs=[
                pl.BlockSpec((tm, h2), lambda i, k: (i, 0)),
                pl.BlockSpec((1, 1, h_dim), lambda i, k: (i, 0, 0)),
            ],
            scratch_shapes=[pltpu.VMEM((tm, h2), jnp.float32)],
        ),
        compiler_params=_compiler_params(("parallel", "arbitrary"), est),
    )(a_hat, xw_comb, b2, alpha2)


# ---------------------------------------------------------------------------
# Kernel 3: reassociated discriminator + per-row BCE-with-logits partials
# ---------------------------------------------------------------------------
def _softplus(z):
    # BCEWithLogits(x, 1) = softplus(-x) ; BCEWithLogits(x, 0) = softplus(x)
    return jnp.maximum(z, 0.0) + jnp.log1p(jnp.exp(-jnp.abs(z)))


def disc_loss_kernel(h_ref, ws_ref, out_ref, *, h_dim):
    ws = ws_ref[...]                                             # (1, H) f32
    hc = h_ref[...].astype(jnp.float32)                          # (tm, 2H)
    s_pos = jnp.sum(hc[:, :h_dim] * ws, axis=1, keepdims=True)   # (tm, 1)
    s_neg = jnp.sum(hc[:, h_dim:] * ws, axis=1, keepdims=True)   # (tm, 1)
    out_ref[...] = _softplus(-s_pos) + _softplus(s_neg)


def disc_loss_forward(h_comb, ws, *, tm, h_dim):
    n_pad, h2 = h_comb.shape
    est = 2 * (tm * h2 * 2 + h_dim * 4 + tm * 4)
    kernel = functools.partial(disc_loss_kernel, h_dim=h_dim)
    return pl.pallas_call(
        kernel,
        out_shape=jax.ShapeDtypeStruct((n_pad, 1), jnp.float32),
        grid=(n_pad // tm,),
        in_specs=[
            pl.BlockSpec((tm, h2), lambda i: (i, 0)),
            pl.BlockSpec((1, h_dim), lambda i: (0, 0)),
        ],
        out_specs=pl.BlockSpec((tm, 1), lambda i: (i, 0)),
        compiler_params=_compiler_params(("parallel",), est),
    )(h_comb, ws)


# ---------------------------------------------------------------------------
# Glue: normalized adjacency (built once), full Infomax forward, param init
# ---------------------------------------------------------------------------
def build_normalized_adjacency(edge_index, num_nodes, num_nodes_padded):
    """A_hat = D^-1/2 (A + I) D^-1/2 with A[dst, src] += 1, zero-padded, bf16."""
    src, dst = edge_index[0], edge_index[1]
    a = jnp.zeros((num_nodes, num_nodes), jnp.float32).at[dst, src].add(1.0)
    a = a + jnp.eye(num_nodes, dtype=jnp.float32)            # self loops
    deg = a.sum(axis=1)
    d_inv_sqrt = jnp.where(deg > 0, deg ** -0.5, 0.0)
    a_hat = d_inv_sqrt[:, None] * a * d_inv_sqrt[None, :]
    pad = num_nodes_padded - num_nodes
    if pad:
        a_hat = jnp.pad(a_hat, ((0, pad), (0, pad)))
    # bf16 storage halves the dominant HBM read; the MXU accumulates in f32.
    return a_hat.astype(jnp.bfloat16)
    # TODO(synk): dense A_hat is O(N^2) memory; very large graphs would need a
    # sparse/paged gather path instead.


def infomax_forward(params, x_pad, a_hat, perm_pad, *, n_valid):
    n_pad = a_hat.shape[0]
    h_dim = params["w_gcn"].shape[1]

    tm_enc = _tile(n_pad, (256, 128))            # fills the v6e/v7x 256x256 MXU
    tk_enc = _tile(n_pad, (256, 128))
    tm_stream = _tile(n_pad, (512, 256, 128))    # pure-streaming kernels

    # Kernel 1: projection computed ONCE with bf16 inputs.
    xw = project_features(x_pad.astype(jnp.bfloat16),
                          params["w_gcn"].astype(jnp.bfloat16),
                          tm=tm_stream)
    # Corrupted view reuses it: x[perm] @ W == (X @ W)[perm]; both views are
    # concatenated along features so the encoder runs a single dot per step.
    xw_comb = jnp.concatenate([xw, xw[perm_pad]], axis=1)        # (n_pad, 2H) bf16

    b2 = jnp.concatenate([params["b_gcn"]] * 2, axis=1)          # (1, 2H)
    alpha2 = jnp.concatenate([params["prelu_alpha"]] * 2, axis=1)

    # Kernel 2: fused encoder (+ fused summary partial sums in its epilogue).
    h_comb, colsum = encoder_forward(a_hat, xw_comb, b2, alpha2,
                                     tm=tm_enc, tk=tk_enc,
                                     h_dim=h_dim, n_valid=n_valid)

    # summary + reassociated discriminator weight: scores = H @ (W_disc @ summary)
    summary = jax.nn.sigmoid(colsum.sum(axis=(0, 1)) / n_valid)        # (H,)
    ws = jnp.dot(params["w_disc"], summary).reshape(1, h_dim)          # (1, H)

    # Kernel 3: per-row BCE partials (parallel grid); padded rows sliced off.
    per_row = disc_loss_forward(h_comb, ws.astype(jnp.float32),
                                tm=tm_stream, h_dim=h_dim)             # (n_pad, 1)
    return jnp.sum(per_row[:n_valid, 0]) / n_valid


def init_params(key, num_features, hidden_dim):
    k_gcn, k_disc = jax.random.split(key)
    # GCNConv weight: glorot uniform; bias: zeros
    glorot_bound = (6.0 / (num_features + hidden_dim)) ** 0.5
    w_gcn = jax.random.uniform(k_gcn, (num_features, hidden_dim), jnp.float32,
                               -glorot_bound, glorot_bound)
    b_gcn = jnp.zeros((1, hidden_dim), jnp.float32)
    # nn.PReLU(hidden_dim): per-channel alpha, init 0.25
    prelu_alpha = jnp.full((1, hidden_dim), 0.25, jnp.float32)
    # Discriminator: uniform(-1/sqrt(H), 1/sqrt(H))
    disc_bound = 1.0 / (hidden_dim ** 0.5)
    w_disc = jax.random.uniform(k_disc, (hidden_dim, hidden_dim), jnp.float32,
                                -disc_bound, disc_bound)
    return {"w_gcn": w_gcn, "b_gcn": b_gcn,
            "prelu_alpha": prelu_alpha, "w_disc": w_disc}


if __name__ == "__main__":
    key = jax.random.PRNGKey(0)
    k_x, k_perm, k_param = jax.random.split(key, 3)

    num_nodes = 256
    num_features = 64
    hidden_dim = 128          # lane-dense (multiple of 128); reference uses 512

    n_pad = _round_up(num_nodes, 128)

    # node features (zero-padded to a multiple of 128 rows)
    x = jax.random.normal(k_x, (num_nodes, num_features), jnp.float32)
    x_pad = jnp.pad(x, ((0, n_pad - num_nodes), (0, 0)))

    # small symmetric ring graph: edges (i -> i+1) and (i+1 -> i)
    idx = jnp.arange(num_nodes)
    src = jnp.concatenate([idx, (idx + 1) % num_nodes])
    dst = jnp.concatenate([(idx + 1) % num_nodes, idx])
    edge_index = jnp.stack([src, dst], axis=0)           # (2, 2*num_nodes)

    # corruption permutation (torch.randperm equivalent, deterministic here);
    # padded rows map to themselves (they are zero and masked downstream).
    perm = jax.random.permutation(k_perm, num_nodes)
    perm_pad = jnp.concatenate([perm, jnp.arange(num_nodes, n_pad)])

    params = init_params(k_param, num_features, hidden_dim)

    # A_hat built once (hoisted out of the forward), zero-padded, stored bf16.
    a_hat = build_normalized_adjacency(edge_index, num_nodes, n_pad)

    fwd = jax.jit(functools.partial(infomax_forward, n_valid=num_nodes))
    loss = fwd(params, x_pad, a_hat, perm_pad)
    loss = jax.block_until_ready(loss)
    assert loss.shape == () and bool(jnp.isfinite(loss))
    print("KERNEL_OK")
</pallas_src>

<mosaic_0001>
module attributes {stable_mosaic.version = 11 : i64} {
  func.func @xw_kernel(%arg0: i32, %arg1: memref<256x64xbf16, #tpu.memory_space<vmem>>, %arg2: memref<64x128xbf16, #tpu.memory_space<vmem>>, %arg3: memref<256x128xbf16, #tpu.memory_space<vmem>>) attributes {dimension_semantics = [#tpu.dimension_semantics<parallel>], iteration_bounds = array<i64: 1>, scalar_prefetch = 0 : i64, scratch_operands = 0 : i64, tpu.core_type = #tpu.core_type<tc>, window_params = [{transform_indices = @transform_0, window_bounds = array<i64: 256, 64>}, {pipeline_mode = #tpu.pipeline_mode<synchronous>, transform_indices = @transform_1, window_bounds = array<i64: 64, 128>}, {transform_indices = @transform_2, window_bounds = array<i64: 256, 128>}]} {
    %c0 = arith.constant 0 : index
    %c0_0 = arith.constant 0 : index
    %0 = vector.load %arg1[%c0, %c0_0] : memref<256x64xbf16, #tpu.memory_space<vmem>>, vector<256x64xbf16>
    %c0_1 = arith.constant 0 : index
    %c0_2 = arith.constant 0 : index
    %1 = vector.load %arg2[%c0_1, %c0_2] : memref<64x128xbf16, #tpu.memory_space<vmem>>, vector<64x128xbf16>
    %cst = arith.constant dense<0.000000e+00> : vector<256x128xf32>
    %2 = tpu.matmul %0, %1, %cst {dimension_numbers = #tpu.dot_dimension_numbers<[1], [0], [0], [1], [0, 0, 1, 1], [], []>} : vector<256x64xbf16>, vector<64x128xbf16>, vector<256x128xf32> -> vector<256x128xf32>
    %3 = arith.truncf %2 : vector<256x128xf32> to vector<256x128xbf16>
    %c0_3 = arith.constant 0 : index
    %c0_4 = arith.constant 0 : index
    %4 = vector.load %arg3[%c0_3, %c0_4] : memref<256x128xbf16, #tpu.memory_space<vmem>>, vector<256x128xbf16>
    tpu.vector_store %arg3[%c0_3, %c0_4], %3 {strides = array<i32>} : memref<256x128xbf16, #tpu.memory_space<vmem>>, vector<256x128xbf16>,
    return
  }
  func.func @transform_0(%arg0: i32) -> (i32, i32) {
    %c0_i32 = arith.constant 0 : i32
    %c0_i32_0 = arith.constant 0 : i32
    return %arg0, %c0_i32 : i32, i32
  }
  func.func @transform_1(%arg0: i32) -> (i32, i32) {
    %c0_i32 = arith.constant 0 : i32
    %c0_i32_0 = arith.constant 0 : i32
    %c0_i32_1 = arith.constant 0 : i32
    return %c0_i32, %c0_i32_0 : i32, i32
  }
  func.func @transform_2(%arg0: i32) -> (i32, i32) {
    %c0_i32 = arith.constant 0 : i32
    %c0_i32_0 = arith.constant 0 : i32
    return %arg0, %c0_i32 : i32, i32
  }
}

module attributes {stable_mosaic.version = 11 : i64} {
  func.func @encoder_kernel(%arg0: i32, %arg1: i32, %arg2: memref<256x256xbf16, #tpu.memory_space<vmem>>, %arg3: memref<256x256xbf16, #tpu.memory_space<vmem>>, %arg4: memref<1x256xf32, #tpu.memory_space<vmem>>, %arg5: memref<1x256xf32, #tpu.memory_space<vmem>>, %arg6: memref<256x256xbf16, #tpu.memory_space<vmem>>, %arg7: memref<1x1x128xf32, #tpu.memory_space<vmem>>, %arg8: memref<256x256xf32, #tpu.memory_space<vmem>>) attributes {dimension_semantics = [#tpu.dimension_semantics<parallel>, #tpu.dimension_semantics<arbitrary>], iteration_bounds = array<i64: 1, 1>, scalar_prefetch = 0 : i64, scratch_operands = 1 : i64, tpu.core_type = #tpu.core_type<tc>, window_params = [{transform_indices = @transform_0, window_bounds = array<i64: 256, 256>}, {pipeline_mode = #tpu.pipeline_mode<synchronous>, transform_indices = @transform_1, window_bounds = array<i64: 256, 256>}, {pipeline_mode = #tpu.pipeline_mode<synchronous>, transform_indices = @transform_2, window_bounds = array<i64: 1, 256>}, {pipeline_mode = #tpu.pipeline_mode<synchronous>, transform_indices = @transform_3, window_bounds = array<i64: 1, 256>}, {transform_indices = @transform_4, window_bounds = array<i64: 256, 256>}, {transform_indices = @transform_5, window_bounds = array<i64: 1, 1, 128>}]} {
    %c0_i32 = arith.constant 0 : i32
    %0 = arith.cmpi eq, %arg1, %c0_i32 : i32
    %1 = arith.extui %0 : i1 to i32
    %c0_i32_0 = arith.constant 0 : i32
    %2 = arith.cmpi ne, %1, %c0_i32_0 : i32
    scf.if %2 {
      %cst_9 = arith.constant 0.000000e+00 : f32
      %15 = vector.broadcast %cst_9 : f32 to vector<256x256xf32>
      %c0_10 = arith.constant 0 : index
      %c0_11 = arith.constant 0 : index
      %16 = vector.load %arg8[%c0_10, %c0_11] : memref<256x256xf32, #tpu.memory_space<vmem>>, vector<256x256xf32>
      tpu.vector_store %arg8[%c0_10, %c0_11], %15 {strides = array<i32>} : memref<256x256xf32, #tpu.memory_space<vmem>>, vector<256x256xf32>,
    } else {
    }
    %c256_i32 = arith.constant 256 : i32
    %3 = arith.muli %arg1, %c256_i32 : i32
    %4 = tpu.assume_multiple %3, 256 : i32
    %5 = arith.index_cast %4 : i32 to index
    %c0 = arith.constant 0 : index
    %6 = vector.load %arg3[%5, %c0] : memref<256x256xbf16, #tpu.memory_space<vmem>>, vector<256x256xbf16>
    %c0_1 = arith.constant 0 : index
    %c0_2 = arith.constant 0 : index
    %7 = vector.load %arg8[%c0_1, %c0_2] : memref<256x256xf32, #tpu.memory_space<vmem>>, vector<256x256xf32>
    %c0_3 = arith.constant 0 : index
    %c0_4 = arith.constant 0 : index
    %8 = vector.load %arg2[%c0_3, %c0_4] : memref<256x256xbf16, #tpu.memory_space<vmem>>, vector<256x256xbf16>
    %cst = arith.constant dense<0.000000e+00> : vector<256x256xf32>
    %9 = tpu.matmul %8, %6, %cst {dimension_numbers = #tpu.dot_dimension_numbers<[1], [0], [0], [1], [0, 0, 1, 1], [], []>} : vector<256x256xbf16>, vector<256x256xbf16>, vector<256x256xf32> -> vector<256x256xf32>
    %10 = arith.addf %7, %9 : vector<256x256xf32>
    %c0_5 = arith.constant 0 : index
    %c0_6 = arith.constant 0 : index
    %11 = vector.load %arg8[%c0_5, %c0_6] : memref<256x256xf32, #tpu.memory_space<vmem>>, vector<256x256xf32>
    tpu.vector_store %arg8[%c0_5, %c0_6], %10 {strides = array<i32>} : memref<256x256xf32, #tpu.memory_space<vmem>>, vector<256x256xf32>,
    %c0_i32_7 = arith.constant 0 : i32
    %12 = arith.cmpi eq, %arg1, %c0_i32_7 : i32
    %13 = arith.extui %12 : i1 to i32
    %c0_i32_8 = arith.constant 0 : i32
    %14 = arith.cmpi ne, %13, %c0_i32_8 : i32
    scf.if %14 {
      %c0_9 = arith.constant 0 : index
      %c0_10 = arith.constant 0 : index
      %15 = vector.load %arg8[%c0_9, %c0_10] : memref<256x256xf32, #tpu.memory_space<vmem>>, vector<256x256xf32>
      %c0_11 = arith.constant 0 : index
      %c0_12 = arith.constant 0 : index
      %16 = vector.load %arg4[%c0_11, %c0_12] : memref<1x256xf32, #tpu.memory_space<vmem>>, vector<1x256xf32>
      %17 = vector.broadcast %16 : vector<1x256xf32> to vector<256x256xf32>
      %18 = arith.addf %15, %17 : vector<256x256xf32>
      %cst_13 = arith.constant 0.000000e+00 : f32
      %19 = vector.broadcast %cst_13 : f32 to vector<256x256xf32>
      %20 = arith.cmpf oge, %18, %19 : vector<256x256xf32>
      %c0_14 = arith.constant 0 : index
      %c0_15 = arith.constant 0 : index
      %21 = vector.load %arg5[%c0_14, %c0_15] : memref<1x256xf32, #tpu.memory_space<vmem>>, vector<1x256xf32>
      %22 = vector.broadcast %21 : vector<1x256xf32> to vector<256x256xf32>
      %23 = arith.mulf %22, %18 : vector<256x256xf32>
      %24 = arith.select %20, %18, %23 : vector<256x256xi1>, vector<256x256xf32>
      %25 = arith.truncf %24 : vector<256x256xf32> to vector<256x256xbf16>
      %c0_16 = arith.constant 0 : index
      %c0_17 = arith.constant 0 : index
      %26 = vector.load %arg6[%c0_16, %c0_17] : memref<256x256xbf16, #tpu.memory_space<vmem>>, vector<256x256xbf16>
      tpu.vector_store %arg6[%c0_16, %c0_17], %25 {strides = array<i32>} : memref<256x256xbf16, #tpu.memory_space<vmem>>, vector<256x256xbf16>,
      %27 = vector.extract_strided_slice %24 {offsets = [0, 0], sizes = [256, 128], strides = [1, 1]} : vector<256x256xf32> to vector<256x128xf32>
      %cst_18 = arith.constant dense<0.000000e+00> : vector<128xf32>
      %28 = vector.multi_reduction <add>, %27, %cst_18 [0] : vector<256x128xf32> to vector<128xf32>
      %29 = vector.shape_cast %28 : vector<128xf32> to vector<1x128xf32>
      %30 = vector.shape_cast %29 : vector<1x128xf32> to vector<1x1x128xf32>
      %c0_19 = arith.constant 0 : index
      %c0_20 = arith.constant 0 : index
      %c0_21 = arith.constant 0 : index
      %31 = vector.load %arg7[%c0_19, %c0_20, %c0_21] : memref<1x1x128xf32, #tpu.memory_space<vmem>>, vector<1x1x128xf32>
      tpu.vector_store %arg7[%c0_19, %c0_20, %c0_21], %30 {strides = array<i32>} : memref<1x1x128xf32, #tpu.memory_space<vmem>>, vector<1x1x128xf32>,
    } else {
    }
    return
  }
  func.func @transform_0(%arg0: i32, %arg1: i32) -> (i32, i32) {
    %c0_i32 = arith.constant 0 : i32
    return %arg0, %arg1 : i32, i32
  }
  func.func @transform_1(%arg0: i32, %arg1: i32) -> (i32, i32) {
    %c0_i32 = arith.constant 0 : i32
    %c0_i32_0 = arith.constant 0 : i32
    %c0_i32_1 = arith.constant 0 : i32
    return %c0_i32, %c0_i32_0 : i32, i32
  }
  func.func @transform_2(%arg0: i32, %arg1: i32) -> (i32, i32) {
    %c0_i32 = arith.constant 0 : i32
    %c0_i32_0 = arith.constant 0 : i32
    %c0_i32_1 = arith.constant 0 : i32
    return %c0_i32, %c0_i32_0 : i32, i32
  }
  func.func @transform_3(%arg0: i32, %arg1: i32) -> (i32, i32) {
    %c0_i32 = arith.constant 0 : i32
    %c0_i32_0 = arith.constant 0 : i32
    %c0_i32_1 = arith.constant 0 : i32
    return %c0_i32, %c0_i32_0 : i32, i32
  }
  func.func @transform_4(%arg0: i32, %arg1: i32) -> (i32, i32) {
    %c0_i32 = arith.constant 0 : i32
    %c0_i32_0 = arith.constant 0 : i32
    return %arg0, %c0_i32 : i32, i32
  }
  func.func @transform_5(%arg0: i32, %arg1: i32) -> (i32, i32, i32) {
    %c0_i32 = arith.constant 0 : i32
    %c0_i32_0 = arith.constant 0 : i32
    %c0_i32_1 = arith.constant 0 : i32
    return %arg0, %c0_i32, %c0_i32_0 : i32, i32, i32
  }
}

module attributes {stable_mosaic.version = 11 : i64} {
  func.func @disc_loss_kernel(%arg0: i32, %arg1: memref<256x256xbf16, #tpu.memory_space<vmem>>, %arg2: memref<1x128xf32, #tpu.memory_space<vmem>>, %arg3: memref<256x1xf32, #tpu.memory_space<vmem>>) attributes {dimension_semantics = [#tpu.dimension_semantics<parallel>], iteration_bounds = array<i64: 1>, scalar_prefetch = 0 : i64, scratch_operands = 0 : i64, tpu.core_type = #tpu.core_type<tc>, window_params = [{transform_indices = @transform_0, window_bounds = array<i64: 256, 256>}, {pipeline_mode = #tpu.pipeline_mode<synchronous>, transform_indices = @transform_1, window_bounds = array<i64: 1, 128>}, {transform_indices = @transform_2, window_bounds = array<i64: 256, 1>}]} {
    %c0 = arith.constant 0 : index
    %c0_0 = arith.constant 0 : index
    %0 = vector.load %arg2[%c0, %c0_0] : memref<1x128xf32, #tpu.memory_space<vmem>>, vector<1x128xf32>
    %c0_1 = arith.constant 0 : index
    %c0_2 = arith.constant 0 : index
    %1 = vector.load %arg1[%c0_1, %c0_2] : memref<256x256xbf16, #tpu.memory_space<vmem>>, vector<256x256xbf16>
    %2 = arith.extf %1 : vector<256x256xbf16> to vector<256x256xf32>
    %3 = vector.extract_strided_slice %2 {offsets = [0, 0], sizes = [256, 128], strides = [1, 1]} : vector<256x256xf32> to vector<256x128xf32>
    %4 = vector.broadcast %0 : vector<1x128xf32> to vector<256x128xf32>
    %5 = arith.mulf %3, %4 : vector<256x128xf32>
    %cst = arith.constant dense<0.000000e+00> : vector<256xf32>
    %6 = vector.multi_reduction <add>, %5, %cst [1] : vector<256x128xf32> to vector<256xf32>
    %7 = vector.shape_cast %6 : vector<256xf32> to vector<256x1xf32>
    %8 = vector.extract_strided_slice %2 {offsets = [0, 128], sizes = [256, 128], strides = [1, 1]} : vector<256x256xf32> to vector<256x128xf32>
    %9 = vector.broadcast %0 : vector<1x128xf32> to vector<256x128xf32>
    %10 = arith.mulf %8, %9 : vector<256x128xf32>
    %cst_3 = arith.constant dense<0.000000e+00> : vector<256xf32>
    %11 = vector.multi_reduction <add>, %10, %cst_3 [1] : vector<256x128xf32> to vector<256xf32>
    %12 = vector.shape_cast %11 : vector<256xf32> to vector<256x1xf32>
    %cst_4 = arith.constant 0.000000e+00 : f32
    %13 = vector.broadcast %cst_4 : f32 to vector<256x1xf32>
    %14 = arith.subf %13, %7 : vector<256x1xf32>
    %cst_5 = arith.constant 0.000000e+00 : f32
    %15 = vector.broadcast %cst_5 : f32 to vector<256x1xf32>
    %16 = arith.maximumf %14, %15 : vector<256x1xf32>
    %17 = math.absf %14 : vector<256x1xf32>
    %cst_6 = arith.constant 0.000000e+00 : f32
    %18 = vector.broadcast %cst_6 : f32 to vector<256x1xf32>
    %19 = arith.subf %18, %17 : vector<256x1xf32>
    %20 = math.exp %19 : vector<256x1xf32>
    %21 = math.log1p %20 : vector<256x1xf32>
    %22 = arith.addf %16, %21 : vector<256x1xf32>
    %cst_7 = arith.constant 0.000000e+00 : f32
    %23 = vector.broadcast %cst_7 : f32 to vector<256x1xf32>
    %24 = arith.maximumf %12, %23 : vector<256x1xf32>
    %25 = math.absf %12 : vector<256x1xf32>
    %cst_8 = arith.constant 0.000000e+00 : f32
    %26 = vector.broadcast %cst_8 : f32 to vector<256x1xf32>
    %27 = arith.subf %26, %25 : vector<256x1xf32>
    %28 = math.exp %27 : vector<256x1xf32>
    %29 = math.log1p %28 : vector<256x1xf32>
    %30 = arith.addf %24, %29 : vector<256x1xf32>
    %31 = arith.addf %22, %30 : vector<256x1xf32>
    %c0_9 = arith.constant 0 : index
    %c0_10 = arith.constant 0 : index
    %32 = vector.load %arg3[%c0_9, %c0_10] : memref<256x1xf32, #tpu.memory_space<vmem>>, vector<256x1xf32>
    tpu.vector_store %arg3[%c0_9, %c0_10], %31 {strides = array<i32>} : memref<256x1xf32, #tpu.memory_space<vmem>>, vector<256x1xf32>,
    return
  }
  func.func @transform_0(%arg0: i32) -> (i32, i32) {
    %c0_i32 = arith.constant 0 : i32
    %c0_i32_0 = arith.constant 0 : i32
    return %arg0, %c0_i32 : i32, i32
  }
  func.func @transform_1(%arg0: i32) -> (i32, i32) {
    %c0_i32 = arith.constant 0 : i32
    %c0_i32_0 = arith.constant 0 : i32
    %c0_i32_1 = arith.constant 0 : i32
    return %c0_i32, %c0_i32_0 : i32, i32
  }
  func.func @transform_2(%arg0: i32) -> (i32, i32) {
    %c0_i32 = arith.constant 0 : i32
    %c0_i32_0 = arith.constant 0 : i32
    return %arg0, %c0_i32 : i32, i32
  }
}

</mosaic_0001>

<llo_original>
// kernel: infomax_forward.3
$region0: #{infomax_forward.3}
  #allocation0 [shape = 'u32[]', space=smem, size = 0x4, offset = 0x4, fixed_abs, tag = 'smem constant byte address 0x4 - core index']
  #allocation1 [shape = 'u32[144,128]{1,0:T(1,128)}', space=vmem, size = 0x12000, scoped, tag = 'internal scratch']
  %s0 = inlined_call_operand.vmem [shape: bf16[256,64], index: 0, kind: input, shape index: {}]
  %s1 = inlined_call_operand.vmem [shape: bf16[64,128], index: 1, kind: input, shape index: {}]
  %s2 = inlined_call_operand.vmem [shape: bf16[256,128], index: 2, kind: output, shape index: {}]
  %s3 = sld [smem:[#allocation0]]
  $region18: #{infomax_forward.3} parent=0
    _
  %s5 = ssub.s32 1, %s3
  %s6 = scalar_select 0, %s5, %s3
  // Predicated region
  $region2: #{infomax_forward.3} parent=0 // pred_check
    _
  $region3: #{infomax_forward.3} parent=0 // pred_check_branch
    %8 = sbr.rel (0) target = $region5
  $region4: #{infomax_forward.3} parent=0 // pred_region
    _
  $region5: #{infomax_forward.3} parent=0 // pred_fallthru
    _
  // Predicated region
  $region6: #{infomax_forward.3} parent=0 // pred_check
    _
  $region7: #{infomax_forward.3} parent=0 // pred_check_branch
    %10 = sbr.rel (0) target = $region9
  $region8: #{infomax_forward.3} parent=0 // pred_region
    _
  $region9: #{infomax_forward.3} parent=0 // pred_fallthru
    _
  %v12 = vld [vmem:[%s0] sm:$0xf]
  %v13 = vld [vmem:[%s0 + $0x4] sm:$0xf]
  %v14 = vld [vmem:[%s0 + $0x8] sm:$0xf]
  %v15 = vld [vmem:[%s0 + $0xc] sm:$0xf]
  %v16 = vld [vmem:[%s0 + $0x10] sm:$0xf]
  %v17 = vld [vmem:[%s0 + $0x14] sm:$0xf]
  %v18 = vld [vmem:[%s0 + $0x18] sm:$0xf]
  %v19 = vld [vmem:[%s0 + $0x1c] sm:$0xf]
  %v20 = vld [vmem:[%s0 + $0x20] sm:$0xf]
  %v21 = vld [vmem:[%s0 + $0x24] sm:$0xf]
  %v22 = vld [vmem:[%s0 + $0x28] sm:$0xf]
  %v23 = vld [vmem:[%s0 + $0x2c] sm:$0xf]
  %v24 = vld [vmem:[%s0 + $0x30] sm:$0xf]
  %v25 = vld [vmem:[%s0 + $0x34] sm:$0xf]
  %v26 = vld [vmem:[%s0 + $0x38] sm:$0xf]
  %v27 = vld [vmem:[%s0 + $0x3c] sm:$0xf]
  %v28 = vld [vmem:[%s0 + $0x40] sm:$0xf]
  %v29 = vld [vmem:[%s0 + $0x44] sm:$0xf]
  %v30 = vld [vmem:[%s0 + $0x48] sm:$0xf]
  %v31 = vld [vmem:[%s0 + $0x4c] sm:$0xf]
  %v32 = vld [vmem:[%s0 + $0x50] sm:$0xf]
  %v33 = vld [vmem:[%s0 + $0x54] sm:$0xf]
  %v34 = vld [vmem:[%s0 + $0x58] sm:$0xf]
  %v35 = vld [vmem:[%s0 + $0x5c] sm:$0xf]
  %v36 = vld [vmem:[%s0 + $0x60] sm:$0xf]
  %v37 = vld [vmem:[%s0 + $0x64] sm:$0xf]
  %v38 = vld [vmem:[%s0 + $0x68] sm:$0xf]
  %v39 = vld [vmem:[%s0 + $0x6c] sm:$0xf]
  %v40 = vld [vmem:[%s0 + $0x70] sm:$0xf]
  %v41 = vld [vmem:[%s0 + $0x74] sm:$0xf]
  %v42 = vld [vmem:[%s0 + $0x78] sm:$0xf]
  %v43 = vld [vmem:[%s0 + $0x7c] sm:$0xf]
  %v44 = vld [vmem:[%s1] sm:$0xf]
  %v45 = vld [vmem:[%s1 + $0x4] sm:$0xf]
  %v46 = vld [vmem:[%s1 + $0x8] sm:$0xf]
  %v47 = vld [vmem:[%s1 + $0xc] sm:$0xf]
  %v48 = vld [vmem:[%s1 + $0x10] sm:$0xf]
  %v49 = vld [vmem:[%s1 + $0x14] sm:$0xf]
  %v50 = vld [vmem:[%s1 + $0x18] sm:$0xf]
  %v51 = vld [vmem:[%s1 + $0x1c] sm:$0xf]
  %v84 = vunpack.c.l.b16 %v12
  %v85 = vunpack.c.l.b16 %v13
  %v86 = vunpack.c.l.b16 %v14
  %v87 = vunpack.c.l.b16 %v15
  %v88 = vunpack.c.l.b16 %v16
  %v89 = vunpack.c.l.b16 %v17
  %v90 = vunpack.c.l.b16 %v18
  %v91 = vunpack.c.l.b16 %v19
  %v92 = vunpack.c.l.b16 %v20
  %v93 = vunpack.c.l.b16 %v21
  %v94 = vunpack.c.l.b16 %v22
  %v95 = vunpack.c.l.b16 %v23
  %v96 = vunpack.c.l.b16 %v24
  %v97 = vunpack.c.l.b16 %v25
  %v98 = vunpack.c.l.b16 %v26
  %v99 = vunpack.c.l.b16 %v27
  %v100 = vunpack.c.l.b16 %v28
  %v101 = vunpack.c.l.b16 %v29
  %v102 = vunpack.c.l.b16 %v30
  %v103 = vunpack.c.l.b16 %v31
  %v104 = vunpack.c.l.b16 %v32
  %v105 = vunpack.c.l.b16 %v33
  %v106 = vunpack.c.l.b16 %v34
  %v107 = vunpack.c.l.b16 %v35
  %v108 = vunpack.c.l.b16 %v36
  %v109 = vunpack.c.l.b16 %v37
  %v110 = vunpack.c.l.b16 %v38
  %v111 = vunpack.c.l.b16 %v39
  %v112 = vunpack.c.l.b16 %v40
  %v113 = vunpack.c.l.b16 %v41
  %v114 = vunpack.c.l.b16 %v42
  %v115 = vunpack.c.l.b16 %v43
  %v116 = vpack.c.b16 %v85, %v84
  %v117 = vpack.c.b16 %v87, %v86
  %v118 = vpack.c.b16 %v89, %v88
  %v119 = vpack.c.b16 %v91, %v90
  %v120 = vpack.c.b16 %v93, %v92
  %v121 = vpack.c.b16 %v95, %v94
  %v122 = vpack.c.b16 %v97, %v96
  %v123 = vpack.c.b16 %v99, %v98
  %v124 = vpack.c.b16 %v101, %v100
  %v125 = vpack.c.b16 %v103, %v102
  %v126 = vpack.c.b16 %v105, %v104
  %v127 = vpack.c.b16 %v107, %v106
  %v128 = vpack.c.b16 %v109, %v108
  %v129 = vpack.c.b16 %v111, %v110
  %v130 = vpack.c.b16 %v113, %v112
  %v131 = vpack.c.b16 %v115, %v114
  %v140 = vunpack.c.l.b16 %v44
  %v141 = vunpack.c.l.b16 %v45
  %v142 = vunpack.c.l.b16 %v46
  %v143 = vunpack.c.l.b16 %v47
  %v144 = vunpack.c.l.b16 %v48
  %v145 = vunpack.c.l.b16 %v49
  %v146 = vunpack.c.l.b16 %v50
  %v147 = vunpack.c.l.b16 %v51
  %v148 = vpack.c.b16 %v141, %v140
  %v149 = vpack.c.b16 %v143, %v142
  %v150 = vpack.c.b16 %v145, %v144
  %v151 = vpack.c.b16 %v147, %v146
  %vm156 = vcmask 523264
  %v158 = vsel %vm156, %v116, 0
  %v161 = vsel %vm156, %v117, 0
  %v164 = vsel %vm156, %v118, 0
  %v167 = vsel %vm156, %v119, 0
  %v170 = vsel %vm156, %v120, 0
  %v173 = vsel %vm156, %v121, 0
  %v176 = vsel %vm156, %v122, 0
  %v179 = vsel %vm156, %v123, 0
  %v182 = vsel %vm156, %v124, 0
  %v185 = vsel %vm156, %v125, 0
  %v188 = vsel %vm156, %v126, 0
  %v191 = vsel %vm156, %v127, 0
  %v194 = vsel %vm156, %v128, 0
  %v197 = vsel %vm156, %v129, 0
  %v200 = vsel %vm156, %v130, 0
  %v203 = vsel %vm156, %v131, 0
  %205 = vmatprep.subr.bf16.mxu0 0
  %206 = vmatpush1.bf16.msra.mxu0 %v148
  %207 = vmatprep.subr.bf16.mxu0 0
  %208 = vmatpush1.bf16.msra.mxu0 %v149
  %209 = vmatprep.subr.bf16.mxu0 0
  %210 = vmatpush1.bf16.msra.mxu0 %v150
  %211 = vmatprep.subr.bf16.mxu0 0
  %212 = vmatpush1.bf16.msra.mxu0 %v151
  %213 = vmatprep.subr.bf16.mxu0 0
  %214 = vmatpush1.bf16.msra.mxu0 0
  %215 = vmatprep.subr.bf16.mxu0 0
  %216 = vmatpush1.bf16.msra.mxu0 0
  %217 = vmatprep.subr.bf16.mxu0 0
  %218 = vmatpush1.bf16.msra.mxu0 0
  %219 = vmatprep.subr.bf16.mxu0 0
  %220 = vmatpush1.bf16.msra.mxu0 0
  %221 = vmatprep.subr.bf16.mxu0 0
  %222 = vmatpush1.bf16.msra.mxu0 0
  %223 = vmatprep.subr.bf16.mxu0 0
  %224 = vmatpush1.bf16.msra.mxu0 0
  %225 = vmatprep.subr.bf16.mxu0 0
  %226 = vmatpush1.bf16.msra.mxu0 0
  %227 = vmatprep.subr.bf16.mxu0 0
  %228 = vmatpush1.bf16.msra.mxu0 0
  %229 = vmatprep.subr.bf16.mxu0 0
  %230 = vmatpush1.bf16.msra.mxu0 0
  %231 = vmatprep.subr.bf16.mxu0 0
  %232 = vmatpush1.bf16.msra.mxu0 0
  %233 = vmatprep.subr.bf16.mxu0 0
  %234 = vmatpush1.bf16.msra.mxu0 0
  %235 = vmatprep.subr.bf16.mxu0 0
  %236 = vmatpush1.bf16.msra.mxu0 0
  %237 = vmatprep.mubr.bf16.mxu0 0
  %238 = vmatmul.mubr.bf16.gmra.mrb[0].mxu0 %v158
  %v239 = vpop.f32.mrb[0].mxu0
  %v240 = vadd.f32 0.0, %v239
  %v241 = vpop.f32.mrb[0].mxu0
  %v242 = vpop.f32.mrb[0].mxu0
  %v243 = vadd.f32 0.0, %v242
  %v244 = vpop.f32.mrb[0].mxu0
  %245 = vmatprep.mubr.bf16.mxu0 0
  %246 = vmatmul.mubr.bf16.gmra.mrb[0].mxu0 %v161
  %v247 = vpop.f32.mrb[0].mxu0
  %v248 = vadd.f32 0.0, %v247
  %v249 = vpop.f32.mrb[0].mxu0
  %v250 = vpop.f32.mrb[0].mxu0
  %v251 = vadd.f32 0.0, %v250
  %v252 = vpop.f32.mrb[0].mxu0
  %253 = vmatprep.mubr.bf16.mxu0 0
  %254 = vmatmul.mubr.bf16.gmra.mrb[0].mxu0 %v164
  %v255 = vpop.f32.mrb[0].mxu0
  %v256 = vadd.f32 0.0, %v255
  %v257 = vpop.f32.mrb[0].mxu0
  %v258 = vpop.f32.mrb[0].mxu0
  %v259 = vadd.f32 0.0, %v258
  %v260 = vpop.f32.mrb[0].mxu0
  %261 = vmatprep.mubr.bf16.mxu0 0
  %262 = vmatmul.mubr.bf16.gmra.mrb[0].mxu0 %v167
  %v263 = vpop.f32.mrb[0].mxu0
  %v264 = vadd.f32 0.0, %v263
  %v265 = vpop.f32.mrb[0].mxu0
  %v266 = vpop.f32.mrb[0].mxu0
  %v267 = vadd.f32 0.0, %v266
  %v268 = vpop.f32.mrb[0].mxu0
  %269 = vmatprep.mubr.bf16.mxu0 0
  %270 = vmatmul.mubr.bf16.gmra.mrb[0].mxu0 %v170
  %v271 = vpop.f32.mrb[0].mxu0
  %v272 = vadd.f32 0.0, %v271
  %v273 = vpop.f32.mrb[0].mxu0
  %v274 = vpop.f32.mrb[0].mxu0
  %v275 = vadd.f32 0.0, %v274
  %v276 = vpop.f32.mrb[0].mxu0
  %277 = vmatprep.mubr.bf16.mxu0 0
  %278 = vmatmul.mubr.bf16.gmra.mrb[0].mxu0 %v173
  %v279 = vpop.f32.mrb[0].mxu0
  %v280 = vadd.f32 0.0, %v279
  %v281 = vpop.f32.mrb[0].mxu0
  %v282 = vpop.f32.mrb[0].mxu0
  %v283 = vadd.f32 0.0, %v282
  %v284 = vpop.f32.mrb[0].mxu0
  %285 = vmatprep.mubr.bf16.mxu0 0
  %286 = vmatmul.mubr.bf16.gmra.mrb[0].mxu0 %v176
  %v287 = vpop.f32.mrb[0].mxu0
  %v288 = vadd.f32 0.0, %v287
  %v289 = vpop.f32.mrb[0].mxu0
  %v290 = vpop.f32.mrb[0].mxu0
  %v291 = vadd.f32 0.0, %v290
  %v292 = vpop.f32.mrb[0].mxu0
  %293 = vmatprep.mubr.bf16.mxu0 0
  %294 = vmatmul.mubr.bf16.gmra.mrb[0].mxu0 %v179
  %v295 = vpop.f32.mrb[0].mxu0
  %v296 = vadd.f32 0.0, %v295
  %v297 = vpop.f32.mrb[0].mxu0
  %v298 = vpop.f32.mrb[0].mxu0
  %v299 = vadd.f32 0.0, %v298
  %v300 = vpop.f32.mrb[0].mxu0
  %301 = vmatprep.mubr.bf16.mxu0 0
  %302 = vmatmul.mubr.bf16.gmra.mrb[0].mxu0 %v182
  %v303 = vpop.f32.mrb[0].mxu0
  %v304 = vadd.f32 0.0, %v303
  %v305 = vpop.f32.mrb[0].mxu0
  %v306 = vpop.f32.mrb[0].mxu0
  %v307 = vadd.f32 0.0, %v306
  %v308 = vpop.f32.mrb[0].mxu0
  %309 = vmatprep.mubr.bf16.mxu0 0
  %310 = vmatmul.mubr.bf16.gmra.mrb[0].mxu0 %v185
  %v311 = vpop.f32.mrb[0].mxu0
  %v312 = vadd.f32 0.0, %v311
  %v313 = vpop.f32.mrb[0].mxu0
  %v314 = vpop.f32.mrb[0].mxu0
  %v315 = vadd.f32 0.0, %v314
  %v316 = vpop.f32.mrb[0].mxu0
  %317 = vmatprep.mubr.bf16.mxu0 0
  %318 = vmatmul.mubr.bf16.gmra.mrb[0].mxu0 %v188
  %v319 = vpop.f32.mrb[0].mxu0
  %v320 = vadd.f32 0.0, %v319
  %v321 = vpop.f32.mrb[0].mxu0
  %v322 = vpop.f32.mrb[0].mxu0
  %v323 = vadd.f32 0.0, %v322
  %v324 = vpop.f32.mrb[0].mxu0
  %325 = vmatprep.mubr.bf16.mxu0 0
  %326 = vmatmul.mubr.bf16.gmra.mrb[0].mxu0 %v191
  %v327 = vpop.f32.mrb[0].mxu0
  %v328 = vadd.f32 0.0, %v327
  %v329 = vpop.f32.mrb[0].mxu0
  %v330 = vpop.f32.mrb[0].mxu0
  %v331 = vadd.f32 0.0, %v330
  %v332 = vpop.f32.mrb[0].mxu0
  %333 = vmatprep.mubr.bf16.mxu0 0
  %334 = vmatmul.mubr.bf16.gmra.mrb[0].mxu0 %v194
  %v335 = vpop.f32.mrb[0].mxu0
  %v336 = vadd.f32 0.0, %v335
  %v337 = vpop.f32.mrb[0].mxu0
  %v338 = vpop.f32.mrb[0].mxu0
  %v339 = vadd.f32 0.0, %v338
  %v340 = vpop.f32.mrb[0].mxu0
  %341 = vmatprep.mubr.bf16.mxu0 0
  %342 = vmatmul.mubr.bf16.gmra.mrb[0].mxu0 %v197
  %v343 = vpop.f32.mrb[0].mxu0
  %v344 = vadd.f32 0.0, %v343
  %v345 = vpop.f32.mrb[0].mxu0
  %v346 = vpop.f32.mrb[0].mxu0
  %v347 = vadd.f32 0.0, %v346
  %v348 = vpop.f32.mrb[0].mxu0
  %349 = vmatprep.mubr.bf16.mxu0 0
  %350 = vmatmul.mubr.bf16.gmra.mrb[0].mxu0 %v200
  %v351 = vpop.f32.mrb[0].mxu0
  %v352 = vadd.f32 0.0, %v351
  %v353 = vpop.f32.mrb[0].mxu0
  %v354 = vpop.f32.mrb[0].mxu0
  %v355 = vadd.f32 0.0, %v354
  %v356 = vpop.f32.mrb[0].mxu0
  %357 = vmatprep.mubr.bf16.mxu0 0
  %358 = vmatmul.mubr.bf16.gmra.mrb[0].mxu0 %v203
  %v359 = vpop.f32.mrb[0].mxu0
  %v360 = vadd.f32 0.0, %v359
  %v361 = vpop.f32.mrb[0].mxu0
  %v362 = vpop.f32.mrb[0].mxu0
  %v363 = vadd.f32 0.0, %v362
  %v364 = vpop.f32.mrb[0].mxu0
  %365 = vdwg.mxu0
  %v366 = vpack.c.bf16 %v243, %v240
  %v367 = vpack.c.bf16 %v251, %v248
  %v368 = vpack.c.bf16 %v259, %v256
  %v369 = vpack.c.bf16 %v267, %v264
  %v370 = vpack.c.bf16 %v275, %v272
  %v371 = vpack.c.bf16 %v283, %v280
  %v372 = vpack.c.bf16 %v291, %v288
  %v373 = vpack.c.bf16 %v299, %v296
  %v374 = vpack.c.bf16 %v307, %v304
  %v375 = vpack.c.bf16 %v315, %v312
  %v376 = vpack.c.bf16 %v323, %v320
  %v377 = vpack.c.bf16 %v331, %v328
  %v378 = vpack.c.bf16 %v339, %v336
  %v379 = vpack.c.bf16 %v347, %v344
  %v380 = vpack.c.bf16 %v355, %v352
  %v381 = vpack.c.bf16 %v363, %v360
  %v398 = vunpack.c.l.b16 %v366
  %v399 = vunpack.c.h.b16 %v366
  %v400 = vunpack.c.l.b16 %v367
  %v401 = vunpack.c.h.b16 %v367
  %v402 = vunpack.c.l.b16 %v368
  %v403 = vunpack.c.h.b16 %v368
  %v404 = vunpack.c.l.b16 %v369
  %v405 = vunpack.c.h.b16 %v369
  %v406 = vunpack.c.l.b16 %v370
  %v407 = vunpack.c.h.b16 %v370
  %v408 = vunpack.c.l.b16 %v371
  %v409 = vunpack.c.h.b16 %v371
  %v410 = vunpack.c.l.b16 %v372
  %v411 = vunpack.c.h.b16 %v372
  %v412 = vunpack.c.l.b16 %v373
  %v413 = vunpack.c.h.b16 %v373
  %v414 = vunpack.c.l.b16 %v374
  %v415 = vunpack.c.h.b16 %v374
  %v416 = vunpack.c.l.b16 %v375
  %v417 = vunpack.c.h.b16 %v375
  %v418 = vunpack.c.l.b16 %v376
  %v419 = vunpack.c.h.b16 %v376
  %v420 = vunpack.c.l.b16 %v377
  %v421 = vunpack.c.h.b16 %v377
  %v422 = vunpack.c.l.b16 %v378
  %v423 = vunpack.c.h.b16 %v378
  %v424 = vunpack.c.l.b16 %v379
  %v425 = vunpack.c.h.b16 %v379
  %v426 = vunpack.c.l.b16 %v380
  %v427 = vunpack.c.h.b16 %v380
  %v428 = vunpack.c.l.b16 %v381
  %v429 = vunpack.c.h.b16 %v381
  %v430 = vpack.c.b16 %v398, %v398
  %v431 = vpack.c.b16 %v399, %v399
  %v432 = vpack.c.b16 %v400, %v400
  %v433 = vpack.c.b16 %v401, %v401
  %v434 = vpack.c.b16 %v402, %v402
  %v435 = vpack.c.b16 %v403, %v403
  %v436 = vpack.c.b16 %v404, %v404
  %v437 = vpack.c.b16 %v405, %v405
  %v438 = vpack.c.b16 %v406, %v406
  %v439 = vpack.c.b16 %v407, %v407
  %v440 = vpack.c.b16 %v408, %v408
  %v441 = vpack.c.b16 %v409, %v409
  %v442 = vpack.c.b16 %v410, %v410
  %v443 = vpack.c.b16 %v411, %v411
  %v444 = vpack.c.b16 %v412, %v412
  %v445 = vpack.c.b16 %v413, %v413
  %v446 = vpack.c.b16 %v414, %v414
  %v447 = vpack.c.b16 %v415, %v415
  %v448 = vpack.c.b16 %v416, %v416
  %v449 = vpack.c.b16 %v417, %v417
  %v450 = vpack.c.b16 %v418, %v418
  %v451 = vpack.c.b16 %v419, %v419
  %v452 = vpack.c.b16 %v420, %v420
  %v453 = vpack.c.b16 %v421, %v421
  %v454 = vpack.c.b16 %v422, %v422
  %v455 = vpack.c.b16 %v423, %v423
  %v456 = vpack.c.b16 %v424, %v424
  %v457 = vpack.c.b16 %v425, %v425
  %v458 = vpack.c.b16 %v426, %v426
  %v459 = vpack.c.b16 %v427, %v427
  %v460 = vpack.c.b16 %v428, %v428
  %v461 = vpack.c.b16 %v429, %v429
  %494 = vst [vmem:[%s2] sm:$0xf] %v430
  %495 = vst [vmem:[%s2 + $0x4] sm:$0xf] %v431
  %496 = vst [vmem:[%s2 + $0x8] sm:$0xf] %v432
  %497 = vst [vmem:[%s2 + $0xc] sm:$0xf] %v433
  %498 = vst [vmem:[%s2 + $0x10] sm:$0xf] %v434
  %499 = vst [vmem:[%s2 + $0x14] sm:$0xf] %v435
  %500 = vst [vmem:[%s2 + $0x18] sm:$0xf] %v436
  %501 = vst [vmem:[%s2 + $0x1c] sm:$0xf] %v437
  %502 = vst [vmem:[%s2 + $0x20] sm:$0xf] %v438
  %503 = vst [vmem:[%s2 + $0x24] sm:$0xf] %v439
  %504 = vst [vmem:[%s2 + $0x28] sm:$0xf] %v440
  %505 = vst [vmem:[%s2 + $0x2c] sm:$0xf] %v441
  %506 = vst [vmem:[%s2 + $0x30] sm:$0xf] %v442
  %507 = vst [vmem:[%s2 + $0x34] sm:$0xf] %v443
  %508 = vst [vmem:[%s2 + $0x38] sm:$0xf] %v444
  %509 = vst [vmem:[%s2 + $0x3c] sm:$0xf] %v445
  %510 = vst [vmem:[%s2 + $0x40] sm:$0xf] %v446
  %511 = vst [vmem:[%s2 + $0x44] sm:$0xf] %v447
  %512 = vst [vmem:[%s2 + $0x48] sm:$0xf] %v448
  %513 = vst [vmem:[%s2 + $0x4c] sm:$0xf] %v449
  %514 = vst [vmem:[%s2 + $0x50] sm:$0xf] %v450
  %515 = vst [vmem:[%s2 + $0x54] sm:$0xf] %v451
  %516 = vst [vmem:[%s2 + $0x58] sm:$0xf] %v452
  %517 = vst [vmem:[%s2 + $0x5c] sm:$0xf] %v453
  %518 = vst [vmem:[%s2 + $0x60] sm:$0xf] %v454
  %519 = vst [vmem:[%s2 + $0x64] sm:$0xf] %v455
  %520 = vst [vmem:[%s2 + $0x68] sm:$0xf] %v456
  %521 = vst [vmem:[%s2 + $0x6c] sm:$0xf] %v457
  %522 = vst [vmem:[%s2 + $0x70] sm:$0xf] %v458
  %523 = vst [vmem:[%s2 + $0x74] sm:$0xf] %v459
  %524 = vst [vmem:[%s2 + $0x78] sm:$0xf] %v460
  %525 = vst [vmem:[%s2 + $0x7c] sm:$0xf] %v461
  // Predicated region
  $region10: #{infomax_forward.3} parent=0 // pred_check
    _
  $region11: #{infomax_forward.3} parent=0 // pred_check_branch
    %527 = sbr.rel (0) target = $region13
  $region12: #{infomax_forward.3} parent=0 // pred_region
    _
  $region13: #{infomax_forward.3} parent=0 // pred_fallthru
    _
  // Predicated region
  $region14: #{infomax_forward.3} parent=0 // pred_check
    _
  $region15: #{infomax_forward.3} parent=0 // pred_check_branch
    %529 = sbr.rel (0) target = $region17
  $region16: #{infomax_forward.3} parent=0 // pred_region
    _
  $region17: #{infomax_forward.3} parent=0 // pred_fallthru
    _

// kernel: infomax_forward.5
$region0: #{infomax_forward.5}
  #allocation0 [shape = 'u32[]', space=smem, size = 0x4, offset = 0x4, fixed_abs, tag = 'smem constant byte address 0x4 - core index']
  #allocation1 [shape = 'u32[144,128]{1,0:T(1,128)}', space=vmem, size = 0x12000, scoped, tag = 'internal scratch']
  %s0 = inlined_call_operand.vmem [shape: bf16[256,256], index: 0, kind: input, shape index: {}]
  %s1 = inlined_call_operand.vmem [shape: f32[1,128], index: 1, kind: input, shape index: {}]
  %s2 = inlined_call_operand.vmem [shape: f32[256,1], index: 2, kind: output, shape index: {}]
  %s3 = sld [smem:[#allocation0]]
  $region18: #{infomax_forward.5} parent=0
    _
  %s5 = ssub.s32 1, %s3
  %s6 = scalar_select 0, %s5, %s3
  // Predicated region
  $region2: #{infomax_forward.5} parent=0 // pred_check
    _
  $region3: #{infomax_forward.5} parent=0 // pred_check_branch
    %8 = sbr.rel (0) target = $region5
  $region4: #{infomax_forward.5} parent=0 // pred_region
    _
  $region5: #{infomax_forward.5} parent=0 // pred_fallthru
    _
  // Predicated region
  $region6: #{infomax_forward.5} parent=0 // pred_check
    _
  $region7: #{infomax_forward.5} parent=0 // pred_check_branch
    %10 = sbr.rel (0) target = $region9
  $region8: #{infomax_forward.5} parent=0 // pred_region
    _
  $region9: #{infomax_forward.5} parent=0 // pred_fallthru
    _
  %v11 = vld [vmem:[%s1] sm:$0x1]
  %v12 = vld [vmem:[%s0] sm:$0xff]
  %v13 = vld [vmem:[%s0 + $0x8] sm:$0xff]
  %v14 = vld [vmem:[%s0 + $0x10] sm:$0xff]
  %v15 = vld [vmem:[%s0 + $0x18] sm:$0xff]
  %v16 = vld [vmem:[%s0 + $0x20] sm:$0xff]
  %v17 = vld [vmem:[%s0 + $0x28] sm:$0xff]
  %v18 = vld [vmem:[%s0 + $0x30] sm:$0xff]
  %v19 = vld [vmem:[%s0 + $0x38] sm:$0xff]
  %v20 = vld [vmem:[%s0 + $0x40] sm:$0xff]
  %v21 = vld [vmem:[%s0 + $0x48] sm:$0xff]
  %v22 = vld [vmem:[%s0 + $0x50] sm:$0xff]
  %v23 = vld [vmem:[%s0 + $0x58] sm:$0xff]
  %v24 = vld [vmem:[%s0 + $0x60] sm:$0xff]
  %v25 = vld [vmem:[%s0 + $0x68] sm:$0xff]
  %v26 = vld [vmem:[%s0 + $0x70] sm:$0xff]
  %v27 = vld [vmem:[%s0 + $0x78] sm:$0xff]
  %v28 = vld [vmem:[%s0 + $0x80] sm:$0xff]
  %v29 = vld [vmem:[%s0 + $0x88] sm:$0xff]
  %v30 = vld [vmem:[%s0 + $0x90] sm:$0xff]
  %v31 = vld [vmem:[%s0 + $0x98] sm:$0xff]
  %v32 = vld [vmem:[%s0 + $0xa0] sm:$0xff]
  %v33 = vld [vmem:[%s0 + $0xa8] sm:$0xff]
  %v34 = vld [vmem:[%s0 + $0xb0] sm:$0xff]
  %v35 = vld [vmem:[%s0 + $0xb8] sm:$0xff]
  %v36 = vld [vmem:[%s0 + $0xc0] sm:$0xff]
  %v37 = vld [vmem:[%s0 + $0xc8] sm:$0xff]
  %v38 = vld [vmem:[%s0 + $0xd0] sm:$0xff]
  %v39 = vld [vmem:[%s0 + $0xd8] sm:$0xff]
  %v40 = vld [vmem:[%s0 + $0xe0] sm:$0xff]
  %v41 = vld [vmem:[%s0 + $0xe8] sm:$0xff]
  %v42 = vld [vmem:[%s0 + $0xf0] sm:$0xff]
  %v43 = vld [vmem:[%s0 + $0xf8] sm:$0xff]
  %v44 = vunpack.c.l.bf16 %v12
  %v45 = vunpack.c.h.bf16 %v12
  %v46 = vunpack.c.l.bf16 %v13
  %v47 = vunpack.c.h.bf16 %v13
  %v48 = vunpack.c.l.bf16 %v14
  %v49 = vunpack.c.h.bf16 %v14
  %v50 = vunpack.c.l.bf16 %v15
  %v51 = vunpack.c.h.bf16 %v15
  %v52 = vunpack.c.l.bf16 %v16
  %v53 = vunpack.c.h.bf16 %v16
  %v54 = vunpack.c.l.bf16 %v17
  %v55 = vunpack.c.h.bf16 %v17
  %v56 = vunpack.c.l.bf16 %v18
  %v57 = vunpack.c.h.bf16 %v18
  %v58 = vunpack.c.l.bf16 %v19
  %v59 = vunpack.c.h.bf16 %v19
  %v60 = vunpack.c.l.bf16 %v20
  %v61 = vunpack.c.h.bf16 %v20
  %v62 = vunpack.c.l.bf16 %v21
  %v63 = vunpack.c.h.bf16 %v21
  %v64 = vunpack.c.l.bf16 %v22
  %v65 = vunpack.c.h.bf16 %v22
  %v66 = vunpack.c.l.bf16 %v23
  %v67 = vunpack.c.h.bf16 %v23
  %v68 = vunpack.c.l.bf16 %v24
  %v69 = vunpack.c.h.bf16 %v24
  %v70 = vunpack.c.l.bf16 %v25
  %v71 = vunpack.c.h.bf16 %v25
  %v72 = vunpack.c.l.bf16 %v26
  %v73 = vunpack.c.h.bf16 %v26
  %v74 = vunpack.c.l.bf16 %v27
  %v75 = vunpack.c.h.bf16 %v27
  %v76 = vunpack.c.l.bf16 %v28
  %v77 = vunpack.c.h.bf16 %v28
  %v78 = vunpack.c.l.bf16 %v29
  %v79 = vunpack.c.h.bf16 %v29
  %v80 = vunpack.c.l.bf16 %v30
  %v81 = vunpack.c.h.bf16 %v30
  %v82 = vunpack.c.l.bf16 %v31
  %v83 = vunpack.c.h.bf16 %v31
  %v84 = vunpack.c.l.bf16 %v32
  %v85 = vunpack.c.h.bf16 %v32
  %v86 = vunpack.c.l.bf16 %v33
  %v87 = vunpack.c.h.bf16 %v33
  %v88 = vunpack.c.l.bf16 %v34
  %v89 = vunpack.c.h.bf16 %v34
  %v90 = vunpack.c.l.bf16 %v35
  %v91 = vunpack.c.h.bf16 %v35
  %v92 = vunpack.c.l.bf16 %v36
  %v93 = vunpack.c.h.bf16 %v36
  %v94 = vunpack.c.l.bf16 %v37
  %v95 = vunpack.c.h.bf16 %v37
  %v96 = vunpack.c.l.bf16 %v38
  %v97 = vunpack.c.h.bf16 %v38
  %v98 = vunpack.c.l.bf16 %v39
  %v99 = vunpack.c.h.bf16 %v39
  %v100 = vunpack.c.l.bf16 %v40
  %v101 = vunpack.c.h.bf16 %v40
  %v102 = vunpack.c.l.bf16 %v41
  %v103 = vunpack.c.h.bf16 %v41
  %v104 = vunpack.c.l.bf16 %v42
  %v105 = vunpack.c.h.bf16 %v42
  %v106 = vunpack.c.l.bf16 %v43
  %v107 = vunpack.c.h.bf16 %v43
  %v109 = vlaneseq
  %v110 = vshrl.u32 %v109, 7
  %v111 = vsub.s32 0, %v110
  %v112 = vrot.slane %v11, %v111
  %v114 = vmul.f32 %v44, %v112
  %v115 = vmul.f32 %v46, %v112
  %v116 = vmul.f32 %v48, %v112
  %v117 = vmul.f32 %v50, %v112
  %v118 = vmul.f32 %v52, %v112
  %v119 = vmul.f32 %v54, %v112
  %v120 = vmul.f32 %v56, %v112
  %v121 = vmul.f32 %v58, %v112
  %v122 = vmul.f32 %v60, %v112
  %v123 = vmul.f32 %v62, %v112
  %v124 = vmul.f32 %v64, %v112
  %v125 = vmul.f32 %v66, %v112
  %v126 = vmul.f32 %v68, %v112
  %v127 = vmul.f32 %v70, %v112
  %v128 = vmul.f32 %v72, %v112
  %v129 = vmul.f32 %v74, %v112
  %v130 = vmul.f32 %v76, %v112
  %v131 = vmul.f32 %v78, %v112
  %v132 = vmul.f32 %v80, %v112
  %v133 = vmul.f32 %v82, %v112
  %v134 = vmul.f32 %v84, %v112
  %v135 = vmul.f32 %v86, %v112
  %v136 = vmul.f32 %v88, %v112
  %v137 = vmul.f32 %v90, %v112
  %v138 = vmul.f32 %v92, %v112
  %v139 = vmul.f32 %v94, %v112
  %v140 = vmul.f32 %v96, %v112
  %v141 = vmul.f32 %v98, %v112
  %v142 = vmul.f32 %v100, %v112
  %v143 = vmul.f32 %v102, %v112
  %v144 = vmul.f32 %v104, %v112
  %v145 = vmul.f32 %v106, %v112
  %146 = vadd.xlane.f32.xlu0 %v114
  %v147 = vpop.xlane.xlu0 %146
  %148 = vadd.xlane.f32.xlu0 %v115
  %v149 = vpop.xlane.xlu0 %148
  %150 = vadd.xlane.f32.xlu0 %v116
  %v151 = vpop.xlane.xlu0 %150
  %152 = vadd.xlane.f32.xlu0 %v117
  %v153 = vpop.xlane.xlu0 %152
  %154 = vadd.xlane.f32.xlu0 %v118
  %v155 = vpop.xlane.xlu0 %154
  %156 = vadd.xlane.f32.xlu0 %v119
  %v157 = vpop.xlane.xlu0 %156
  %158 = vadd.xlane.f32.xlu0 %v120
  %v159 = vpop.xlane.xlu0 %158
  %160 = vadd.xlane.f32.xlu0 %v121
  %v161 = vpop.xlane.xlu0 %160
  %162 = vadd.xlane.f32.xlu0 %v122
  %v163 = vpop.xlane.xlu0 %162
  %164 = vadd.xlane.f32.xlu0 %v123
  %v165 = vpop.xlane.xlu0 %164
  %166 = vadd.xlane.f32.xlu0 %v124
  %v167 = vpop.xlane.xlu0 %166
  %168 = vadd.xlane.f32.xlu0 %v125
  %v169 = vpop.xlane.xlu0 %168
  %170 = vadd.xlane.f32.xlu0 %v126
  %v171 = vpop.xlane.xlu0 %170
  %172 = vadd.xlane.f32.xlu0 %v127
  %v173 = vpop.xlane.xlu0 %172
  %174 = vadd.xlane.f32.xlu0 %v128
  %v175 = vpop.xlane.xlu0 %174
  %176 = vadd.xlane.f32.xlu0 %v129
  %v177 = vpop.xlane.xlu0 %176
  %178 = vadd.xlane.f32.xlu0 %v130
  %v179 = vpop.xlane.xlu0 %178
  %180 = vadd.xlane.f32.xlu0 %v131
  %v181 = vpop.xlane.xlu0 %180
  %182 = vadd.xlane.f32.xlu0 %v132
  %v183 = vpop.xlane.xlu0 %182
  %184 = vadd.xlane.f32.xlu0 %v133
  %v185 = vpop.xlane.xlu0 %184
  %186 = vadd.xlane.f32.xlu0 %v134
  %v187 = vpop.xlane.xlu0 %186
  %188 = vadd.xlane.f32.xlu0 %v135
  %v189 = vpop.xlane.xlu0 %188
  %190 = vadd.xlane.f32.xlu0 %v136
  %v191 = vpop.xlane.xlu0 %190
  %192 = vadd.xlane.f32.xlu0 %v137
  %v193 = vpop.xlane.xlu0 %192
  %194 = vadd.xlane.f32.xlu0 %v138
  %v195 = vpop.xlane.xlu0 %194
  %196 = vadd.xlane.f32.xlu0 %v139
  %v197 = vpop.xlane.xlu0 %196
  %198 = vadd.xlane.f32.xlu0 %v140
  %v199 = vpop.xlane.xlu0 %198
  %200 = vadd.xlane.f32.xlu0 %v141
  %v201 = vpop.xlane.xlu0 %200
  %202 = vadd.xlane.f32.xlu0 %v142
  %v203 = vpop.xlane.xlu0 %202
  %204 = vadd.xlane.f32.xlu0 %v143
  %v205 = vpop.xlane.xlu0 %204
  %206 = vadd.xlane.f32.xlu0 %v144
  %v207 = vpop.xlane.xlu0 %206
  %208 = vadd.xlane.f32.xlu0 %v145
  %v209 = vpop.xlane.xlu0 %208
  %v210 = vmul.f32 %v45, %v112
  %v211 = vmul.f32 %v47, %v112
  %v212 = vmul.f32 %v49, %v112
  %v213 = vmul.f32 %v51, %v112
  %v214 = vmul.f32 %v53, %v112
  %v215 = vmul.f32 %v55, %v112
  %v216 = vmul.f32 %v57, %v112
  %v217 = vmul.f32 %v59, %v112
  %v218 = vmul.f32 %v61, %v112
  %v219 = vmul.f32 %v63, %v112
  %v220 = vmul.f32 %v65, %v112
  %v221 = vmul.f32 %v67, %v112
  %v222 = vmul.f32 %v69, %v112
  %v223 = vmul.f32 %v71, %v112
  %v224 = vmul.f32 %v73, %v112
  %v225 = vmul.f32 %v75, %v112
  %v226 = vmul.f32 %v77, %v112
  %v227 = vmul.f32 %v79, %v112
  %v228 = vmul.f32 %v81, %v112
  %v229 = vmul.f32 %v83, %v112
  %v230 = vmul.f32 %v85, %v112
  %v231 = vmul.f32 %v87, %v112
  %v232 = vmul.f32 %v89, %v112
  %v233 = vmul.f32 %v91, %v112
  %v234 = vmul.f32 %v93, %v112
  %v235 = vmul.f32 %v95, %v112
  %v236 = vmul.f32 %v97, %v112
  %v237 = vmul.f32 %v99, %v112
  %v238 = vmul.f32 %v101, %v112
  %v239 = vmul.f32 %v103, %v112
  %v240 = vmul.f32 %v105, %v112
  %v241 = vmul.f32 %v107, %v112
  %242 = vadd.xlane.f32.xlu0 %v210
  %v243 = vpop.xlane.xlu0 %242
  %244 = vadd.xlane.f32.xlu0 %v211
  %v245 = vpop.xlane.xlu0 %244
  %246 = vadd.xlane.f32.xlu0 %v212
  %v247 = vpop.xlane.xlu0 %246
  %248 = vadd.xlane.f32.xlu0 %v213
  %v249 = vpop.xlane.xlu0 %248
  %250 = vadd.xlane.f32.xlu0 %v214
  %v251 = vpop.xlane.xlu0 %250
  %252 = vadd.xlane.f32.xlu0 %v215
  %v253 = vpop.xlane.xlu0 %252
  %254 = vadd.xlane.f32.xlu0 %v216
  %v255 = vpop.xlane.xlu0 %254
  %256 = vadd.xlane.f32.xlu0 %v217
  %v257 = vpop.xlane.xlu0 %256
  %258 = vadd.xlane.f32.xlu0 %v218
  %v259 = vpop.xlane.xlu0 %258
  %260 = vadd.xlane.f32.xlu0 %v219
  %v261 = vpop.xlane.xlu0 %260
  %262 = vadd.xlane.f32.xlu0 %v220
  %v263 = vpop.xlane.xlu0 %262
  %264 = vadd.xlane.f32.xlu0 %v221
  %v265 = vpop.xlane.xlu0 %264
  %266 = vadd.xlane.f32.xlu0 %v222
  %v267 = vpop.xlane.xlu0 %266
  %268 = vadd.xlane.f32.xlu0 %v223
  %v269 = vpop.xlane.xlu0 %268
  %270 = vadd.xlane.f32.xlu0 %v224
  %v271 = vpop.xlane.xlu0 %270
  %272 = vadd.xlane.f32.xlu0 %v225
  %v273 = vpop.xlane.xlu0 %272
  %274 = vadd.xlane.f32.xlu0 %v226
  %v275 = vpop.xlane.xlu0 %274
  %276 = vadd.xlane.f32.xlu0 %v227
  %v277 = vpop.xlane.xlu0 %276
  %278 = vadd.xlane.f32.xlu0 %v228
  %v279 = vpop.xlane.xlu0 %278
  %280 = vadd.xlane.f32.xlu0 %v229
  %v281 = vpop.xlane.xlu0 %280
  %282 = vadd.xlane.f32.xlu0 %v230
  %v283 = vpop.xlane.xlu0 %282
  %284 = vadd.xlane.f32.xlu0 %v231
  %v285 = vpop.xlane.xlu0 %284
  %286 = vadd.xlane.f32.xlu0 %v232
  %v287 = vpop.xlane.xlu0 %286
  %288 = vadd.xlane.f32.xlu0 %v233
  %v289 = vpop.xlane.xlu0 %288
  %290 = vadd.xlane.f32.xlu0 %v234
  %v291 = vpop.xlane.xlu0 %290
  %292 = vadd.xlane.f32.xlu0 %v235
  %v293 = vpop.xlane.xlu0 %292
  %294 = vadd.xlane.f32.xlu0 %v236
  %v295 = vpop.xlane.xlu0 %294
  %296 = vadd.xlane.f32.xlu0 %v237
  %v297 = vpop.xlane.xlu0 %296
  %298 = vadd.xlane.f32.xlu0 %v238
  %v299 = vpop.xlane.xlu0 %298
  %300 = vadd.xlane.f32.xlu0 %v239
  %v301 = vpop.xlane.xlu0 %300
  %302 = vadd.xlane.f32.xlu0 %v240
  %v303 = vpop.xlane.xlu0 %302
  %304 = vadd.xlane.f32.xlu0 %v241
  %v305 = vpop.xlane.xlu0 %304
  %v306 = vsub.f32 0.0, %v147
  %v307 = vsub.f32 0.0, %v149
  %v308 = vsub.f32 0.0, %v151
  %v309 = vsub.f32 0.0, %v153
  %v310 = vsub.f32 0.0, %v155
  %v311 = vsub.f32 0.0, %v157
  %v312 = vsub.f32 0.0, %v159
  %v313 = vsub.f32 0.0, %v161
  %v314 = vsub.f32 0.0, %v163
  %v315 = vsub.f32 0.0, %v165
  %v316 = vsub.f32 0.0, %v167
  %v317 = vsub.f32 0.0, %v169
  %v318 = vsub.f32 0.0, %v171
  %v319 = vsub.f32 0.0, %v173
  %v320 = vsub.f32 0.0, %v175
  %v321 = vsub.f32 0.0, %v177
  %v322 = vsub.f32 0.0, %v179
  %v323 = vsub.f32 0.0, %v181
  %v324 = vsub.f32 0.0, %v183
  %v325 = vsub.f32 0.0, %v185
  %v326 = vsub.f32 0.0, %v187
  %v327 = vsub.f32 0.0, %v189
  %v328 = vsub.f32 0.0, %v191
  %v329 = vsub.f32 0.0, %v193
  %v330 = vsub.f32 0.0, %v195
  %v331 = vsub.f32 0.0, %v197
  %v332 = vsub.f32 0.0, %v199
  %v333 = vsub.f32 0.0, %v201
  %v334 = vsub.f32 0.0, %v203
  %v335 = vsub.f32 0.0, %v205
  %v336 = vsub.f32 0.0, %v207
  %v337 = vsub.f32 0.0, %v209
  %v338 = vmax.f32 %v306, 0.0
  %v339 = vmax.f32 %v307, 0.0
  %v340 = vmax.f32 %v308, 0.0
  %v341 = vmax.f32 %v309, 0.0
  %v342 = vmax.f32 %v310, 0.0
  %v343 = vmax.f32 %v311, 0.0
  %v344 = vmax.f32 %v312, 0.0
  %v345 = vmax.f32 %v313, 0.0
  %v346 = vmax.f32 %v314, 0.0
  %v347 = vmax.f32 %v315, 0.0
  %v348 = vmax.f32 %v316, 0.0
  %v349 = vmax.f32 %v317, 0.0
  %v350 = vmax.f32 %v318, 0.0
  %v351 = vmax.f32 %v319, 0.0
  %v352 = vmax.f32 %v320, 0.0
  %v353 = vmax.f32 %v321, 0.0
  %v354 = vmax.f32 %v322, 0.0
  %v355 = vmax.f32 %v323, 0.0
  %v356 = vmax.f32 %v324, 0.0
  %v357 = vmax.f32 %v325, 0.0
  %v358 = vmax.f32 %v326, 0.0
  %v359 = vmax.f32 %v327, 0.0
  %v360 = vmax.f32 %v328, 0.0
  %v361 = vmax.f32 %v329, 0.0
  %v362 = vmax.f32 %v330, 0.0
  %v363 = vmax.f32 %v331, 0.0
  %v364 = vmax.f32 %v332, 0.0
  %v365 = vmax.f32 %v333, 0.0
  %v366 = vmax.f32 %v334, 0.0
  %v367 = vmax.f32 %v335, 0.0
  %v368 = vmax.f32 %v336, 0.0
  %v369 = vmax.f32 %v337, 0.0
  %v370 = vand.u32 2147483647, %v306
  %v371 = vand.u32 2147483647, %v307
  %v372 = vand.u32 2147483647, %v308
  %v373 = vand.u32 2147483647, %v309
  %v374 = vand.u32 2147483647, %v310
  %v375 = vand.u32 2147483647, %v311
  %v376 = vand.u32 2147483647, %v312
  %v377 = vand.u32 2147483647, %v313
  %v378 = vand.u32 2147483647, %v314
  %v379 = vand.u32 2147483647, %v315
  %v380 = vand.u32 2147483647, %v316
  %v381 = vand.u32 2147483647, %v317
  %v382 = vand.u32 2147483647, %v318
  %v383 = vand.u32 2147483647, %v319
  %v384 = vand.u32 2147483647, %v320
  %v385 = vand.u32 2147483647, %v321
  %v386 = vand.u32 2147483647, %v322
  %v387 = vand.u32 2147483647, %v323
  %v388 = vand.u32 2147483647, %v324
  %v389 = vand.u32 2147483647, %v325
  %v390 = vand.u32 2147483647, %v326
  %v391 = vand.u32 2147483647, %v327
  %v392 = vand.u32 2147483647, %v328
  %v393 = vand.u32 2147483647, %v329
  %v394 = vand.u32 2147483647, %v330
  %v395 = vand.u32 2147483647, %v331
  %v396 = vand.u32 2147483647, %v332
  %v397 = vand.u32 2147483647, %v333
  %v398 = vand.u32 2147483647, %v334
  %v399 = vand.u32 2147483647, %v335
  %v400 = vand.u32 2147483647, %v336
  %v401 = vand.u32 2147483647, %v337
  %v402 = vsub.f32 0.0, %v370
  %v403 = vsub.f32 0.0, %v371
  %v404 = vsub.f32 0.0, %v372
  %v405 = vsub.f32 0.0, %v373
  %v406 = vsub.f32 0.0, %v374
  %v407 = vsub.f32 0.0, %v375
  %v408 = vsub.f32 0.0, %v376
  %v409 = vsub.f32 0.0, %v377
  %v410 = vsub.f32 0.0, %v378
  %v411 = vsub.f32 0.0, %v379
  %v412 = vsub.f32 0.0, %v380
  %v413 = vsub.f32 0.0, %v381
  %v414 = vsub.f32 0.0, %v382
  %v415 = vsub.f32 0.0, %v383
  %v416 = vsub.f32 0.0, %v384
  %v417 = vsub.f32 0.0, %v385
  %v418 = vsub.f32 0.0, %v386
  %v419 = vsub.f32 0.0, %v387
  %v420 = vsub.f32 0.0, %v388
  %v421 = vsub.f32 0.0, %v389
  %v422 = vsub.f32 0.0, %v390
  %v423 = vsub.f32 0.0, %v391
  %v424 = vsub.f32 0.0, %v392
  %v425 = vsub.f32 0.0, %v393
  %v426 = vsub.f32 0.0, %v394
  %v427 = vsub.f32 0.0, %v395
  %v428 = vsub.f32 0.0, %v396
  %v429 = vsub.f32 0.0, %v397
  %v430 = vsub.f32 0.0, %v398
  %v431 = vsub.f32 0.0, %v399
  %v432 = vsub.f32 0.0, %v400
  %v433 = vsub.f32 0.0, %v401
  %v434 = vmul.f32 %v402, 1.442695
  %v435 = vpow.pop %v434
  %v436 = vmul.f32 %v403, 1.442695
  %v437 = vpow.pop %v436
  %v438 = vmul.f32 %v404, 1.442695
  %v439 = vpow.pop %v438
  %v440 = vmul.f32 %v405, 1.442695
  %v441 = vpow.pop %v440
  %v442 = vmul.f32 %v406, 1.442695
  %v443 = vpow.pop %v442
  %v444 = vmul.f32 %v407, 1.442695
  %v445 = vpow.pop %v444
  %v446 = vmul.f32 %v408, 1.442695
  %v447 = vpow.pop %v446
  %v448 = vmul.f32 %v409, 1.442695
  %v449 = vpow.pop %v448
  %v450 = vmul.f32 %v410, 1.442695
  %v451 = vpow.pop %v450
  %v452 = vmul.f32 %v411, 1.442695
  %v453 = vpow.pop %v452
  %v454 = vmul.f32 %v412, 1.442695
  %v455 = vpow.pop %v454
  %v456 = vmul.f32 %v413, 1.442695
  %v457 = vpow.pop %v456
  %v458 = vmul.f32 %v414, 1.442695
  %v459 = vpow.pop %v458
  %v460 = vmul.f32 %v415, 1.442695
  %v461 = vpow.pop %v460
  %v462 = vmul.f32 %v416, 1.442695
  %v463 = vpow.pop %v462
  %v464 = vmul.f32 %v417, 1.442695
  %v465 = vpow.pop %v464
  %v466 = vmul.f32 %v418, 1.442695
  %v467 = vpow.pop %v466
  %v468 = vmul.f32 %v419, 1.442695
  %v469 = vpow.pop %v468
  %v470 = vmul.f32 %v420, 1.442695
  %v471 = vpow.pop %v470
  %v472 = vmul.f32 %v421, 1.442695
  %v473 = vpow.pop %v472
  %v474 = vmul.f32 %v422, 1.442695
  %v475 = vpow.pop %v474
  %v476 = vmul.f32 %v423, 1.442695
  %v477 = vpow.pop %v476
  %v478 = vmul.f32 %v424, 1.442695
  %v479 = vpow.pop %v478
  %v480 = vmul.f32 %v425, 1.442695
  %v481 = vpow.pop %v480
  %v482 = vmul.f32 %v426, 1.442695
  %v483 = vpow.pop %v482
  %v484 = vmul.f32 %v427, 1.442695
  %v485 = vpow.pop %v484
  %v486 = vmul.f32 %v428, 1.442695
  %v487 = vpow.pop %v486
  %v488 = vmul.f32 %v429, 1.442695
  %v489 = vpow.pop %v488
  %v490 = vmul.f32 %v430, 1.442695
  %v491 = vpow.pop %v490
  %v492 = vmul.f32 %v431, 1.442695
  %v493 = vpow.pop %v492
  %v494 = vmul.f32 %v432, 1.442695
  %v495 = vpow.pop %v494
  %v496 = vmul.f32 %v433, 1.442695
  %v497 = vpow.pop %v496
  %v498 = vadd.f32 %v435, 1.0
  %v499 = vlog2.pop %v498
  %v500 = vmul.f32 %v499, 0.6931472
  %v501 = vmul.f32 -0.5, %v435
  %v502 = vadd.f32 %v501, 1.0
  %v503 = vmul.f32 %v502, %v435
  %v504 = vand.u32 2147483647, %v435
  %vm505 = vcmp.lt.f32.partialorder %v504, 0.0004427343
  %v506 = vsel %vm505, %v503, %v500
  %v507 = vadd.f32 %v437, 1.0
  %v508 = vlog2.pop %v507
  %v509 = vmul.f32 %v508, 0.6931472
  %v510 = vmul.f32 -0.5, %v437
  %v511 = vadd.f32 %v510, 1.0
  %v512 = vmul.f32 %v511, %v437
  %v513 = vand.u32 2147483647, %v437
  %vm514 = vcmp.lt.f32.partialorder %v513, 0.0004427343
  %v515 = vsel %vm514, %v512, %v509
  %v516 = vadd.f32 %v439, 1.0
  %v517 = vlog2.pop %v516
  %v518 = vmul.f32 %v517, 0.6931472
  %v519 = vmul.f32 -0.5, %v439
  %v520 = vadd.f32 %v519, 1.0
  %v521 = vmul.f32 %v520, %v439
  %v522 = vand.u32 2147483647, %v439
  %vm523 = vcmp.lt.f32.partialorder %v522, 0.0004427343
  %v524 = vsel %vm523, %v521, %v518
  %v525 = vadd.f32 %v441, 1.0
  %v526 = vlog2.pop %v525
  %v527 = vmul.f32 %v526, 0.6931472
  %v528 = vmul.f32 -0.5, %v441
  %v529 = vadd.f32 %v528, 1.0
  %v530 = vmul.f32 %v529, %v441
  %v531 = vand.u32 2147483647, %v441
  %vm532 = vcmp.lt.f32.partialorder %v531, 0.0004427343
  %v533 = vsel %vm532, %v530, %v527
  %v534 = vadd.f32 %v443, 1.0
  %v535 = vlog2.pop %v534
  %v536 = vmul.f32 %v535, 0.6931472
  %v537 = vmul.f32 -0.5, %v443
  %v538 = vadd.f32 %v537, 1.0
  %v539 = vmul.f32 %v538, %v443
  %v540 = vand.u32 2147483647, %v443
  %vm541 = vcmp.lt.f32.partialorder %v540, 0.0004427343
  %v542 = vsel %vm541, %v539, %v536
  %v543 = vadd.f32 %v445, 1.0
  %v544 = vlog2.pop %v543
  %v545 = vmul.f32 %v544, 0.6931472
  %v546 = vmul.f32 -0.5, %v445
  %v547 = vadd.f32 %v546, 1.0
  %v548 = vmul.f32 %v547, %v445
  %v549 = vand.u32 2147483647, %v445
  %vm550 = vcmp.lt.f32.partialorder %v549, 0.0004427343
  %v551 = vsel %vm550, %v548, %v545
  %v552 = vadd.f32 %v447, 1.0
  %v553 = vlog2.pop %v552
  %v554 = vmul.f32 %v553, 0.6931472
  %v555 = vmul.f32 -0.5, %v447
  %v556 = vadd.f32 %v555, 1.0
  %v557 = vmul.f32 %v556, %v447
  %v558 = vand.u32 2147483647, %v447
  %vm559 = vcmp.lt.f32.partialorder %v558, 0.0004427343
  %v560 = vsel %vm559, %v557, %v554
  %v561 = vadd.f32 %v449, 1.0
  %v562 = vlog2.pop %v561
  %v563 = vmul.f32 %v562, 0.6931472
  %v564 = vmul.f32 -0.5, %v449
  %v565 = vadd.f32 %v564, 1.0
  %v566 = vmul.f32 %v565, %v449
  %v567 = vand.u32 2147483647, %v449
  %vm568 = vcmp.lt.f32.partialorder %v567, 0.0004427343
  %v569 = vsel %vm568, %v566, %v563
  %v570 = vadd.f32 %v451, 1.0
  %v571 = vlog2.pop %v570
  %v572 = vmul.f32 %v571, 0.6931472
  %v573 = vmul.f32 -0.5, %v451
  %v574 = vadd.f32 %v573, 1.0
  %v575 = vmul.f32 %v574, %v451
  %v576 = vand.u32 2147483647, %v451
  %vm577 = vcmp.lt.f32.partialorder %v576, 0.0004427343
  %v578 = vsel %vm577, %v575, %v572
  %v579 = vadd.f32 %v453, 1.0
  %v580 = vlog2.pop %v579
  %v581 = vmul.f32 %v580, 0.6931472
  %v582 = vmul.f32 -0.5, %v453
  %v583 = vadd.f32 %v582, 1.0
  %v584 = vmul.f32 %v583, %v453
  %v585 = vand.u32 2147483647, %v453
  %vm586 = vcmp.lt.f32.partialorder %v585, 0.0004427343
  %v587 = vsel %vm586, %v584, %v581
  %v588 = vadd.f32 %v455, 1.0
  %v589 = vlog2.pop %v588
  %v590 = vmul.f32 %v589, 0.6931472
  %v591 = vmul.f32 -0.5, %v455
  %v592 = vadd.f32 %v591, 1.0
  %v593 = vmul.f32 %v592, %v455
  %v594 = vand.u32 2147483647, %v455
  %vm595 = vcmp.lt.f32.partialorder %v594, 0.0004427343
  %v596 = vsel %vm595, %v593, %v590
  %v597 = vadd.f32 %v457, 1.0
  %v598 = vlog2.pop %v597
  %v599 = vmul.f32 %v598, 0.6931472
  %v600 = vmul.f32 -0.5, %v457
  %v601 = vadd.f32 %v600, 1.0
  %v602 = vmul.f32 %v601, %v457
  %v603 = vand.u32 2147483647, %v457
  %vm604 = vcmp.lt.f32.partialorder %v603, 0.0004427343
  %v605 = vsel %vm604, %v602, %v599
  %v606 = vadd.f32 %v459, 1.0
  %v607 = vlog2.pop %v606
  %v608 = vmul.f32 %v607, 0.6931472
  %v609 = vmul.f32 -0.5, %v459
  %v610 = vadd.f32 %v609, 1.0
  %v611 = vmul.f32 %v610, %v459
  %v612 = vand.u32 2147483647, %v459
  %vm613 = vcmp.lt.f32.partialorder %v612, 0.0004427343
  %v614 = vsel %vm613, %v611, %v608
  %v615 = vadd.f32 %v461, 1.0
  %v616 = vlog2.pop %v615
  %v617 = vmul.f32 %v616, 0.6931472
  %v618 = vmul.f32 -0.5, %v461
  %v619 = vadd.f32 %v618, 1.0
  %v620 = vmul.f32 %v619, %v461
  %v621 = vand.u32 2147483647, %v461
  %vm622 = vcmp.lt.f32.partialorder %v621, 0.0004427343
  %v623 = vsel %vm622, %v620, %v617
  %v624 = vadd.f32 %v463, 1.0
  %v625 = vlog2.pop %v624
  %v626 = vmul.f32 %v625, 0.6931472
  %v627 = vmul.f32 -0.5, %v463
  %v628 = vadd.f32 %v627, 1.0
  %v629 = vmul.f32 %v628, %v463
  %v630 = vand.u32 2147483647, %v463
  %vm631 = vcmp.lt.f32.partialorder %v630, 0.0004427343
  %v632 = vsel %vm631, %v629, %v626
  %v633 = vadd.f32 %v465, 1.0
  %v634 = vlog2.pop %v633
  %v635 = vmul.f32 %v634, 0.6931472
  %v636 = vmul.f32 -0.5, %v465
  %v637 = vadd.f32 %v636, 1.0
  %v638 = vmul.f32 %v637, %v465
  %v639 = vand.u32 2147483647, %v465
  %vm640 = vcmp.lt.f32.partialorder %v639, 0.0004427343
  %v641 = vsel %vm640, %v638, %v635
  %v642 = vadd.f32 %v467, 1.0
  %v643 = vlog2.pop %v642
  %v644 = vmul.f32 %v643, 0.6931472
  %v645 = vmul.f32 -0.5, %v467
  %v646 = vadd.f32 %v645, 1.0
  %v647 = vmul.f32 %v646, %v467
  %v648 = vand.u32 2147483647, %v467
  %vm649 = vcmp.lt.f32.partialorder %v648, 0.0004427343
  %v650 = vsel %vm649, %v647, %v644
  %v651 = vadd.f32 %v469, 1.0
  %v652 = vlog2.pop %v651
  %v653 = vmul.f32 %v652, 0.6931472
  %v654 = vmul.f32 -0.5, %v469
  %v655 = vadd.f32 %v654, 1.0
  %v656 = vmul.f32 %v655, %v469
  %v657 = vand.u32 2147483647, %v469
  %vm658 = vcmp.lt.f32.partialorder %v657, 0.0004427343
  %v659 = vsel %vm658, %v656, %v653
  %v660 = vadd.f32 %v471, 1.0
  %v661 = vlog2.pop %v660
  %v662 = vmul.f32 %v661, 0.6931472
  %v663 = vmul.f32 -0.5, %v471
  %v664 = vadd.f32 %v663, 1.0
  %v665 = vmul.f32 %v664, %v471
  %v666 = vand.u32 2147483647, %v471
  %vm667 = vcmp.lt.f32.partialorder %v666, 0.0004427343
  %v668 = vsel %vm667, %v665, %v662
  %v669 = vadd.f32 %v473, 1.0
  %v670 = vlog2.pop %v669
  %v671 = vmul.f32 %v670, 0.6931472
  %v672 = vmul.f32 -0.5, %v473
  %v673 = vadd.f32 %v672, 1.0
  %v674 = vmul.f32 %v673, %v473
  %v675 = vand.u32 2147483647, %v473
  %vm676 = vcmp.lt.f32.partialorder %v675, 0.0004427343
  %v677 = vsel %vm676, %v674, %v671
  %v678 = vadd.f32 %v475, 1.0
  %v679 = vlog2.pop %v678
  %v680 = vmul.f32 %v679, 0.6931472
  %v681 = vmul.f32 -0.5, %v475
  %v682 = vadd.f32 %v681, 1.0
  %v683 = vmul.f32 %v682, %v475
  %v684 = vand.u32 2147483647, %v475
  %vm685 = vcmp.lt.f32.partialorder %v684, 0.0004427343
  %v686 = vsel %vm685, %v683, %v680
  %v687 = vadd.f32 %v477, 1.0
  %v688 = vlog2.pop %v687
  %v689 = vmul.f32 %v688, 0.6931472
  %v690 = vmul.f32 -0.5, %v477
  %v691 = vadd.f32 %v690, 1.0
  %v692 = vmul.f32 %v691, %v477
  %v693 = vand.u32 2147483647, %v477
  %vm694 = vcmp.lt.f32.partialorder %v693, 0.0004427343
  %v695 = vsel %vm694, %v692, %v689
  %v696 = vadd.f32 %v479, 1.0
  %v697 = vlog2.pop %v696
  %v698 = vmul.f32 %v697, 0.6931472
  %v699 = vmul.f32 -0.5, %v479
  %v700 = vadd.f32 %v699, 1.0
  %v701 = vmul.f32 %v700, %v479
  %v702 = vand.u32 2147483647, %v479
  %vm703 = vcmp.lt.f32.partialorder %v702, 0.0004427343
  %v704 = vsel %vm703, %v701, %v698
  %v705 = vadd.f32 %v481, 1.0
  %v706 = vlog2.pop %v705
  %v707 = vmul.f32 %v706, 0.6931472
  %v708 = vmul.f32 -0.5, %v481
  %v709 = vadd.f32 %v708, 1.0
  %v710 = vmul.f32 %v709, %v481
  %v711 = vand.u32 2147483647, %v481
  %vm712 = vcmp.lt.f32.partialorder %v711, 0.0004427343
  %v713 = vsel %vm712, %v710, %v707
  %v714 = vadd.f32 %v483, 1.0
  %v715 = vlog2.pop %v714
  %v716 = vmul.f32 %v715, 0.6931472
  %v717 = vmul.f32 -0.5, %v483
  %v718 = vadd.f32 %v717, 1.0
  %v719 = vmul.f32 %v718, %v483
  %v720 = vand.u32 2147483647, %v483
  %vm721 = vcmp.lt.f32.partialorder %v720, 0.0004427343
  %v722 = vsel %vm721, %v719, %v716
  %v723 = vadd.f32 %v485, 1.0
  %v724 = vlog2.pop %v723
  %v725 = vmul.f32 %v724, 0.6931472
  %v726 = vmul.f32 -0.5, %v485
  %v727 = vadd.f32 %v726, 1.0
  %v728 = vmul.f32 %v727, %v485
  %v729 = vand.u32 2147483647, %v485
  %vm730 = vcmp.lt.f32.partialorder %v729, 0.0004427343
  %v731 = vsel %vm730, %v728, %v725
  %v732 = vadd.f32 %v487, 1.0
  %v733 = vlog2.pop %v732
  %v734 = vmul.f32 %v733, 0.6931472
  %v735 = vmul.f32 -0.5, %v487
  %v736 = vadd.f32 %v735, 1.0
  %v737 = vmul.f32 %v736, %v487
  %v738 = vand.u32 2147483647, %v487
  %vm739 = vcmp.lt.f32.partialorder %v738, 0.0004427343
  %v740 = vsel %vm739, %v737, %v734
  %v741 = vadd.f32 %v489, 1.0
  %v742 = vlog2.pop %v741
  %v743 = vmul.f32 %v742, 0.6931472
  %v744 = vmul.f32 -0.5, %v489
  %v745 = vadd.f32 %v744, 1.0
  %v746 = vmul.f32 %v745, %v489
  %v747 = vand.u32 2147483647, %v489
  %vm748 = vcmp.lt.f32.partialorder %v747, 0.0004427343
  %v749 = vsel %vm748, %v746, %v743
  %v750 = vadd.f32 %v491, 1.0
  %v751 = vlog2.pop %v750
  %v752 = vmul.f32 %v751, 0.6931472
  %v753 = vmul.f32 -0.5, %v491
  %v754 = vadd.f32 %v753, 1.0
  %v755 = vmul.f32 %v754, %v491
  %v756 = vand.u32 2147483647, %v491
  %vm757 = vcmp.lt.f32.partialorder %v756, 0.0004427343
  %v758 = vsel %vm757, %v755, %v752
  %v759 = vadd.f32 %v493, 1.0
  %v760 = vlog2.pop %v759
  %v761 = vmul.f32 %v760, 0.6931472
  %v762 = vmul.f32 -0.5, %v493
  %v763 = vadd.f32 %v762, 1.0
  %v764 = vmul.f32 %v763, %v493
  %v765 = vand.u32 2147483647, %v493
  %vm766 = vcmp.lt.f32.partialorder %v765, 0.0004427343
  %v767 = vsel %vm766, %v764, %v761
  %v768 = vadd.f32 %v495, 1.0
  %v769 = vlog2.pop %v768
  %v770 = vmul.f32 %v769, 0.6931472
  %v771 = vmul.f32 -0.5, %v495
  %v772 = vadd.f32 %v771, 1.0
  %v773 = vmul.f32 %v772, %v495
  %v774 = vand.u32 2147483647, %v495
  %vm775 = vcmp.lt.f32.partialorder %v774, 0.0004427343
  %v776 = vsel %vm775, %v773, %v770
  %v777 = vadd.f32 %v497, 1.0
  %v778 = vlog2.pop %v777
  %v779 = vmul.f32 %v778, 0.6931472
  %v780 = vmul.f32 -0.5, %v497
  %v781 = vadd.f32 %v780, 1.0
  %v782 = vmul.f32 %v781, %v497
  %v783 = vand.u32 2147483647, %v497
  %vm784 = vcmp.lt.f32.partialorder %v783, 0.0004427343
  %v785 = vsel %vm784, %v782, %v779
  %v786 = vadd.f32 %v338, %v506
  %v787 = vadd.f32 %v339, %v515
  %v788 = vadd.f32 %v340, %v524
  %v789 = vadd.f32 %v341, %v533
  %v790 = vadd.f32 %v342, %v542
  %v791 = vadd.f32 %v343, %v551
  %v792 = vadd.f32 %v344, %v560
  %v793 = vadd.f32 %v345, %v569
  %v794 = vadd.f32 %v346, %v578
  %v795 = vadd.f32 %v347, %v587
  %v796 = vadd.f32 %v348, %v596
  %v797 = vadd.f32 %v349, %v605
  %v798 = vadd.f32 %v350, %v614
  %v799 = vadd.f32 %v351, %v623
  %v800 = vadd.f32 %v352, %v632
  %v801 = vadd.f32 %v353, %v641
  %v802 = vadd.f32 %v354, %v650
  %v803 = vadd.f32 %v355, %v659
  %v804 = vadd.f32 %v356, %v668
  %v805 = vadd.f32 %v357, %v677
  %v806 = vadd.f32 %v358, %v686
  %v807 = vadd.f32 %v359, %v695
  %v808 = vadd.f32 %v360, %v704
  %v809 = vadd.f32 %v361, %v713
  %v810 = vadd.f32 %v362, %v722
  %v811 = vadd.f32 %v363, %v731
  %v812 = vadd.f32 %v364, %v740
  %v813 = vadd.f32 %v365, %v749
  %v814 = vadd.f32 %v366, %v758
  %v815 = vadd.f32 %v367, %v767
  %v816 = vadd.f32 %v368, %v776
  %v817 = vadd.f32 %v369, %v785
  %v818 = vmax.f32 %v243, 0.0
  %v819 = vmax.f32 %v245, 0.0
  %v820 = vmax.f32 %v247, 0.0
  %v821 = vmax.f32 %v249, 0.0
  %v822 = vmax.f32 %v251, 0.0
  %v823 = vmax.f32 %v253, 0.0
  %v824 = vmax.f32 %v255, 0.0
  %v825 = vmax.f32 %v257, 0.0
  %v826 = vmax.f32 %v259, 0.0
  %v827 = vmax.f32 %v261, 0.0
  %v828 = vmax.f32 %v263, 0.0
  %v829 = vmax.f32 %v265, 0.0
  %v830 = vmax.f32 %v267, 0.0
  %v831 = vmax.f32 %v269, 0.0
  %v832 = vmax.f32 %v271, 0.0
  %v833 = vmax.f32 %v273, 0.0
  %v834 = vmax.f32 %v275, 0.0
  %v835 = vmax.f32 %v277, 0.0
  %v836 = vmax.f32 %v279, 0.0
  %v837 = vmax.f32 %v281, 0.0
  %v838 = vmax.f32 %v283, 0.0
  %v839 = vmax.f32 %v285, 0.0
  %v840 = vmax.f32 %v287, 0.0
  %v841 = vmax.f32 %v289, 0.0
  %v842 = vmax.f32 %v291, 0.0
  %v843 = vmax.f32 %v293, 0.0
  %v844 = vmax.f32 %v295, 0.0
  %v845 = vmax.f32 %v297, 0.0
  %v846 = vmax.f32 %v299, 0.0
  %v847 = vmax.f32 %v301, 0.0
  %v848 = vmax.f32 %v303, 0.0
  %v849 = vmax.f32 %v305, 0.0
  %v850 = vand.u32 2147483647, %v243
  %v851 = vand.u32 2147483647, %v245
  %v852 = vand.u32 2147483647, %v247
  %v853 = vand.u32 2147483647, %v249
  %v854 = vand.u32 2147483647, %v251
  %v855 = vand.u32 2147483647, %v253
  %v856 = vand.u32 2147483647, %v255
  %v857 = vand.u32 2147483647, %v257
  %v858 = vand.u32 2147483647, %v259
  %v859 = vand.u32 2147483647, %v261
  %v860 = vand.u32 2147483647, %v263
  %v861 = vand.u32 2147483647, %v265
  %v862 = vand.u32 2147483647, %v267
  %v863 = vand.u32 2147483647, %v269
  %v864 = vand.u32 2147483647, %v271
  %v865 = vand.u32 2147483647, %v273
  %v866 = vand.u32 2147483647, %v275
  %v867 = vand.u32 2147483647, %v277
  %v868 = vand.u32 2147483647, %v279
  %v869 = vand.u32 2147483647, %v281
  %v870 = vand.u32 2147483647, %v283
  %v871 = vand.u32 2147483647, %v285
  %v872 = vand.u32 2147483647, %v287
  %v873 = vand.u32 2147483647, %v289
  %v874 = vand.u32 2147483647, %v291
  %v875 = vand.u32 2147483647, %v293
  %v876 = vand.u32 2147483647, %v295
  %v877 = vand.u32 2147483647, %v297
  %v878 = vand.u32 2147483647, %v299
  %v879 = vand.u32 2147483647, %v301
  %v880 = vand.u32 2147483647, %v303
  %v881 = vand.u32 2147483647, %v305
  %v882 = vsub.f32 0.0, %v850
  %v883 = vsub.f32 0.0, %v851
  %v884 = vsub.f32 0.0, %v852
  %v885 = vsub.f32 0.0, %v853
  %v886 = vsub.f32 0.0, %v854
  %v887 = vsub.f32 0.0, %v855
  %v888 = vsub.f32 0.0, %v856
  %v889 = vsub.f32 0.0, %v857
  %v890 = vsub.f32 0.0, %v858
  %v891 = vsub.f32 0.0, %v859
  %v892 = vsub.f32 0.0, %v860
  %v893 = vsub.f32 0.0, %v861
  %v894 = vsub.f32 0.0, %v862
  %v895 = vsub.f32 0.0, %v863
  %v896 = vsub.f32 0.0, %v864
  %v897 = vsub.f32 0.0, %v865
  %v898 = vsub.f32 0.0, %v866
  %v899 = vsub.f32 0.0, %v867
  %v900 = vsub.f32 0.0, %v868
  %v901 = vsub.f32 0.0, %v869
  %v902 = vsub.f32 0.0, %v870
  %v903 = vsub.f32 0.0, %v871
  %v904 = vsub.f32 0.0, %v872
  %v905 = vsub.f32 0.0, %v873
  %v906 = vsub.f32 0.0, %v874
  %v907 = vsub.f32 0.0, %v875
  %v908 = vsub.f32 0.0, %v876
  %v909 = vsub.f32 0.0, %v877
  %v910 = vsub.f32 0.0, %v878
  %v911 = vsub.f32 0.0, %v879
  %v912 = vsub.f32 0.0, %v880
  %v913 = vsub.f32 0.0, %v881
  %v914 = vmul.f32 %v882, 1.442695
  %v915 = vpow.pop %v914
  %v916 = vmul.f32 %v883, 1.442695
  %v917 = vpow.pop %v916
  %v918 = vmul.f32 %v884, 1.442695
  %v919 = vpow.pop %v918
  %v920 = vmul.f32 %v885, 1.442695
  %v921 = vpow.pop %v920
  %v922 = vmul.f32 %v886, 1.442695
  %v923 = vpow.pop %v922
  %v924 = vmul.f32 %v887, 1.442695
  %v925 = vpow.pop %v924
  %v926 = vmul.f32 %v888, 1.442695
  %v927 = vpow.pop %v926
  %v928 = vmul.f32 %v889, 1.442695
  %v929 = vpow.pop %v928
  %v930 = vmul.f32 %v890, 1.442695
  %v931 = vpow.pop %v930
  %v932 = vmul.f32 %v891, 1.442695
  %v933 = vpow.pop %v932
  %v934 = vmul.f32 %v892, 1.442695
  %v935 = vpow.pop %v934
  %v936 = vmul.f32 %v893, 1.442695
  %v937 = vpow.pop %v936
  %v938 = vmul.f32 %v894, 1.442695
  %v939 = vpow.pop %v938
  %v940 = vmul.f32 %v895, 1.442695
  %v941 = vpow.pop %v940
  %v942 = vmul.f32 %v896, 1.442695
  %v943 = vpow.pop %v942
  %v944 = vmul.f32 %v897, 1.442695
  %v945 = vpow.pop %v944
  %v946 = vmul.f32 %v898, 1.442695
  %v947 = vpow.pop %v946
  %v948 = vmul.f32 %v899, 1.442695
  %v949 = vpow.pop %v948
  %v950 = vmul.f32 %v900, 1.442695
  %v951 = vpow.pop %v950
  %v952 = vmul.f32 %v901, 1.442695
  %v953 = vpow.pop %v952
  %v954 = vmul.f32 %v902, 1.442695
  %v955 = vpow.pop %v954
  %v956 = vmul.f32 %v903, 1.442695
  %v957 = vpow.pop %v956
  %v958 = vmul.f32 %v904, 1.442695
  %v959 = vpow.pop %v958
  %v960 = vmul.f32 %v905, 1.442695
  %v961 = vpow.pop %v960
  %v962 = vmul.f32 %v906, 1.442695
  %v963 = vpow.pop %v962
  %v964 = vmul.f32 %v907, 1.442695
  %v965 = vpow.pop %v964
  %v966 = vmul.f32 %v908, 1.442695
  %v967 = vpow.pop %v966
  %v968 = vmul.f32 %v909, 1.442695
  %v969 = vpow.pop %v968
  %v970 = vmul.f32 %v910, 1.442695
  %v971 = vpow.pop %v970
  %v972 = vmul.f32 %v911, 1.442695
  %v973 = vpow.pop %v972
  %v974 = vmul.f32 %v912, 1.442695
  %v975 = vpow.pop %v974
  %v976 = vmul.f32 %v913, 1.442695
  %v977 = vpow.pop %v976
  %v978 = vadd.f32 %v915, 1.0
  %v979 = vlog2.pop %v978
  %v980 = vmul.f32 %v979, 0.6931472
  %v981 = vmul.f32 -0.5, %v915
  %v982 = vadd.f32 %v981, 1.0
  %v983 = vmul.f32 %v982, %v915
  %v984 = vand.u32 2147483647, %v915
  %vm985 = vcmp.lt.f32.partialorder %v984, 0.0004427343
  %v986 = vsel %vm985, %v983, %v980
  %v987 = vadd.f32 %v917, 1.0
  %v988 = vlog2.pop %v987
  %v989 = vmul.f32 %v988, 0.6931472
  %v990 = vmul.f32 -0.5, %v917
  %v991 = vadd.f32 %v990, 1.0
  %v992 = vmul.f32 %v991, %v917
  %v993 = vand.u32 2147483647, %v917
  %vm994 = vcmp.lt.f32.partialorder %v993, 0.0004427343
  %v995 = vsel %vm994, %v992, %v989
  %v996 = vadd.f32 %v919, 1.0
  %v997 = vlog2.pop %v996
  %v998 = vmul.f32 %v997, 0.6931472
  %v999 = vmul.f32 -0.5, %v919
  %v1000 = vadd.f32 %v999, 1.0
  %v1001 = vmul.f32 %v1000, %v919
  %v1002 = vand.u32 2147483647, %v919
  %vm1003 = vcmp.lt.f32.partialorder %v1002, 0.0004427343
  %v1004 = vsel %vm1003, %v1001, %v998
  %v1005 = vadd.f32 %v921, 1.0
  %v1006 = vlog2.pop %v1005
  %v1007 = vmul.f32 %v1006, 0.6931472
  %v1008 = vmul.f32 -0.5, %v921
  %v1009 = vadd.f32 %v1008, 1.0
  %v1010 = vmul.f32 %v1009, %v921
  %v1011 = vand.u32 2147483647, %v921
  %vm1012 = vcmp.lt.f32.partialorder %v1011, 0.0004427343
  %v1013 = vsel %vm1012, %v1010, %v1007
  %v1014 = vadd.f32 %v923, 1.0
  %v1015 = vlog2.pop %v1014
  %v1016 = vmul.f32 %v1015, 0.6931472
  %v1017 = vmul.f32 -0.5, %v923
  %v1018 = vadd.f32 %v1017, 1.0
  %v1019 = vmul.f32 %v1018, %v923
  %v1020 = vand.u32 2147483647, %v923
  %vm1021 = vcmp.lt.f32.partialorder %v1020, 0.0004427343
  %v1022 = vsel %vm1021, %v1019, %v1016
  %v1023 = vadd.f32 %v925, 1.0
  %v1024 = vlog2.pop %v1023
  %v1025 = vmul.f32 %v1024, 0.6931472
  %v1026 = vmul.f32 -0.5, %v925
  %v1027 = vadd.f32 %v1026, 1.0
  %v1028 = vmul.f32 %v1027, %v925
  %v1029 = vand.u32 2147483647, %v925
  %vm1030 = vcmp.lt.f32.partialorder %v1029, 0.0004427343
  %v1031 = vsel %vm1030, %v1028, %v1025
  %v1032 = vadd.f32 %v927, 1.0
  %v1033 = vlog2.pop %v1032
  %v1034 = vmul.f32 %v1033, 0.6931472
  %v1035 = vmul.f32 -0.5, %v927
  %v1036 = vadd.f32 %v1035, 1.0
  %v1037 = vmul.f32 %v1036, %v927
  %v1038 = vand.u32 2147483647, %v927
  %vm1039 = vcmp.lt.f32.partialorder %v1038, 0.0004427343
  %v1040 = vsel %vm1039, %v1037, %v1034
  %v1041 = vadd.f32 %v929, 1.0
  %v1042 = vlog2.pop %v1041
  %v1043 = vmul.f32 %v1042, 0.6931472
  %v1044 = vmul.f32 -0.5, %v929
  %v1045 = vadd.f32 %v1044, 1.0
  %v1046 = vmul.f32 %v1045, %v929
  %v1047 = vand.u32 2147483647, %v929
  %vm1048 = vcmp.lt.f32.partialorder %v1047, 0.0004427343
  %v1049 = vsel %vm1048, %v1046, %v1043
  %v1050 = vadd.f32 %v931, 1.0
  %v1051 = vlog2.pop %v1050
  %v1052 = vmul.f32 %v1051, 0.6931472
  %v1053 = vmul.f32 -0.5, %v931
  %v1054 = vadd.f32 %v1053, 1.0
  %v1055 = vmul.f32 %v1054, %v931
  %v1056 = vand.u32 2147483647, %v931
  %vm1057 = vcmp.lt.f32.partialorder %v1056, 0.0004427343
  %v1058 = vsel %vm1057, %v1055, %v1052
  %v1059 = vadd.f32 %v933, 1.0
  %v1060 = vlog2.pop %v1059
  %v1061 = vmul.f32 %v1060, 0.6931472
  %v1062 = vmul.f32 -0.5, %v933
  %v1063 = vadd.f32 %v1062, 1.0
  %v1064 = vmul.f32 %v1063, %v933
  %v1065 = vand.u32 2147483647, %v933
  %vm1066 = vcmp.lt.f32.partialorder %v1065, 0.0004427343
  %v1067 = vsel %vm1066, %v1064, %v1061
  %v1068 = vadd.f32 %v935, 1.0
  %v1069 = vlog2.pop %v1068
  %v1070 = vmul.f32 %v1069, 0.6931472
  %v1071 = vmul.f32 -0.5, %v935
  %v1072 = vadd.f32 %v1071, 1.0
  %v1073 = vmul.f32 %v1072, %v935
  %v1074 = vand.u32 2147483647, %v935
  %vm1075 = vcmp.lt.f32.partialorder %v1074, 0.0004427343
  %v1076 = vsel %vm1075, %v1073, %v1070
  %v1077 = vadd.f32 %v937, 1.0
  %v1078 = vlog2.pop %v1077
  %v1079 = vmul.f32 %v1078, 0.6931472
  %v1080 = vmul.f32 -0.5, %v937
  %v1081 = vadd.f32 %v1080, 1.0
  %v1082 = vmul.f32 %v1081, %v937
  %v1083 = vand.u32 2147483647, %v937
  %vm1084 = vcmp.lt.f32.partialorder %v1083, 0.0004427343
  %v1085 = vsel %vm1084, %v1082, %v1079
  %v1086 = vadd.f32 %v939, 1.0
  %v1087 = vlog2.pop %v1086
  %v1088 = vmul.f32 %v1087, 0.6931472
  %v1089 = vmul.f32 -0.5, %v939
  %v1090 = vadd.f32 %v1089, 1.0
  %v1091 = vmul.f32 %v1090, %v939
  %v1092 = vand.u32 2147483647, %v939
  %vm1093 = vcmp.lt.f32.partialorder %v1092, 0.0004427343
  %v1094 = vsel %vm1093, %v1091, %v1088
  %v1095 = vadd.f32 %v941, 1.0
  %v1096 = vlog2.pop %v1095
  %v1097 = vmul.f32 %v1096, 0.6931472
  %v1098 = vmul.f32 -0.5, %v941
  %v1099 = vadd.f32 %v1098, 1.0
  %v1100 = vmul.f32 %v1099, %v941
  %v1101 = vand.u32 2147483647, %v941
  %vm1102 = vcmp.lt.f32.partialorder %v1101, 0.0004427343
  %v1103 = vsel %vm1102, %v1100, %v1097
  %v1104 = vadd.f32 %v943, 1.0
  %v1105 = vlog2.pop %v1104
  %v1106 = vmul.f32 %v1105, 0.6931472
  %v1107 = vmul.f32 -0.5, %v943
  %v1108 = vadd.f32 %v1107, 1.0
  %v1109 = vmul.f32 %v1108, %v943
  %v1110 = vand.u32 2147483647, %v943
  %vm1111 = vcmp.lt.f32.partialorder %v1110, 0.0004427343
  %v1112 = vsel %vm1111, %v1109, %v1106
  %v1113 = vadd.f32 %v945, 1.0
  %v1114 = vlog2.pop %v1113
  %v1115 = vmul.f32 %v1114, 0.6931472
  %v1116 = vmul.f32 -0.5, %v945
  %v1117 = vadd.f32 %v1116, 1.0
  %v1118 = vmul.f32 %v1117, %v945
  %v1119 = vand.u32 2147483647, %v945
  %vm1120 = vcmp.lt.f32.partialorder %v1119, 0.0004427343
  %v1121 = vsel %vm1120, %v1118, %v1115
  %v1122 = vadd.f32 %v947, 1.0
  %v1123 = vlog2.pop %v1122
  %v1124 = vmul.f32 %v1123, 0.6931472
  %v1125 = vmul.f32 -0.5, %v947
  %v1126 = vadd.f32 %v1125, 1.0
  %v1127 = vmul.f32 %v1126, %v947
  %v1128 = vand.u32 2147483647, %v947
  %vm1129 = vcmp.lt.f32.partialorder %v1128, 0.0004427343
  %v1130 = vsel %vm1129, %v1127, %v1124
  %v1131 = vadd.f32 %v949, 1.0
  %v1132 = vlog2.pop %v1131
  %v1133 = vmul.f32 %v1132, 0.6931472
  %v1134 = vmul.f32 -0.5, %v949
  %v1135 = vadd.f32 %v1134, 1.0
  %v1136 = vmul.f32 %v1135, %v949
  %v1137 = vand.u32 2147483647, %v949
  %vm1138 = vcmp.lt.f32.partialorder %v1137, 0.0004427343
  %v1139 = vsel %vm1138, %v1136, %v1133
  %v1140 = vadd.f32 %v951, 1.0
  %v1141 = vlog2.pop %v1140
  %v1142 = vmul.f32 %v1141, 0.6931472
  %v1143 = vmul.f32 -0.5, %v951
  %v1144 = vadd.f32 %v1143, 1.0
  %v1145 = vmul.f32 %v1144, %v951
  %v1146 = vand.u32 2147483647, %v951
  %vm1147 = vcmp.lt.f32.partialorder %v1146, 0.0004427343
  %v1148 = vsel %vm1147, %v1145, %v1142
  %v1149 = vadd.f32 %v953, 1.0
  %v1150 = vlog2.pop %v1149
  %v1151 = vmul.f32 %v1150, 0.6931472
  %v1152 = vmul.f32 -0.5, %v953
  %v1153 = vadd.f32 %v1152, 1.0
  %v1154 = vmul.f32 %v1153, %v953
  %v1155 = vand.u32 2147483647, %v953
  %vm1156 = vcmp.lt.f32.partialorder %v1155, 0.0004427343
  %v1157 = vsel %vm1156, %v1154, %v1151
  %v1158 = vadd.f32 %v955, 1.0
  %v1159 = vlog2.pop %v1158
  %v1160 = vmul.f32 %v1159, 0.6931472
  %v1161 = vmul.f32 -0.5, %v955
  %v1162 = vadd.f32 %v1161, 1.0
  %v1163 = vmul.f32 %v1162, %v955
  %v1164 = vand.u32 2147483647, %v955
  %vm1165 = vcmp.lt.f32.partialorder %v1164, 0.0004427343
  %v1166 = vsel %vm1165, %v1163, %v1160
  %v1167 = vadd.f32 %v957, 1.0
  %v1168 = vlog2.pop %v1167
  %v1169 = vmul.f32 %v1168, 0.6931472
  %v1170 = vmul.f32 -0.5, %v957
  %v1171 = vadd.f32 %v1170, 1.0
  %v1172 = vmul.f32 %v1171, %v957
  %v1173 = vand.u32 2147483647, %v957
  %vm1174 = vcmp.lt.f32.partialorder %v1173, 0.0004427343
  %v1175 = vsel %vm1174, %v1172, %v1169
  %v1176 = vadd.f32 %v959, 1.0
  %v1177 = vlog2.pop %v1176
  %v1178 = vmul.f32 %v1177, 0.6931472
  %v1179 = vmul.f32 -0.5, %v959
  %v1180 = vadd.f32 %v1179, 1.0
  %v1181 = vmul.f32 %v1180, %v959
  %v1182 = vand.u32 2147483647, %v959
  %vm1183 = vcmp.lt.f32.partialorder %v1182, 0.0004427343
  %v1184 = vsel %vm1183, %v1181, %v1178
  %v1185 = vadd.f32 %v961, 1.0
  %v1186 = vlog2.pop %v1185
  %v1187 = vmul.f32 %v1186, 0.6931472
  %v1188 = vmul.f32 -0.5, %v961
  %v1189 = vadd.f32 %v1188, 1.0
  %v1190 = vmul.f32 %v1189, %v961
  %v1191 = vand.u32 2147483647, %v961
  %vm1192 = vcmp.lt.f32.partialorder %v1191, 0.0004427343
  %v1193 = vsel %vm1192, %v1190, %v1187
  %v1194 = vadd.f32 %v963, 1.0
  %v1195 = vlog2.pop %v1194
  %v1196 = vmul.f32 %v1195, 0.6931472
  %v1197 = vmul.f32 -0.5, %v963
  %v1198 = vadd.f32 %v1197, 1.0
  %v1199 = vmul.f32 %v1198, %v963
  %v1200 = vand.u32 2147483647, %v963
  %vm1201 = vcmp.lt.f32.partialorder %v1200, 0.0004427343
  %v1202 = vsel %vm1201, %v1199, %v1196
  %v1203 = vadd.f32 %v965, 1.0
  %v1204 = vlog2.pop %v1203
  %v1205 = vmul.f32 %v1204, 0.6931472
  %v1206 = vmul.f32 -0.5, %v965
  %v1207 = vadd.f32 %v1206, 1.0
  %v1208 = vmul.f32 %v1207, %v965
  %v1209 = vand.u32 2147483647, %v965
  %vm1210 = vcmp.lt.f32.partialorder %v1209, 0.0004427343
  %v1211 = vsel %vm1210, %v1208, %v1205
  %v1212 = vadd.f32 %v967, 1.0
  %v1213 = vlog2.pop %v1212
  %v1214 = vmul.f32 %v1213, 0.6931472
  %v1215 = vmul.f32 -0.5, %v967
  %v1216 = vadd.f32 %v1215, 1.0
  %v1217 = vmul.f32 %v1216, %v967
  %v1218 = vand.u32 2147483647, %v967
  %vm1219 = vcmp.lt.f32.partialorder %v1218, 0.0004427343
  %v1220 = vsel %vm1219, %v1217, %v1214
  %v1221 = vadd.f32 %v969, 1.0
  %v1222 = vlog2.pop %v1221
  %v1223 = vmul.f32 %v1222, 0.6931472
  %v1224 = vmul.f32 -0.5, %v969
  %v1225 = vadd.f32 %v1224, 1.0
  %v1226 = vmul.f32 %v1225, %v969
  %v1227 = vand.u32 2147483647, %v969
  %vm1228 = vcmp.lt.f32.partialorder %v1227, 0.0004427343
  %v1229 = vsel %vm1228, %v1226, %v1223
  %v1230 = vadd.f32 %v971, 1.0
  %v1231 = vlog2.pop %v1230
  %v1232 = vmul.f32 %v1231, 0.6931472
  %v1233 = vmul.f32 -0.5, %v971
  %v1234 = vadd.f32 %v1233, 1.0
  %v1235 = vmul.f32 %v1234, %v971
  %v1236 = vand.u32 2147483647, %v971
  %vm1237 = vcmp.lt.f32.partialorder %v1236, 0.0004427343
  %v1238 = vsel %vm1237, %v1235, %v1232
  %v1239 = vadd.f32 %v973, 1.0
  %v1240 = vlog2.pop %v1239
  %v1241 = vmul.f32 %v1240, 0.6931472
  %v1242 = vmul.f32 -0.5, %v973
  %v1243 = vadd.f32 %v1242, 1.0
  %v1244 = vmul.f32 %v1243, %v973
  %v1245 = vand.u32 2147483647, %v973
  %vm1246 = vcmp.lt.f32.partialorder %v1245, 0.0004427343
  %v1247 = vsel %vm1246, %v1244, %v1241
  %v1248 = vadd.f32 %v975, 1.0
  %v1249 = vlog2.pop %v1248
  %v1250 = vmul.f32 %v1249, 0.6931472
  %v1251 = vmul.f32 -0.5, %v975
  %v1252 = vadd.f32 %v1251, 1.0
  %v1253 = vmul.f32 %v1252, %v975
  %v1254 = vand.u32 2147483647, %v975
  %vm1255 = vcmp.lt.f32.partialorder %v1254, 0.0004427343
  %v1256 = vsel %vm1255, %v1253, %v1250
  %v1257 = vadd.f32 %v977, 1.0
  %v1258 = vlog2.pop %v1257
  %v1259 = vmul.f32 %v1258, 0.6931472
  %v1260 = vmul.f32 -0.5, %v977
  %v1261 = vadd.f32 %v1260, 1.0
  %v1262 = vmul.f32 %v1261, %v977
  %v1263 = vand.u32 2147483647, %v977
  %vm1264 = vcmp.lt.f32.partialorder %v1263, 0.0004427343
  %v1265 = vsel %vm1264, %v1262, %v1259
  %v1266 = vadd.f32 %v818, %v986
  %v1267 = vadd.f32 %v819, %v995
  %v1268 = vadd.f32 %v820, %v1004
  %v1269 = vadd.f32 %v821, %v1013
  %v1270 = vadd.f32 %v822, %v1022
  %v1271 = vadd.f32 %v823, %v1031
  %v1272 = vadd.f32 %v824, %v1040
  %v1273 = vadd.f32 %v825, %v1049
  %v1274 = vadd.f32 %v826, %v1058
  %v1275 = vadd.f32 %v827, %v1067
  %v1276 = vadd.f32 %v828, %v1076
  %v1277 = vadd.f32 %v829, %v1085
  %v1278 = vadd.f32 %v830, %v1094
  %v1279 = vadd.f32 %v831, %v1103
  %v1280 = vadd.f32 %v832, %v1112
  %v1281 = vadd.f32 %v833, %v1121
  %v1282 = vadd.f32 %v834, %v1130
  %v1283 = vadd.f32 %v835, %v1139
  %v1284 = vadd.f32 %v836, %v1148
  %v1285 = vadd.f32 %v837, %v1157
  %v1286 = vadd.f32 %v838, %v1166
  %v1287 = vadd.f32 %v839, %v1175
  %v1288 = vadd.f32 %v840, %v1184
  %v1289 = vadd.f32 %v841, %v1193
  %v1290 = vadd.f32 %v842, %v1202
  %v1291 = vadd.f32 %v843, %v1211
  %v1292 = vadd.f32 %v844, %v1220
  %v1293 = vadd.f32 %v845, %v1229
  %v1294 = vadd.f32 %v846, %v1238
  %v1295 = vadd.f32 %v847, %v1247
  %v1296 = vadd.f32 %v848, %v1256
  %v1297 = vadd.f32 %v849, %v1265
  %v1298 = vadd.f32 %v786, %v1266
  %v1299 = vadd.f32 %v787, %v1267
  %v1300 = vadd.f32 %v788, %v1268
  %v1301 = vadd.f32 %v789, %v1269
  %v1302 = vadd.f32 %v790, %v1270
  %v1303 = vadd.f32 %v791, %v1271
  %v1304 = vadd.f32 %v792, %v1272
  %v1305 = vadd.f32 %v793, %v1273
  %v1306 = vadd.f32 %v794, %v1274
  %v1307 = vadd.f32 %v795, %v1275
  %v1308 = vadd.f32 %v796, %v1276
  %v1309 = vadd.f32 %v797, %v1277
  %v1310 = vadd.f32 %v798, %v1278
  %v1311 = vadd.f32 %v799, %v1279
  %v1312 = vadd.f32 %v800, %v1280
  %v1313 = vadd.f32 %v801, %v1281
  %v1314 = vadd.f32 %v802, %v1282
  %v1315 = vadd.f32 %v803, %v1283
  %v1316 = vadd.f32 %v804, %v1284
  %v1317 = vadd.f32 %v805, %v1285
  %v1318 = vadd.f32 %v806, %v1286
  %v1319 = vadd.f32 %v807, %v1287
  %v1320 = vadd.f32 %v808, %v1288
  %v1321 = vadd.f32 %v809, %v1289
  %v1322 = vadd.f32 %v810, %v1290
  %v1323 = vadd.f32 %v811, %v1291
  %v1324 = vadd.f32 %v812, %v1292
  %v1325 = vadd.f32 %v813, %v1293
  %v1326 = vadd.f32 %v814, %v1294
  %v1327 = vadd.f32 %v815, %v1295
  %v1328 = vadd.f32 %v816, %v1296
  %v1329 = vadd.f32 %v817, %v1297
  %vm1330 = vcmask 7168
  %1331 = vst.msk [vmem:[%s2] sm:$0xff] %vm1330, %v1298
  %1332 = vst.msk [vmem:[%s2 + $0x8] sm:$0xff] %vm1330, %v1299
  %1333 = vst.msk [vmem:[%s2 + $0x10] sm:$0xff] %vm1330, %v1300
  %1334 = vst.msk [vmem:[%s2 + $0x18] sm:$0xff] %vm1330, %v1301
  %1335 = vst.msk [vmem:[%s2 + $0x20] sm:$0xff] %vm1330, %v1302
  %1336 = vst.msk [vmem:[%s2 + $0x28] sm:$0xff] %vm1330, %v1303
  %1337 = vst.msk [vmem:[%s2 + $0x30] sm:$0xff] %vm1330, %v1304
  %1338 = vst.msk [vmem:[%s2 + $0x38] sm:$0xff] %vm1330, %v1305
  %1339 = vst.msk [vmem:[%s2 + $0x40] sm:$0xff] %vm1330, %v1306
  %1340 = vst.msk [vmem:[%s2 + $0x48] sm:$0xff] %vm1330, %v1307
  %1341 = vst.msk [vmem:[%s2 + $0x50] sm:$0xff] %vm1330, %v1308
  %1342 = vst.msk [vmem:[%s2 + $0x58] sm:$0xff] %vm1330, %v1309
  %1343 = vst.msk [vmem:[%s2 + $0x60] sm:$0xff] %vm1330, %v1310
  %1344 = vst.msk [vmem:[%s2 + $0x68] sm:$0xff] %vm1330, %v1311
  %1345 = vst.msk [vmem:[%s2 + $0x70] sm:$0xff] %vm1330, %v1312
  %1346 = vst.msk [vmem:[%s2 + $0x78] sm:$0xff] %vm1330, %v1313
  %1347 = vst.msk [vmem:[%s2 + $0x80] sm:$0xff] %vm1330, %v1314
  %1348 = vst.msk [vmem:[%s2 + $0x88] sm:$0xff] %vm1330, %v1315
  %1349 = vst.msk [vmem:[%s2 + $0x90] sm:$0xff] %vm1330, %v1316
  %1350 = vst.msk [vmem:[%s2 + $0x98] sm:$0xff] %vm1330, %v1317
  %1351 = vst.msk [vmem:[%s2 + $0xa0] sm:$0xff] %vm1330, %v1318
  %1352 = vst.msk [vmem:[%s2 + $0xa8] sm:$0xff] %vm1330, %v1319
  %1353 = vst.msk [vmem:[%s2 + $0xb0] sm:$0xff] %vm1330, %v1320
  %1354 = vst.msk [vmem:[%s2 + $0xb8] sm:$0xff] %vm1330, %v1321
  %1355 = vst.msk [vmem:[%s2 + $0xc0] sm:$0xff] %vm1330, %v1322
  %1356 = vst.msk [vmem:[%s2 + $0xc8] sm:$0xff] %vm1330, %v1323
  %1357 = vst.msk [vmem:[%s2 + $0xd0] sm:$0xff] %vm1330, %v1324
  %1358 = vst.msk [vmem:[%s2 + $0xd8] sm:$0xff] %vm1330, %v1325
  %1359 = vst.msk [vmem:[%s2 + $0xe0] sm:$0xff] %vm1330, %v1326
  %1360 = vst.msk [vmem:[%s2 + $0xe8] sm:$0xff] %vm1330, %v1327
  %1361 = vst.msk [vmem:[%s2 + $0xf0] sm:$0xff] %vm1330, %v1328
  %1362 = vst.msk [vmem:[%s2 + $0xf8] sm:$0xff] %vm1330, %v1329
  // Predicated region
  $region10: #{infomax_forward.5} parent=0 // pred_check
    _
  $region11: #{infomax_forward.5} parent=0 // pred_check_branch
    %1364 = sbr.rel (0) target = $region13
  $region12: #{infomax_forward.5} parent=0 // pred_region
    _
  $region13: #{infomax_forward.5} parent=0 // pred_fallthru
    _
  // Predicated region
  $region14: #{infomax_forward.5} parent=0 // pred_check
    _
  $region15: #{infomax_forward.5} parent=0 // pred_check_branch
    %1366 = sbr.rel (0) target = $region17
  $region16: #{infomax_forward.5} parent=0 // pred_region
    _
  $region17: #{infomax_forward.5} parent=0 // pred_fallthru
    _

// kernel: infomax_forward.4
$region0: #{infomax_forward.4}
  #allocation0 [shape = 'u32[]', space=smem, size = 0x4, offset = 0x4, fixed_abs, tag = 'smem constant byte address 0x4 - core index']
  #allocation1 [shape = 'u32[144,128]{1,0:T(1,128)}', space=vmem, size = 0x12000, scoped, tag = 'internal scratch']
  #allocation2 [shape = 'f32[256,256]{1,0:T(8,128)}', space=vmem, size = 0x40000, scoped, tag = 'scratch operand']
  %s0 = inlined_call_operand.vmem [shape: bf16[256,256], index: 0, kind: input, shape index: {}]
  %s1 = inlined_call_operand.vmem [shape: bf16[256,256], index: 1, kind: input, shape index: {}]
  %s2 = inlined_call_operand.vmem [shape: f32[1,256], index: 2, kind: input, shape index: {}]
  %s3 = inlined_call_operand.vmem [shape: f32[1,256], index: 3, kind: input, shape index: {}]
  %s4 = inlined_call_operand.vmem [shape: bf16[256,256], index: 4, kind: output, shape index: {0}]
  %s5 = inlined_call_operand.vmem [shape: f32[1,1,128], index: 5, kind: output, shape index: {1}]
  %6 = xla_tuple %s4, %s5
  %s7 = sld [smem:[#allocation0]]
  $region42: #{infomax_forward.4} parent=0
    _
  %s9 = ssub.s32 1, %s7
  %s10 = scalar_select 0, %s9, %s7
  // Predicated region
  $region2: #{infomax_forward.4} parent=0 // pred_check
    _
  $region3: #{infomax_forward.4} parent=0 // pred_check_branch
    %12 = sbr.rel (0) target = $region5
  $region4: #{infomax_forward.4} parent=0 // pred_region
    _
  $region5: #{infomax_forward.4} parent=0 // pred_fallthru
    _
  // Predicated region
  $region6: #{infomax_forward.4} parent=0 // pred_check
    _
  $region7: #{infomax_forward.4} parent=0 // pred_check_branch
    %14 = sbr.rel (0) target = $region9
  $region8: #{infomax_forward.4} parent=0 // pred_region
    _
  $region9: #{infomax_forward.4} parent=0 // pred_fallthru
    _
  // Predicated region
  $region10: #{infomax_forward.4} parent=0 // pred_check
    _
  $region11: #{infomax_forward.4} parent=0 // pred_check_branch
    %16 = sbr.rel (0) target = $region13
  $region12: #{infomax_forward.4} parent=0 // pred_region
    _
  $region13: #{infomax_forward.4} parent=0 // pred_fallthru
    _
  // Predicated region
  $region14: #{infomax_forward.4} parent=0 // pred_check
    _
  $region15: #{infomax_forward.4} parent=0 // pred_check_branch
    %18 = sbr.rel (0) target = $region17
  $region16: #{infomax_forward.4} parent=0 // pred_region
    _
  $region17: #{infomax_forward.4} parent=0 // pred_fallthru
    _
  %p19 = scmp.eq.s32.totalorder 0, 0
  // Predicated region
  $region18: #{infomax_forward.4} parent=0 // pred_check
    %p20 = pneg %p19
  $region19: #{infomax_forward.4} parent=0 // pred_check_branch
    %22 = sbr.rel (%p20) target = $region21
  $region20: #{infomax_forward.4} parent=0 // pred_region
    %23 = vst [vmem:[#allocation2] sm:$0xff] 0.0
    %24 = vst [vmem:[#allocation2 + $0x8] sm:$0xff] 0.0
    %25 = vst [vmem:[#allocation2 + $0x10] sm:$0xff] 0.0
    %26 = vst [vmem:[#allocation2 + $0x18] sm:$0xff] 0.0
    %27 = vst [vmem:[#allocation2 + $0x20] sm:$0xff] 0.0
    %28 = vst [vmem:[#allocation2 + $0x28] sm:$0xff] 0.0
    %29 = vst [vmem:[#allocation2 + $0x30] sm:$0xff] 0.0
    %30 = vst [vmem:[#allocation2 + $0x38] sm:$0xff] 0.0
    %31 = vst [vmem:[#allocation2 + $0x40] sm:$0xff] 0.0
    %32 = vst [vmem:[#allocation2 + $0x48] sm:$0xff] 0.0
    %33 = vst [vmem:[#allocation2 + $0x50] sm:$0xff] 0.0
    %34 = vst [vmem:[#allocation2 + $0x58] sm:$0xff] 0.0
    %35 = vst [vmem:[#allocation2 + $0x60] sm:$0xff] 0.0
    %36 = vst [vmem:[#allocation2 + $0x68] sm:$0xff] 0.0
    %37 = vst [vmem:[#allocation2 + $0x70] sm:$0xff] 0.0
    %38 = vst [vmem:[#allocation2 + $0x78] sm:$0xff] 0.0
    %39 = vst [vmem:[#allocation2 + $0x80] sm:$0xff] 0.0
    %40 = vst [vmem:[#allocation2 + $0x88] sm:$0xff] 0.0
    %41 = vst [vmem:[#allocation2 + $0x90] sm:$0xff] 0.0
    %42 = vst [vmem:[#allocation2 + $0x98] sm:$0xff] 0.0
    %43 = vst [vmem:[#allocation2 + $0xa0] sm:$0xff] 0.0
    %44 = vst [vmem:[#allocation2 + $0xa8] sm:$0xff] 0.0
    %45 = vst [vmem:[#allocation2 + $0xb0] sm:$0xff] 0.0
    %46 = vst [vmem:[#allocation2 + $0xb8] sm:$0xff] 0.0
    %47 = vst [vmem:[#allocation2 + $0xc0] sm:$0xff] 0.0
    %48 = vst [vmem:[#allocation2 + $0xc8] sm:$0xff] 0.0
    %49 = vst [vmem:[#allocation2 + $0xd0] sm:$0xff] 0.0
    %50 = vst [vmem:[#allocation2 + $0xd8] sm:$0xff] 0.0
    %51 = vst [vmem:[#allocation2 + $0xe0] sm:$0xff] 0.0
    %52 = vst [vmem:[#allocation2 + $0xe8] sm:$0xff] 0.0
    %53 = vst [vmem:[#allocation2 + $0xf0] sm:$0xff] 0.0
    %54 = vst [vmem:[#allocation2 + $0xf8] sm:$0xff] 0.0
    %55 = vst [vmem:[#allocation2 + $0x100] sm:$0xff] 0.0
    %56 = vst [vmem:[#allocation2 + $0x108] sm:$0xff] 0.0
    %57 = vst [vmem:[#allocation2 + $0x110] sm:$0xff] 0.0
    %58 = vst [vmem:[#allocation2 + $0x118] sm:$0xff] 0.0
    %59 = vst [vmem:[#allocation2 + $0x120] sm:$0xff] 0.0
    %60 = vst [vmem:[#allocation2 + $0x128] sm:$0xff] 0.0
    %61 = vst [vmem:[#allocation2 + $0x130] sm:$0xff] 0.0
    %62 = vst [vmem:[#allocation2 + $0x138] sm:$0xff] 0.0
    %63 = vst [vmem:[#allocation2 + $0x140] sm:$0xff] 0.0
    %64 = vst [vmem:[#allocation2 + $0x148] sm:$0xff] 0.0
    %65 = vst [vmem:[#allocation2 + $0x150] sm:$0xff] 0.0
    %66 = vst [vmem:[#allocation2 + $0x158] sm:$0xff] 0.0
    %67 = vst [vmem:[#allocation2 + $0x160] sm:$0xff] 0.0
    %68 = vst [vmem:[#allocation2 + $0x168] sm:$0xff] 0.0
    %69 = vst [vmem:[#allocation2 + $0x170] sm:$0xff] 0.0
    %70 = vst [vmem:[#allocation2 + $0x178] sm:$0xff] 0.0
    %71 = vst [vmem:[#allocation2 + $0x180] sm:$0xff] 0.0
    %72 = vst [vmem:[#allocation2 + $0x188] sm:$0xff] 0.0
    %73 = vst [vmem:[#allocation2 + $0x190] sm:$0xff] 0.0
    %74 = vst [vmem:[#allocation2 + $0x198] sm:$0xff] 0.0
    %75 = vst [vmem:[#allocation2 + $0x1a0] sm:$0xff] 0.0
    %76 = vst [vmem:[#allocation2 + $0x1a8] sm:$0xff] 0.0
    %77 = vst [vmem:[#allocation2 + $0x1b0] sm:$0xff] 0.0
    %78 = vst [vmem:[#allocation2 + $0x1b8] sm:$0xff] 0.0
    %79 = vst [vmem:[#allocation2 + $0x1c0] sm:$0xff] 0.0
    %80 = vst [vmem:[#allocation2 + $0x1c8] sm:$0xff] 0.0
    %81 = vst [vmem:[#allocation2 + $0x1d0] sm:$0xff] 0.0
    %82 = vst [vmem:[#allocation2 + $0x1d8] sm:$0xff] 0.0
    %83 = vst [vmem:[#allocation2 + $0x1e0] sm:$0xff] 0.0
    %84 = vst [vmem:[#allocation2 + $0x1e8] sm:$0xff] 0.0
    %85 = vst [vmem:[#allocation2 + $0x1f0] sm:$0xff] 0.0
    %86 = vst [vmem:[#allocation2 + $0x1f8] sm:$0xff] 0.0
  $region21: #{infomax_forward.4} parent=0 // pred_fallthru
    _
  %s87 = smul.u32 0, 256
  %s88 = sshra.s32 %s87, 3
  %s89 = sand.u32 %s87, 7
  %s90 = smul.u32 %s88, 2
  %s91 = smul.addr %s90, 4
  %s92 = scalar_lea.vmem %s1, %s91
  %v93 = vld [vmem:[%s92] sm:$0xff]
  %v94 = vld [vmem:[%s92 + $0x8] sm:$0xff]
  %v95 = vld [vmem:[%s92 + $0x10] sm:$0xff]
  %v96 = vld [vmem:[%s92 + $0x18] sm:$0xff]
  %v97 = vld [vmem:[%s92 + $0x20] sm:$0xff]
  %v98 = vld [vmem:[%s92 + $0x28] sm:$0xff]
  %v99 = vld [vmem:[%s92 + $0x30] sm:$0xff]
  %v100 = vld [vmem:[%s92 + $0x38] sm:$0xff]
  %v101 = vld [vmem:[%s92 + $0x40] sm:$0xff]
  %v102 = vld [vmem:[%s92 + $0x48] sm:$0xff]
  %v103 = vld [vmem:[%s92 + $0x50] sm:$0xff]
  %v104 = vld [vmem:[%s92 + $0x58] sm:$0xff]
  %v105 = vld [vmem:[%s92 + $0x60] sm:$0xff]
  %v106 = vld [vmem:[%s92 + $0x68] sm:$0xff]
  %v107 = vld [vmem:[%s92 + $0x70] sm:$0xff]
  %v108 = vld [vmem:[%s92 + $0x78] sm:$0xff]
  %v109 = vld [vmem:[%s92 + $0x80] sm:$0xff]
  %v110 = vld [vmem:[%s92 + $0x88] sm:$0xff]
  %v111 = vld [vmem:[%s92 + $0x90] sm:$0xff]
  %v112 = vld [vmem:[%s92 + $0x98] sm:$0xff]
  %v113 = vld [vmem:[%s92 + $0xa0] sm:$0xff]
  %v114 = vld [vmem:[%s92 + $0xa8] sm:$0xff]
  %v115 = vld [vmem:[%s92 + $0xb0] sm:$0xff]
  %v116 = vld [vmem:[%s92 + $0xb8] sm:$0xff]
  %v117 = vld [vmem:[%s92 + $0xc0] sm:$0xff]
  %v118 = vld [vmem:[%s92 + $0xc8] sm:$0xff]
  %v119 = vld [vmem:[%s92 + $0xd0] sm:$0xff]
  %v120 = vld [vmem:[%s92 + $0xd8] sm:$0xff]
  %v121 = vld [vmem:[%s92 + $0xe0] sm:$0xff]
  %v122 = vld [vmem:[%s92 + $0xe8] sm:$0xff]
  %v123 = vld [vmem:[%s92 + $0xf0] sm:$0xff]
  %v124 = vld [vmem:[%s92 + $0xf8] sm:$0xff]
  %v125 = vld [vmem:[#allocation2] sm:$0xff]
  %v126 = vld [vmem:[#allocation2 + $0x8] sm:$0xff]
  %v127 = vld [vmem:[#allocation2 + $0x10] sm:$0xff]
  %v128 = vld [vmem:[#allocation2 + $0x18] sm:$0xff]
  %v129 = vld [vmem:[#allocation2 + $0x20] sm:$0xff]
  %v130 = vld [vmem:[#allocation2 + $0x28] sm:$0xff]
  %v131 = vld [vmem:[#allocation2 + $0x30] sm:$0xff]
  %v132 = vld [vmem:[#allocation2 + $0x38] sm:$0xff]
  %v133 = vld [vmem:[#allocation2 + $0x40] sm:$0xff]
  %v134 = vld [vmem:[#allocation2 + $0x48] sm:$0xff]
  %v135 = vld [vmem:[#allocation2 + $0x50] sm:$0xff]
  %v136 = vld [vmem:[#allocation2 + $0x58] sm:$0xff]
  %v137 = vld [vmem:[#allocation2 + $0x60] sm:$0xff]
  %v138 = vld [vmem:[#allocation2 + $0x68] sm:$0xff]
  %v139 = vld [vmem:[#allocation2 + $0x70] sm:$0xff]
  %v140 = vld [vmem:[#allocation2 + $0x78] sm:$0xff]
  %v141 = vld [vmem:[#allocation2 + $0x80] sm:$0xff]
  %v142 = vld [vmem:[#allocation2 + $0x88] sm:$0xff]
  %v143 = vld [vmem:[#allocation2 + $0x90] sm:$0xff]
  %v144 = vld [vmem:[#allocation2 + $0x98] sm:$0xff]
  %v145 = vld [vmem:[#allocation2 + $0xa0] sm:$0xff]
  %v146 = vld [vmem:[#allocation2 + $0xa8] sm:$0xff]
  %v147 = vld [vmem:[#allocation2 + $0xb0] sm:$0xff]
  %v148 = vld [vmem:[#allocation2 + $0xb8] sm:$0xff]
  %v149 = vld [vmem:[#allocation2 + $0xc0] sm:$0xff]
  %v150 = vld [vmem:[#allocation2 + $0xc8] sm:$0xff]
  %v151 = vld [vmem:[#allocation2 + $0xd0] sm:$0xff]
  %v152 = vld [vmem:[#allocation2 + $0xd8] sm:$0xff]
  %v153 = vld [vmem:[#allocation2 + $0xe0] sm:$0xff]
  %v154 = vld [vmem:[#allocation2 + $0xe8] sm:$0xff]
  %v155 = vld [vmem:[#allocation2 + $0xf0] sm:$0xff]
  %v156 = vld [vmem:[#allocation2 + $0xf8] sm:$0xff]
  %v157 = vld [vmem:[#allocation2 + $0x100] sm:$0xff]
  %v158 = vld [vmem:[#allocation2 + $0x108] sm:$0xff]
  %v159 = vld [vmem:[#allocation2 + $0x110] sm:$0xff]
  %v160 = vld [vmem:[#allocation2 + $0x118] sm:$0xff]
  %v161 = vld [vmem:[#allocation2 + $0x120] sm:$0xff]
  %v162 = vld [vmem:[#allocation2 + $0x128] sm:$0xff]
  %v163 = vld [vmem:[#allocation2 + $0x130] sm:$0xff]
  %v164 = vld [vmem:[#allocation2 + $0x138] sm:$0xff]
  %v165 = vld [vmem:[#allocation2 + $0x140] sm:$0xff]
  %v166 = vld [vmem:[#allocation2 + $0x148] sm:$0xff]
  %v167 = vld [vmem:[#allocation2 + $0x150] sm:$0xff]
  %v168 = vld [vmem:[#allocation2 + $0x158] sm:$0xff]
  %v169 = vld [vmem:[#allocation2 + $0x160] sm:$0xff]
  %v170 = vld [vmem:[#allocation2 + $0x168] sm:$0xff]
  %v171 = vld [vmem:[#allocation2 + $0x170] sm:$0xff]
  %v172 = vld [vmem:[#allocation2 + $0x178] sm:$0xff]
  %v173 = vld [vmem:[#allocation2 + $0x180] sm:$0xff]
  %v174 = vld [vmem:[#allocation2 + $0x188] sm:$0xff]
  %v175 = vld [vmem:[#allocation2 + $0x190] sm:$0xff]
  %v176 = vld [vmem:[#allocation2 + $0x198] sm:$0xff]
  %v177 = vld [vmem:[#allocation2 + $0x1a0] sm:$0xff]
  %v178 = vld [vmem:[#allocation2 + $0x1a8] sm:$0xff]
  %v179 = vld [vmem:[#allocation2 + $0x1b0] sm:$0xff]
  %v180 = vld [vmem:[#allocation2 + $0x1b8] sm:$0xff]
  %v181 = vld [vmem:[#allocation2 + $0x1c0] sm:$0xff]
  %v182 = vld [vmem:[#allocation2 + $0x1c8] sm:$0xff]
  %v183 = vld [vmem:[#allocation2 + $0x1d0] sm:$0xff]
  %v184 = vld [vmem:[#allocation2 + $0x1d8] sm:$0xff]
  %v185 = vld [vmem:[#allocation2 + $0x1e0] sm:$0xff]
  %v186 = vld [vmem:[#allocation2 + $0x1e8] sm:$0xff]
  %v187 = vld [vmem:[#allocation2 + $0x1f0] sm:$0xff]
  %v188 = vld [vmem:[#allocation2 + $0x1f8] sm:$0xff]
  %v189 = vld [vmem:[%s0] sm:$0xff]
  %v190 = vld [vmem:[%s0 + $0x8] sm:$0xff]
  %v191 = vld [vmem:[%s0 + $0x10] sm:$0xff]
  %v192 = vld [vmem:[%s0 + $0x18] sm:$0xff]
  %v193 = vld [vmem:[%s0 + $0x20] sm:$0xff]
  %v194 = vld [vmem:[%s0 + $0x28] sm:$0xff]
  %v195 = vld [vmem:[%s0 + $0x30] sm:$0xff]
  %v196 = vld [vmem:[%s0 + $0x38] sm:$0xff]
  %v197 = vld [vmem:[%s0 + $0x40] sm:$0xff]
  %v198 = vld [vmem:[%s0 + $0x48] sm:$0xff]
  %v199 = vld [vmem:[%s0 + $0x50] sm:$0xff]
  %v200 = vld [vmem:[%s0 + $0x58] sm:$0xff]
  %v201 = vld [vmem:[%s0 + $0x60] sm:$0xff]
  %v202 = vld [vmem:[%s0 + $0x68] sm:$0xff]
  %v203 = vld [vmem:[%s0 + $0x70] sm:$0xff]
  %v204 = vld [vmem:[%s0 + $0x78] sm:$0xff]
  %v205 = vld [vmem:[%s0 + $0x80] sm:$0xff]
  %v206 = vld [vmem:[%s0 + $0x88] sm:$0xff]
  %v207 = vld [vmem:[%s0 + $0x90] sm:$0xff]
  %v208 = vld [vmem:[%s0 + $0x98] sm:$0xff]
  %v209 = vld [vmem:[%s0 + $0xa0] sm:$0xff]
  %v210 = vld [vmem:[%s0 + $0xa8] sm:$0xff]
  %v211 = vld [vmem:[%s0 + $0xb0] sm:$0xff]
  %v212 = vld [vmem:[%s0 + $0xb8] sm:$0xff]
  %v213 = vld [vmem:[%s0 + $0xc0] sm:$0xff]
  %v214 = vld [vmem:[%s0 + $0xc8] sm:$0xff]
  %v215 = vld [vmem:[%s0 + $0xd0] sm:$0xff]
  %v216 = vld [vmem:[%s0 + $0xd8] sm:$0xff]
  %v217 = vld [vmem:[%s0 + $0xe0] sm:$0xff]
  %v218 = vld [vmem:[%s0 + $0xe8] sm:$0xff]
  %v219 = vld [vmem:[%s0 + $0xf0] sm:$0xff]
  %v220 = vld [vmem:[%s0 + $0xf8] sm:$0xff]
  %v253 = vunpack.c.l.b16 %v189
  %v254 = vunpack.c.h.b16 %v189
  %v255 = vunpack.c.l.b16 %v190
  %v256 = vunpack.c.h.b16 %v190
  %v257 = vunpack.c.l.b16 %v191
  %v258 = vunpack.c.h.b16 %v191
  %v259 = vunpack.c.l.b16 %v192
  %v260 = vunpack.c.h.b16 %v192
  %v261 = vunpack.c.l.b16 %v193
  %v262 = vunpack.c.h.b16 %v193
  %v263 = vunpack.c.l.b16 %v194
  %v264 = vunpack.c.h.b16 %v194
  %v265 = vunpack.c.l.b16 %v195
  %v266 = vunpack.c.h.b16 %v195
  %v267 = vunpack.c.l.b16 %v196
  %v268 = vunpack.c.h.b16 %v196
  %v269 = vunpack.c.l.b16 %v197
  %v270 = vunpack.c.h.b16 %v197
  %v271 = vunpack.c.l.b16 %v198
  %v272 = vunpack.c.h.b16 %v198
  %v273 = vunpack.c.l.b16 %v199
  %v274 = vunpack.c.h.b16 %v199
  %v275 = vunpack.c.l.b16 %v200
  %v276 = vunpack.c.h.b16 %v200
  %v277 = vunpack.c.l.b16 %v201
  %v278 = vunpack.c.h.b16 %v201
  %v279 = vunpack.c.l.b16 %v202
  %v280 = vunpack.c.h.b16 %v202
  %v281 = vunpack.c.l.b16 %v203
  %v282 = vunpack.c.h.b16 %v203
  %v283 = vunpack.c.l.b16 %v204
  %v284 = vunpack.c.h.b16 %v204
  %v285 = vunpack.c.l.b16 %v205
  %v286 = vunpack.c.h.b16 %v205
  %v287 = vunpack.c.l.b16 %v206
  %v288 = vunpack.c.h.b16 %v206
  %v289 = vunpack.c.l.b16 %v207
  %v290 = vunpack.c.h.b16 %v207
  %v291 = vunpack.c.l.b16 %v208
  %v292 = vunpack.c.h.b16 %v208
  %v293 = vunpack.c.l.b16 %v209
  %v294 = vunpack.c.h.b16 %v209
  %v295 = vunpack.c.l.b16 %v210
  %v296 = vunpack.c.h.b16 %v210
  %v297 = vunpack.c.l.b16 %v211
  %v298 = vunpack.c.h.b16 %v211
  %v299 = vunpack.c.l.b16 %v212
  %v300 = vunpack.c.h.b16 %v212
  %v301 = vunpack.c.l.b16 %v213
  %v302 = vunpack.c.h.b16 %v213
  %v303 = vunpack.c.l.b16 %v214
  %v304 = vunpack.c.h.b16 %v214
  %v305 = vunpack.c.l.b16 %v215
  %v306 = vunpack.c.h.b16 %v215
  %v307 = vunpack.c.l.b16 %v216
  %v308 = vunpack.c.h.b16 %v216
  %v309 = vunpack.c.l.b16 %v217
  %v310 = vunpack.c.h.b16 %v217
  %v311 = vunpack.c.l.b16 %v218
  %v312 = vunpack.c.h.b16 %v218
  %v313 = vunpack.c.l.b16 %v219
  %v314 = vunpack.c.h.b16 %v219
  %v315 = vunpack.c.l.b16 %v220
  %v316 = vunpack.c.h.b16 %v220
  %v317 = vpack.c.b16 %v255, %v253
  %v318 = vpack.c.b16 %v256, %v254
  %v319 = vpack.c.b16 %v259, %v257
  %v320 = vpack.c.b16 %v260, %v258
  %v321 = vpack.c.b16 %v263, %v261
  %v322 = vpack.c.b16 %v264, %v262
  %v323 = vpack.c.b16 %v267, %v265
  %v324 = vpack.c.b16 %v268, %v266
  %v325 = vpack.c.b16 %v271, %v269
  %v326 = vpack.c.b16 %v272, %v270
  %v327 = vpack.c.b16 %v275, %v273
  %v328 = vpack.c.b16 %v276, %v274
  %v329 = vpack.c.b16 %v279, %v277
  %v330 = vpack.c.b16 %v280, %v278
  %v331 = vpack.c.b16 %v283, %v281
  %v332 = vpack.c.b16 %v284, %v282
  %v333 = vpack.c.b16 %v287, %v285
  %v334 = vpack.c.b16 %v288, %v286
  %v335 = vpack.c.b16 %v291, %v289
  %v336 = vpack.c.b16 %v292, %v290
  %v337 = vpack.c.b16 %v295, %v293
  %v338 = vpack.c.b16 %v296, %v294
  %v339 = vpack.c.b16 %v299, %v297
  %v340 = vpack.c.b16 %v300, %v298
  %v341 = vpack.c.b16 %v303, %v301
  %v342 = vpack.c.b16 %v304, %v302
  %v343 = vpack.c.b16 %v307, %v305
  %v344 = vpack.c.b16 %v308, %v306
  %v345 = vpack.c.b16 %v311, %v309
  %v346 = vpack.c.b16 %v312, %v310
  %v347 = vpack.c.b16 %v315, %v313
  %v348 = vpack.c.b16 %v316, %v314
  %v413 = vunpack.c.l.b16 %v93
  %v414 = vunpack.c.h.b16 %v93
  %v415 = vunpack.c.l.b16 %v94
  %v416 = vunpack.c.h.b16 %v94
  %v417 = vunpack.c.l.b16 %v95
  %v418 = vunpack.c.h.b16 %v95
  %v419 = vunpack.c.l.b16 %v96
  %v420 = vunpack.c.h.b16 %v96
  %v421 = vunpack.c.l.b16 %v97
  %v422 = vunpack.c.h.b16 %v97
  %v423 = vunpack.c.l.b16 %v98
  %v424 = vunpack.c.h.b16 %v98
  %v425 = vunpack.c.l.b16 %v99
  %v426 = vunpack.c.h.b16 %v99
  %v427 = vunpack.c.l.b16 %v100
  %v428 = vunpack.c.h.b16 %v100
  %v429 = vunpack.c.l.b16 %v101
  %v430 = vunpack.c.h.b16 %v101
  %v431 = vunpack.c.l.b16 %v102
  %v432 = vunpack.c.h.b16 %v102
  %v433 = vunpack.c.l.b16 %v103
  %v434 = vunpack.c.h.b16 %v103
  %v435 = vunpack.c.l.b16 %v104
  %v436 = vunpack.c.h.b16 %v104
  %v437 = vunpack.c.l.b16 %v105
  %v438 = vunpack.c.h.b16 %v105
  %v439 = vunpack.c.l.b16 %v106
  %v440 = vunpack.c.h.b16 %v106
  %v441 = vunpack.c.l.b16 %v107
  %v442 = vunpack.c.h.b16 %v107
  %v443 = vunpack.c.l.b16 %v108
  %v444 = vunpack.c.h.b16 %v108
  %v445 = vunpack.c.l.b16 %v109
  %v446 = vunpack.c.h.b16 %v109
  %v447 = vunpack.c.l.b16 %v110
  %v448 = vunpack.c.h.b16 %v110
  %v449 = vunpack.c.l.b16 %v111
  %v450 = vunpack.c.h.b16 %v111
  %v451 = vunpack.c.l.b16 %v112
  %v452 = vunpack.c.h.b16 %v112
  %v453 = vunpack.c.l.b16 %v113
  %v454 = vunpack.c.h.b16 %v113
  %v455 = vunpack.c.l.b16 %v114
  %v456 = vunpack.c.h.b16 %v114
  %v457 = vunpack.c.l.b16 %v115
  %v458 = vunpack.c.h.b16 %v115
  %v459 = vunpack.c.l.b16 %v116
  %v460 = vunpack.c.h.b16 %v116
  %v461 = vunpack.c.l.b16 %v117
  %v462 = vunpack.c.h.b16 %v117
  %v463 = vunpack.c.l.b16 %v118
  %v464 = vunpack.c.h.b16 %v118
  %v465 = vunpack.c.l.b16 %v119
  %v466 = vunpack.c.h.b16 %v119
  %v467 = vunpack.c.l.b16 %v120
  %v468 = vunpack.c.h.b16 %v120
  %v469 = vunpack.c.l.b16 %v121
  %v470 = vunpack.c.h.b16 %v121
  %v471 = vunpack.c.l.b16 %v122
  %v472 = vunpack.c.h.b16 %v122
  %v473 = vunpack.c.l.b16 %v123
  %v474 = vunpack.c.h.b16 %v123
  %v475 = vunpack.c.l.b16 %v124
  %v476 = vunpack.c.h.b16 %v124
  %v477 = vpack.c.b16 %v415, %v413
  %v478 = vpack.c.b16 %v416, %v414
  %v479 = vpack.c.b16 %v419, %v417
  %v480 = vpack.c.b16 %v420, %v418
  %v481 = vpack.c.b16 %v423, %v421
  %v482 = vpack.c.b16 %v424, %v422
  %v483 = vpack.c.b16 %v427, %v425
  %v484 = vpack.c.b16 %v428, %v426
  %v485 = vpack.c.b16 %v431, %v429
  %v486 = vpack.c.b16 %v432, %v430
  %v487 = vpack.c.b16 %v435, %v433
  %v488 = vpack.c.b16 %v436, %v434
  %v489 = vpack.c.b16 %v439, %v437
  %v490 = vpack.c.b16 %v440, %v438
  %v491 = vpack.c.b16 %v443, %v441
  %v492 = vpack.c.b16 %v444, %v442
  %v493 = vpack.c.b16 %v447, %v445
  %v494 = vpack.c.b16 %v448, %v446
  %v495 = vpack.c.b16 %v451, %v449
  %v496 = vpack.c.b16 %v452, %v450
  %v497 = vpack.c.b16 %v455, %v453
  %v498 = vpack.c.b16 %v456, %v454
  %v499 = vpack.c.b16 %v459, %v457
  %v500 = vpack.c.b16 %v460, %v458
  %v501 = vpack.c.b16 %v463, %v461
  %v502 = vpack.c.b16 %v464, %v462
  %v503 = vpack.c.b16 %v467, %v465
  %v504 = vpack.c.b16 %v468, %v466
  %v505 = vpack.c.b16 %v471, %v469
  %v506 = vpack.c.b16 %v472, %v470
  %v507 = vpack.c.b16 %v475, %v473
  %v508 = vpack.c.b16 %v476, %v474
  %541 = vmatprep.subr.bf16.mxu0 %v478
  %542 = vmatpush1.bf16.msra.mxu0 %v477
  %543 = vmatprep.subr.bf16.mxu0 %v480
  %544 = vmatpush1.bf16.msra.mxu0 %v479
  %545 = vmatprep.subr.bf16.mxu0 %v482
  %546 = vmatpush1.bf16.msra.mxu0 %v481
  %547 = vmatprep.subr.bf16.mxu0 %v484
  %548 = vmatpush1.bf16.msra.mxu0 %v483
  %549 = vmatprep.subr.bf16.mxu0 %v486
  %550 = vmatpush1.bf16.msra.mxu0 %v485
  %551 = vmatprep.subr.bf16.mxu0 %v488
  %552 = vmatpush1.bf16.msra.mxu0 %v487
  %553 = vmatprep.subr.bf16.mxu0 %v490
  %554 = vmatpush1.bf16.msra.mxu0 %v489
  %555 = vmatprep.subr.bf16.mxu0 %v492
  %556 = vmatpush1.bf16.msra.mxu0 %v491
  %557 = vmatprep.subr.bf16.mxu0 %v494
  %558 = vmatpush1.bf16.msra.mxu0 %v493
  %559 = vmatprep.subr.bf16.mxu0 %v496
  %560 = vmatpush1.bf16.msra.mxu0 %v495
  %561 = vmatprep.subr.bf16.mxu0 %v498
  %562 = vmatpush1.bf16.msra.mxu0 %v497
  %563 = vmatprep.subr.bf16.mxu0 %v500
  %564 = vmatpush1.bf16.msra.mxu0 %v499
  %565 = vmatprep.subr.bf16.mxu0 %v502
  %566 = vmatpush1.bf16.msra.mxu0 %v501
  %567 = vmatprep.subr.bf16.mxu0 %v504
  %568 = vmatpush1.bf16.msra.mxu0 %v503
  %569 = vmatprep.subr.bf16.mxu0 %v506
  %570 = vmatpush1.bf16.msra.mxu0 %v505
  %571 = vmatprep.subr.bf16.mxu0 %v508
  %572 = vmatpush1.bf16.msra.mxu0 %v507
  %573 = vmatprep.mubr.bf16.mxu0 %v318
  %574 = vmatmul.mubr.bf16.gmra.mrb[0].mxu0 %v317
  %v575 = vpop.f32.mrb[0].mxu0
  %v576 = vadd.f32 0.0, %v575
  %v577 = vpop.f32.mrb[0].mxu0
  %v578 = vadd.f32 0.0, %v577
  %v579 = vpop.f32.mrb[0].mxu0
  %v580 = vadd.f32 0.0, %v579
  %v581 = vpop.f32.mrb[0].mxu0
  %v582 = vadd.f32 0.0, %v581
  %583 = vmatprep.mubr.bf16.mxu0 %v320
  %584 = vmatmul.mubr.bf16.gmra.mrb[0].mxu0 %v319
  %v585 = vpop.f32.mrb[0].mxu0
  %v586 = vadd.f32 0.0, %v585
  %v587 = vpop.f32.mrb[0].mxu0
  %v588 = vadd.f32 0.0, %v587
  %v589 = vpop.f32.mrb[0].mxu0
  %v590 = vadd.f32 0.0, %v589
  %v591 = vpop.f32.mrb[0].mxu0
  %v592 = vadd.f32 0.0, %v591
  %593 = vmatprep.mubr.bf16.mxu0 %v322
  %594 = vmatmul.mubr.bf16.gmra.mrb[0].mxu0 %v321
  %v595 = vpop.f32.mrb[0].mxu0
  %v596 = vadd.f32 0.0, %v595
  %v597 = vpop.f32.mrb[0].mxu0
  %v598 = vadd.f32 0.0, %v597
  %v599 = vpop.f32.mrb[0].mxu0
  %v600 = vadd.f32 0.0, %v599
  %v601 = vpop.f32.mrb[0].mxu0
  %v602 = vadd.f32 0.0, %v601
  %603 = vmatprep.mubr.bf16.mxu0 %v324
  %604 = vmatmul.mubr.bf16.gmra.mrb[0].mxu0 %v323
  %v605 = vpop.f32.mrb[0].mxu0
  %v606 = vadd.f32 0.0, %v605
  %v607 = vpop.f32.mrb[0].mxu0
  %v608 = vadd.f32 0.0, %v607
  %v609 = vpop.f32.mrb[0].mxu0
  %v610 = vadd.f32 0.0, %v609
  %v611 = vpop.f32.mrb[0].mxu0
  %v612 = vadd.f32 0.0, %v611
  %613 = vmatprep.mubr.bf16.mxu0 %v326
  %614 = vmatmul.mubr.bf16.gmra.mrb[0].mxu0 %v325
  %v615 = vpop.f32.mrb[0].mxu0
  %v616 = vadd.f32 0.0, %v615
  %v617 = vpop.f32.mrb[0].mxu0
  %v618 = vadd.f32 0.0, %v617
  %v619 = vpop.f32.mrb[0].mxu0
  %v620 = vadd.f32 0.0, %v619
  %v621 = vpop.f32.mrb[0].mxu0
  %v622 = vadd.f32 0.0, %v621
  %623 = vmatprep.mubr.bf16.mxu0 %v328
  %624 = vmatmul.mubr.bf16.gmra.mrb[0].mxu0 %v327
  %v625 = vpop.f32.mrb[0].mxu0
  %v626 = vadd.f32 0.0, %v625
  %v627 = vpop.f32.mrb[0].mxu0
  %v628 = vadd.f32 0.0, %v627
  %v629 = vpop.f32.mrb[0].mxu0
  %v630 = vadd.f32 0.0, %v629
  %v631 = vpop.f32.mrb[0].mxu0
  %v632 = vadd.f32 0.0, %v631
  %633 = vmatprep.mubr.bf16.mxu0 %v330
  %634 = vmatmul.mubr.bf16.gmra.mrb[0].mxu0 %v329
  %v635 = vpop.f32.mrb[0].mxu0
  %v636 = vadd.f32 0.0, %v635
  %v637 = vpop.f32.mrb[0].mxu0
  %v638 = vadd.f32 0.0, %v637
  %v639 = vpop.f32.mrb[0].mxu0
  %v640 = vadd.f32 0.0, %v639
  %v641 = vpop.f32.mrb[0].mxu0
  %v642 = vadd.f32 0.0, %v641
  %643 = vmatprep.mubr.bf16.mxu0 %v332
  %644 = vmatmul.mubr.bf16.gmra.mrb[0].mxu0 %v331
  %v645 = vpop.f32.mrb[0].mxu0
  %v646 = vadd.f32 0.0, %v645
  %v647 = vpop.f32.mrb[0].mxu0
  %v648 = vadd.f32 0.0, %v647
  %v649 = vpop.f32.mrb[0].mxu0
  %v650 = vadd.f32 0.0, %v649
  %v651 = vpop.f32.mrb[0].mxu0
  %v652 = vadd.f32 0.0, %v651
  %653 = vmatprep.mubr.bf16.mxu0 %v334
  %654 = vmatmul.mubr.bf16.gmra.mrb[0].mxu0 %v333
  %v655 = vpop.f32.mrb[0].mxu0
  %v656 = vadd.f32 0.0, %v655
  %v657 = vpop.f32.mrb[0].mxu0
  %v658 = vadd.f32 0.0, %v657
  %v659 = vpop.f32.mrb[0].mxu0
  %v660 = vadd.f32 0.0, %v659
  %v661 = vpop.f32.mrb[0].mxu0
  %v662 = vadd.f32 0.0, %v661
  %663 = vmatprep.mubr.bf16.mxu0 %v336
  %664 = vmatmul.mubr.bf16.gmra.mrb[0].mxu0 %v335
  %v665 = vpop.f32.mrb[0].mxu0
  %v666 = vadd.f32 0.0, %v665
  %v667 = vpop.f32.mrb[0].mxu0
  %v668 = vadd.f32 0.0, %v667
  %v669 = vpop.f32.mrb[0].mxu0
  %v670 = vadd.f32 0.0, %v669
  %v671 = vpop.f32.mrb[0].mxu0
  %v672 = vadd.f32 0.0, %v671
  %673 = vmatprep.mubr.bf16.mxu0 %v338
  %674 = vmatmul.mubr.bf16.gmra.mrb[0].mxu0 %v337
  %v675 = vpop.f32.mrb[0].mxu0
  %v676 = vadd.f32 0.0, %v675
  %v677 = vpop.f32.mrb[0].mxu0
  %v678 = vadd.f32 0.0, %v677
  %v679 = vpop.f32.mrb[0].mxu0
  %v680 = vadd.f32 0.0, %v679
  %v681 = vpop.f32.mrb[0].mxu0
  %v682 = vadd.f32 0.0, %v681
  %683 = vmatprep.mubr.bf16.mxu0 %v340
  %684 = vmatmul.mubr.bf16.gmra.mrb[0].mxu0 %v339
  %v685 = vpop.f32.mrb[0].mxu0
  %v686 = vadd.f32 0.0, %v685
  %v687 = vpop.f32.mrb[0].mxu0
  %v688 = vadd.f32 0.0, %v687
  %v689 = vpop.f32.mrb[0].mxu0
  %v690 = vadd.f32 0.0, %v689
  %v691 = vpop.f32.mrb[0].mxu0
  %v692 = vadd.f32 0.0, %v691
  %693 = vmatprep.mubr.bf16.mxu0 %v342
  %694 = vmatmul.mubr.bf16.gmra.mrb[0].mxu0 %v341
  %v695 = vpop.f32.mrb[0].mxu0
  %v696 = vadd.f32 0.0, %v695
  %v697 = vpop.f32.mrb[0].mxu0
  %v698 = vadd.f32 0.0, %v697
  %v699 = vpop.f32.mrb[0].mxu0
  %v700 = vadd.f32 0.0, %v699
  %v701 = vpop.f32.mrb[0].mxu0
  %v702 = vadd.f32 0.0, %v701
  %703 = vmatprep.mubr.bf16.mxu0 %v344
  %704 = vmatmul.mubr.bf16.gmra.mrb[0].mxu0 %v343
  %v705 = vpop.f32.mrb[0].mxu0
  %v706 = vadd.f32 0.0, %v705
  %v707 = vpop.f32.mrb[0].mxu0
  %v708 = vadd.f32 0.0, %v707
  %v709 = vpop.f32.mrb[0].mxu0
  %v710 = vadd.f32 0.0, %v709
  %v711 = vpop.f32.mrb[0].mxu0
  %v712 = vadd.f32 0.0, %v711
  %713 = vmatprep.mubr.bf16.mxu0 %v346
  %714 = vmatmul.mubr.bf16.gmra.mrb[0].mxu0 %v345
  %v715 = vpop.f32.mrb[0].mxu0
  %v716 = vadd.f32 0.0, %v715
  %v717 = vpop.f32.mrb[0].mxu0
  %v718 = vadd.f32 0.0, %v717
  %v719 = vpop.f32.mrb[0].mxu0
  %v720 = vadd.f32 0.0, %v719
  %v721 = vpop.f32.mrb[0].mxu0
  %v722 = vadd.f32 0.0, %v721
  %723 = vmatprep.mubr.bf16.mxu0 %v348
  %724 = vmatmul.mubr.bf16.gmra.mrb[0].mxu0 %v347
  %v725 = vpop.f32.mrb[0].mxu0
  %v726 = vadd.f32 0.0, %v725
  %v727 = vpop.f32.mrb[0].mxu0
  %v728 = vadd.f32 0.0, %v727
  %v729 = vpop.f32.mrb[0].mxu0
  %v730 = vadd.f32 0.0, %v729
  %v731 = vpop.f32.mrb[0].mxu0
  %v732 = vadd.f32 0.0, %v731
  %733 = vdwg.mxu0
  %v734 = vadd.f32 %v125, %v576
  %v735 = vadd.f32 %v126, %v578
  %v736 = vadd.f32 %v127, %v580
  %v737 = vadd.f32 %v128, %v582
  %v738 = vadd.f32 %v129, %v586
  %v739 = vadd.f32 %v130, %v588
  %v740 = vadd.f32 %v131, %v590
  %v741 = vadd.f32 %v132, %v592
  %v742 = vadd.f32 %v133, %v596
  %v743 = vadd.f32 %v134, %v598
  %v744 = vadd.f32 %v135, %v600
  %v745 = vadd.f32 %v136, %v602
  %v746 = vadd.f32 %v137, %v606
  %v747 = vadd.f32 %v138, %v608
  %v748 = vadd.f32 %v139, %v610
  %v749 = vadd.f32 %v140, %v612
  %v750 = vadd.f32 %v141, %v616
  %v751 = vadd.f32 %v142, %v618
  %v752 = vadd.f32 %v143, %v620
  %v753 = vadd.f32 %v144, %v622
  %v754 = vadd.f32 %v145, %v626
  %v755 = vadd.f32 %v146, %v628
  %v756 = vadd.f32 %v147, %v630
  %v757 = vadd.f32 %v148, %v632
  %v758 = vadd.f32 %v149, %v636
  %v759 = vadd.f32 %v150, %v638
  %v760 = vadd.f32 %v151, %v640
  %v761 = vadd.f32 %v152, %v642
  %v762 = vadd.f32 %v153, %v646
  %v763 = vadd.f32 %v154, %v648
  %v764 = vadd.f32 %v155, %v650
  %v765 = vadd.f32 %v156, %v652
  %v766 = vadd.f32 %v157, %v656
  %v767 = vadd.f32 %v158, %v658
  %v768 = vadd.f32 %v159, %v660
  %v769 = vadd.f32 %v160, %v662
  %v770 = vadd.f32 %v161, %v666
  %v771 = vadd.f32 %v162, %v668
  %v772 = vadd.f32 %v163, %v670
  %v773 = vadd.f32 %v164, %v672
  %v774 = vadd.f32 %v165, %v676
  %v775 = vadd.f32 %v166, %v678
  %v776 = vadd.f32 %v167, %v680
  %v777 = vadd.f32 %v168, %v682
  %v778 = vadd.f32 %v169, %v686
  %v779 = vadd.f32 %v170, %v688
  %v780 = vadd.f32 %v171, %v690
  %v781 = vadd.f32 %v172, %v692
  %v782 = vadd.f32 %v173, %v696
  %v783 = vadd.f32 %v174, %v698
  %v784 = vadd.f32 %v175, %v700
  %v785 = vadd.f32 %v176, %v702
  %v786 = vadd.f32 %v177, %v706
  %v787 = vadd.f32 %v178, %v708
  %v788 = vadd.f32 %v179, %v710
  %v789 = vadd.f32 %v180, %v712
  %v790 = vadd.f32 %v181, %v716
  %v791 = vadd.f32 %v182, %v718
  %v792 = vadd.f32 %v183, %v720
  %v793 = vadd.f32 %v184, %v722
  %v794 = vadd.f32 %v185, %v726
  %v795 = vadd.f32 %v186, %v728
  %v796 = vadd.f32 %v187, %v730
  %v797 = vadd.f32 %v188, %v732
  %798 = vst [vmem:[#allocation2] sm:$0xff] %v734
  %799 = vst [vmem:[#allocation2 + $0x8] sm:$0xff] %v735
  %800 = vst [vmem:[#allocation2 + $0x10] sm:$0xff] %v736
  %801 = vst [vmem:[#allocation2 + $0x18] sm:$0xff] %v737
  %802 = vst [vmem:[#allocation2 + $0x20] sm:$0xff] %v738
  %803 = vst [vmem:[#allocation2 + $0x28] sm:$0xff] %v739
  %804 = vst [vmem:[#allocation2 + $0x30] sm:$0xff] %v740
  %805 = vst [vmem:[#allocation2 + $0x38] sm:$0xff] %v741
  %806 = vst [vmem:[#allocation2 + $0x40] sm:$0xff] %v742
  %807 = vst [vmem:[#allocation2 + $0x48] sm:$0xff] %v743
  %808 = vst [vmem:[#allocation2 + $0x50] sm:$0xff] %v744
  %809 = vst [vmem:[#allocation2 + $0x58] sm:$0xff] %v745
  %810 = vst [vmem:[#allocation2 + $0x60] sm:$0xff] %v746
  %811 = vst [vmem:[#allocation2 + $0x68] sm:$0xff] %v747
  %812 = vst [vmem:[#allocation2 + $0x70] sm:$0xff] %v748
  %813 = vst [vmem:[#allocation2 + $0x78] sm:$0xff] %v749
  %814 = vst [vmem:[#allocation2 + $0x80] sm:$0xff] %v750
  %815 = vst [vmem:[#allocation2 + $0x88] sm:$0xff] %v751
  %816 = vst [vmem:[#allocation2 + $0x90] sm:$0xff] %v752
  %817 = vst [vmem:[#allocation2 + $0x98] sm:$0xff] %v753
  %818 = vst [vmem:[#allocation2 + $0xa0] sm:$0xff] %v754
  %819 = vst [vmem:[#allocation2 + $0xa8] sm:$0xff] %v755
  %820 = vst [vmem:[#allocation2 + $0xb0] sm:$0xff] %v756
  %821 = vst [vmem:[#allocation2 + $0xb8] sm:$0xff] %v757
  %822 = vst [vmem:[#allocation2 + $0xc0] sm:$0xff] %v758
  %823 = vst [vmem:[#allocation2 + $0xc8] sm:$0xff] %v759
  %824 = vst [vmem:[#allocation2 + $0xd0] sm:$0xff] %v760
  %825 = vst [vmem:[#allocation2 + $0xd8] sm:$0xff] %v761
  %826 = vst [vmem:[#allocation2 + $0xe0] sm:$0xff] %v762
  %827 = vst [vmem:[#allocation2 + $0xe8] sm:$0xff] %v763
  %828 = vst [vmem:[#allocation2 + $0xf0] sm:$0xff] %v764
  %829 = vst [vmem:[#allocation2 + $0xf8] sm:$0xff] %v765
  %830 = vst [vmem:[#allocation2 + $0x100] sm:$0xff] %v766
  %831 = vst [vmem:[#allocation2 + $0x108] sm:$0xff] %v767
  %832 = vst [vmem:[#allocation2 + $0x110] sm:$0xff] %v768
  %833 = vst [vmem:[#allocation2 + $0x118] sm:$0xff] %v769
  %834 = vst [vmem:[#allocation2 + $0x120] sm:$0xff] %v770
  %835 = vst [vmem:[#allocation2 + $0x128] sm:$0xff] %v771
  %836 = vst [vmem:[#allocation2 + $0x130] sm:$0xff] %v772
  %837 = vst [vmem:[#allocation2 + $0x138] sm:$0xff] %v773
  %838 = vst [vmem:[#allocation2 + $0x140] sm:$0xff] %v774
  %839 = vst [vmem:[#allocation2 + $0x148] sm:$0xff] %v775
  %840 = vst [vmem:[#allocation2 + $0x150] sm:$0xff] %v776
  %841 = vst [vmem:[#allocation2 + $0x158] sm:$0xff] %v777
  %842 = vst [vmem:[#allocation2 + $0x160] sm:$0xff] %v778
  %843 = vst [vmem:[#allocation2 + $0x168] sm:$0xff] %v779
  %844 = vst [vmem:[#allocation2 + $0x170] sm:$0xff] %v780
  %845 = vst [vmem:[#allocation2 + $0x178] sm:$0xff] %v781
  %846 = vst [vmem:[#allocation2 + $0x180] sm:$0xff] %v782
  %847 = vst [vmem:[#allocation2 + $0x188] sm:$0xff] %v783
  %848 = vst [vmem:[#allocation2 + $0x190] sm:$0xff] %v784
  %849 = vst [vmem:[#allocation2 + $0x198] sm:$0xff] %v785
  %850 = vst [vmem:[#allocation2 + $0x1a0] sm:$0xff] %v786
  %851 = vst [vmem:[#allocation2 + $0x1a8] sm:$0xff] %v787
  %852 = vst [vmem:[#allocation2 + $0x1b0] sm:$0xff] %v788
  %853 = vst [vmem:[#allocation2 + $0x1b8] sm:$0xff] %v789
  %854 = vst [vmem:[#allocation2 + $0x1c0] sm:$0xff] %v790
  %855 = vst [vmem:[#allocation2 + $0x1c8] sm:$0xff] %v791
  %856 = vst [vmem:[#allocation2 + $0x1d0] sm:$0xff] %v792
  %857 = vst [vmem:[#allocation2 + $0x1d8] sm:$0xff] %v793
  %858 = vst [vmem:[#allocation2 + $0x1e0] sm:$0xff] %v794
  %859 = vst [vmem:[#allocation2 + $0x1e8] sm:$0xff] %v795
  %860 = vst [vmem:[#allocation2 + $0x1f0] sm:$0xff] %v796
  %861 = vst [vmem:[#allocation2 + $0x1f8] sm:$0xff] %v797
  // Predicated region
  $region22: #{infomax_forward.4} parent=0 // pred_check
    %p862 = pneg %p19
  $region23: #{infomax_forward.4} parent=0 // pred_check_branch
    %864 = sbr.rel (%p862) target = $region25
  $region24: #{infomax_forward.4} parent=0 // pred_region
    %v865 = vld [vmem:[#allocation2] sm:$0xff]
    %v866 = vld [vmem:[#allocation2 + $0x8] sm:$0xff]
    %v867 = vld [vmem:[#allocation2 + $0x10] sm:$0xff]
    %v868 = vld [vmem:[#allocation2 + $0x18] sm:$0xff]
    %v869 = vld [vmem:[#allocation2 + $0x20] sm:$0xff]
    %v870 = vld [vmem:[#allocation2 + $0x28] sm:$0xff]
    %v871 = vld [vmem:[#allocation2 + $0x30] sm:$0xff]
    %v872 = vld [vmem:[#allocation2 + $0x38] sm:$0xff]
    %v873 = vld [vmem:[#allocation2 + $0x40] sm:$0xff]
    %v874 = vld [vmem:[#allocation2 + $0x48] sm:$0xff]
    %v875 = vld [vmem:[#allocation2 + $0x50] sm:$0xff]
    %v876 = vld [vmem:[#allocation2 + $0x58] sm:$0xff]
    %v877 = vld [vmem:[#allocation2 + $0x60] sm:$0xff]
    %v878 = vld [vmem:[#allocation2 + $0x68] sm:$0xff]
    %v879 = vld [vmem:[#allocation2 + $0x70] sm:$0xff]
    %v880 = vld [vmem:[#allocation2 + $0x78] sm:$0xff]
    %v881 = vld [vmem:[#allocation2 + $0x80] sm:$0xff]
    %v882 = vld [vmem:[#allocation2 + $0x88] sm:$0xff]
    %v883 = vld [vmem:[#allocation2 + $0x90] sm:$0xff]
    %v884 = vld [vmem:[#allocation2 + $0x98] sm:$0xff]
    %v885 = vld [vmem:[#allocation2 + $0xa0] sm:$0xff]
    %v886 = vld [vmem:[#allocation2 + $0xa8] sm:$0xff]
    %v887 = vld [vmem:[#allocation2 + $0xb0] sm:$0xff]
    %v888 = vld [vmem:[#allocation2 + $0xb8] sm:$0xff]
    %v889 = vld [vmem:[#allocation2 + $0xc0] sm:$0xff]
    %v890 = vld [vmem:[#allocation2 + $0xc8] sm:$0xff]
    %v891 = vld [vmem:[#allocation2 + $0xd0] sm:$0xff]
    %v892 = vld [vmem:[#allocation2 + $0xd8] sm:$0xff]
    %v893 = vld [vmem:[#allocation2 + $0xe0] sm:$0xff]
    %v894 = vld [vmem:[#allocation2 + $0xe8] sm:$0xff]
    %v895 = vld [vmem:[#allocation2 + $0xf0] sm:$0xff]
    %v896 = vld [vmem:[#allocation2 + $0xf8] sm:$0xff]
    %v897 = vld [vmem:[#allocation2 + $0x100] sm:$0xff]
    %v898 = vld [vmem:[#allocation2 + $0x108] sm:$0xff]
    %v899 = vld [vmem:[#allocation2 + $0x110] sm:$0xff]
    %v900 = vld [vmem:[#allocation2 + $0x118] sm:$0xff]
    %v901 = vld [vmem:[#allocation2 + $0x120] sm:$0xff]
    %v902 = vld [vmem:[#allocation2 + $0x128] sm:$0xff]
    %v903 = vld [vmem:[#allocation2 + $0x130] sm:$0xff]
    %v904 = vld [vmem:[#allocation2 + $0x138] sm:$0xff]
    %v905 = vld [vmem:[#allocation2 + $0x140] sm:$0xff]
    %v906 = vld [vmem:[#allocation2 + $0x148] sm:$0xff]
    %v907 = vld [vmem:[#allocation2 + $0x150] sm:$0xff]
    %v908 = vld [vmem:[#allocation2 + $0x158] sm:$0xff]
    %v909 = vld [vmem:[#allocation2 + $0x160] sm:$0xff]
    %v910 = vld [vmem:[#allocation2 + $0x168] sm:$0xff]
    %v911 = vld [vmem:[#allocation2 + $0x170] sm:$0xff]
    %v912 = vld [vmem:[#allocation2 + $0x178] sm:$0xff]
    %v913 = vld [vmem:[#allocation2 + $0x180] sm:$0xff]
    %v914 = vld [vmem:[#allocation2 + $0x188] sm:$0xff]
    %v915 = vld [vmem:[#allocation2 + $0x190] sm:$0xff]
    %v916 = vld [vmem:[#allocation2 + $0x198] sm:$0xff]
    %v917 = vld [vmem:[#allocation2 + $0x1a0] sm:$0xff]
    %v918 = vld [vmem:[#allocation2 + $0x1a8] sm:$0xff]
    %v919 = vld [vmem:[#allocation2 + $0x1b0] sm:$0xff]
    %v920 = vld [vmem:[#allocation2 + $0x1b8] sm:$0xff]
    %v921 = vld [vmem:[#allocation2 + $0x1c0] sm:$0xff]
    %v922 = vld [vmem:[#allocation2 + $0x1c8] sm:$0xff]
    %v923 = vld [vmem:[#allocation2 + $0x1d0] sm:$0xff]
    %v924 = vld [vmem:[#allocation2 + $0x1d8] sm:$0xff]
    %v925 = vld [vmem:[#allocation2 + $0x1e0] sm:$0xff]
    %v926 = vld [vmem:[#allocation2 + $0x1e8] sm:$0xff]
    %v927 = vld [vmem:[#allocation2 + $0x1f0] sm:$0xff]
    %v928 = vld [vmem:[#allocation2 + $0x1f8] sm:$0xff]
    %v929 = vld [vmem:[%s2] sm:$0x3]
    %v931 = vlaneseq
    %v932 = vshrl.u32 %v931, 7
    %v933 = vsub.s32 0, %v932
    %v934 = vrot.slane %v929, %v933
    %v935 = vlaneseq
    %v936 = vshrl.u32 %v935, 7
    %v937 = vsub.s32 1, %v936
    %v938 = vrot.slane %v929, %v937
    %v941 = vadd.f32 %v865, %v934
    %v942 = vadd.f32 %v866, %v938
    %v943 = vadd.f32 %v867, %v934
    %v944 = vadd.f32 %v868, %v938
    %v945 = vadd.f32 %v869, %v934
    %v946 = vadd.f32 %v870, %v938
    %v947 = vadd.f32 %v871, %v934
    %v948 = vadd.f32 %v872, %v938
    %v949 = vadd.f32 %v873, %v934
    %v950 = vadd.f32 %v874, %v938
    %v951 = vadd.f32 %v875, %v934
    %v952 = vadd.f32 %v876, %v938
    %v953 = vadd.f32 %v877, %v934
    %v954 = vadd.f32 %v878, %v938
    %v955 = vadd.f32 %v879, %v934
    %v956 = vadd.f32 %v880, %v938
    %v957 = vadd.f32 %v881, %v934
    %v958 = vadd.f32 %v882, %v938
    %v959 = vadd.f32 %v883, %v934
    %v960 = vadd.f32 %v884, %v938
    %v961 = vadd.f32 %v885, %v934
    %v962 = vadd.f32 %v886, %v938
    %v963 = vadd.f32 %v887, %v934
    %v964 = vadd.f32 %v888, %v938
    %v965 = vadd.f32 %v889, %v934
    %v966 = vadd.f32 %v890, %v938
    %v967 = vadd.f32 %v891, %v934
    %v968 = vadd.f32 %v892, %v938
    %v969 = vadd.f32 %v893, %v934
    %v970 = vadd.f32 %v894, %v938
    %v971 = vadd.f32 %v895, %v934
    %v972 = vadd.f32 %v896, %v938
    %v973 = vadd.f32 %v897, %v934
    %v974 = vadd.f32 %v898, %v938
    %v975 = vadd.f32 %v899, %v934
    %v976 = vadd.f32 %v900, %v938
    %v977 = vadd.f32 %v901, %v934
    %v978 = vadd.f32 %v902, %v938
    %v979 = vadd.f32 %v903, %v934
    %v980 = vadd.f32 %v904, %v938
    %v981 = vadd.f32 %v905, %v934
    %v982 = vadd.f32 %v906, %v938
    %v983 = vadd.f32 %v907, %v934
    %v984 = vadd.f32 %v908, %v938
    %v985 = vadd.f32 %v909, %v934
    %v986 = vadd.f32 %v910, %v938
    %v987 = vadd.f32 %v911, %v934
    %v988 = vadd.f32 %v912, %v938
    %v989 = vadd.f32 %v913, %v934
    %v990 = vadd.f32 %v914, %v938
    %v991 = vadd.f32 %v915, %v934
    %v992 = vadd.f32 %v916, %v938
    %v993 = vadd.f32 %v917, %v934
    %v994 = vadd.f32 %v918, %v938
    %v995 = vadd.f32 %v919, %v934
    %v996 = vadd.f32 %v920, %v938
    %v997 = vadd.f32 %v921, %v934
    %v998 = vadd.f32 %v922, %v938
    %v999 = vadd.f32 %v923, %v934
    %v1000 = vadd.f32 %v924, %v938
    %v1001 = vadd.f32 %v925, %v934
    %v1002 = vadd.f32 %v926, %v938
    %v1003 = vadd.f32 %v927, %v934
    %v1004 = vadd.f32 %v928, %v938
    %vm1005 = vcmp.ge.f32.partialorder %v941, 0.0
    %vm1006 = vcmp.ge.f32.partialorder %v942, 0.0
    %vm1007 = vcmp.ge.f32.partialorder %v943, 0.0
    %vm1008 = vcmp.ge.f32.partialorder %v944, 0.0
    %vm1009 = vcmp.ge.f32.partialorder %v945, 0.0
    %vm1010 = vcmp.ge.f32.partialorder %v946, 0.0
    %vm1011 = vcmp.ge.f32.partialorder %v947, 0.0
    %vm1012 = vcmp.ge.f32.partialorder %v948, 0.0
    %vm1013 = vcmp.ge.f32.partialorder %v949, 0.0
    %vm1014 = vcmp.ge.f32.partialorder %v950, 0.0
    %vm1015 = vcmp.ge.f32.partialorder %v951, 0.0
    %vm1016 = vcmp.ge.f32.partialorder %v952, 0.0
    %vm1017 = vcmp.ge.f32.partialorder %v953, 0.0
    %vm1018 = vcmp.ge.f32.partialorder %v954, 0.0
    %vm1019 = vcmp.ge.f32.partialorder %v955, 0.0
    %vm1020 = vcmp.ge.f32.partialorder %v956, 0.0
    %vm1021 = vcmp.ge.f32.partialorder %v957, 0.0
    %vm1022 = vcmp.ge.f32.partialorder %v958, 0.0
    %vm1023 = vcmp.ge.f32.partialorder %v959, 0.0
    %vm1024 = vcmp.ge.f32.partialorder %v960, 0.0
    %vm1025 = vcmp.ge.f32.partialorder %v961, 0.0
    %vm1026 = vcmp.ge.f32.partialorder %v962, 0.0
    %vm1027 = vcmp.ge.f32.partialorder %v963, 0.0
    %vm1028 = vcmp.ge.f32.partialorder %v964, 0.0
    %vm1029 = vcmp.ge.f32.partialorder %v965, 0.0
    %vm1030 = vcmp.ge.f32.partialorder %v966, 0.0
    %vm1031 = vcmp.ge.f32.partialorder %v967, 0.0
    %vm1032 = vcmp.ge.f32.partialorder %v968, 0.0
    %vm1033 = vcmp.ge.f32.partialorder %v969, 0.0
    %vm1034 = vcmp.ge.f32.partialorder %v970, 0.0
    %vm1035 = vcmp.ge.f32.partialorder %v971, 0.0
    %vm1036 = vcmp.ge.f32.partialorder %v972, 0.0
    %vm1037 = vcmp.ge.f32.partialorder %v973, 0.0
    %vm1038 = vcmp.ge.f32.partialorder %v974, 0.0
    %vm1039 = vcmp.ge.f32.partialorder %v975, 0.0
    %vm1040 = vcmp.ge.f32.partialorder %v976, 0.0
    %vm1041 = vcmp.ge.f32.partialorder %v977, 0.0
    %vm1042 = vcmp.ge.f32.partialorder %v978, 0.0
    %vm1043 = vcmp.ge.f32.partialorder %v979, 0.0
    %vm1044 = vcmp.ge.f32.partialorder %v980, 0.0
    %vm1045 = vcmp.ge.f32.partialorder %v981, 0.0
    %vm1046 = vcmp.ge.f32.partialorder %v982, 0.0
    %vm1047 = vcmp.ge.f32.partialorder %v983, 0.0
    %vm1048 = vcmp.ge.f32.partialorder %v984, 0.0
    %vm1049 = vcmp.ge.f32.partialorder %v985, 0.0
    %vm1050 = vcmp.ge.f32.partialorder %v986, 0.0
    %vm1051 = vcmp.ge.f32.partialorder %v987, 0.0
    %vm1052 = vcmp.ge.f32.partialorder %v988, 0.0
    %vm1053 = vcmp.ge.f32.partialorder %v989, 0.0
    %vm1054 = vcmp.ge.f32.partialorder %v990, 0.0
    %vm1055 = vcmp.ge.f32.partialorder %v991, 0.0
    %vm1056 = vcmp.ge.f32.partialorder %v992, 0.0
    %vm1057 = vcmp.ge.f32.partialorder %v993, 0.0
    %vm1058 = vcmp.ge.f32.partialorder %v994, 0.0
    %vm1059 = vcmp.ge.f32.partialorder %v995, 0.0
    %vm1060 = vcmp.ge.f32.partialorder %v996, 0.0
    %vm1061 = vcmp.ge.f32.partialorder %v997, 0.0
    %vm1062 = vcmp.ge.f32.partialorder %v998, 0.0
    %vm1063 = vcmp.ge.f32.partialorder %v999, 0.0
    %vm1064 = vcmp.ge.f32.partialorder %v1000, 0.0
    %vm1065 = vcmp.ge.f32.partialorder %v1001, 0.0
    %vm1066 = vcmp.ge.f32.partialorder %v1002, 0.0
    %vm1067 = vcmp.ge.f32.partialorder %v1003, 0.0
    %vm1068 = vcmp.ge.f32.partialorder %v1004, 0.0
    %v1069 = vld [vmem:[%s3] sm:$0x3]
    %v1071 = vlaneseq
    %v1072 = vshrl.u32 %v1071, 7
    %v1073 = vsub.s32 0, %v1072
    %v1074 = vrot.slane %v1069, %v1073
    %v1075 = vlaneseq
    %v1076 = vshrl.u32 %v1075, 7
    %v1077 = vsub.s32 1, %v1076
    %v1078 = vrot.slane %v1069, %v1077
    %v1081 = vmul.f32 %v1074, %v941
    %v1082 = vmul.f32 %v1078, %v942
    %v1083 = vmul.f32 %v1074, %v943
    %v1084 = vmul.f32 %v1078, %v944
    %v1085 = vmul.f32 %v1074, %v945
    %v1086 = vmul.f32 %v1078, %v946
    %v1087 = vmul.f32 %v1074, %v947
    %v1088 = vmul.f32 %v1078, %v948
    %v1089 = vmul.f32 %v1074, %v949
    %v1090 = vmul.f32 %v1078, %v950
    %v1091 = vmul.f32 %v1074, %v951
    %v1092 = vmul.f32 %v1078, %v952
    %v1093 = vmul.f32 %v1074, %v953
    %v1094 = vmul.f32 %v1078, %v954
    %v1095 = vmul.f32 %v1074, %v955
    %v1096 = vmul.f32 %v1078, %v956
    %v1097 = vmul.f32 %v1074, %v957
    %v1098 = vmul.f32 %v1078, %v958
    %v1099 = vmul.f32 %v1074, %v959
    %v1100 = vmul.f32 %v1078, %v960
    %v1101 = vmul.f32 %v1074, %v961
    %v1102 = vmul.f32 %v1078, %v962
    %v1103 = vmul.f32 %v1074, %v963
    %v1104 = vmul.f32 %v1078, %v964
    %v1105 = vmul.f32 %v1074, %v965
    %v1106 = vmul.f32 %v1078, %v966
    %v1107 = vmul.f32 %v1074, %v967
    %v1108 = vmul.f32 %v1078, %v968
    %v1109 = vmul.f32 %v1074, %v969
    %v1110 = vmul.f32 %v1078, %v970
    %v1111 = vmul.f32 %v1074, %v971
    %v1112 = vmul.f32 %v1078, %v972
    %v1113 = vmul.f32 %v1074, %v973
    %v1114 = vmul.f32 %v1078, %v974
    %v1115 = vmul.f32 %v1074, %v975
    %v1116 = vmul.f32 %v1078, %v976
    %v1117 = vmul.f32 %v1074, %v977
    %v1118 = vmul.f32 %v1078, %v978
    %v1119 = vmul.f32 %v1074, %v979
    %v1120 = vmul.f32 %v1078, %v980
    %v1121 = vmul.f32 %v1074, %v981
    %v1122 = vmul.f32 %v1078, %v982
    %v1123 = vmul.f32 %v1074, %v983
    %v1124 = vmul.f32 %v1078, %v984
    %v1125 = vmul.f32 %v1074, %v985
    %v1126 = vmul.f32 %v1078, %v986
    %v1127 = vmul.f32 %v1074, %v987
    %v1128 = vmul.f32 %v1078, %v988
    %v1129 = vmul.f32 %v1074, %v989
    %v1130 = vmul.f32 %v1078, %v990
    %v1131 = vmul.f32 %v1074, %v991
    %v1132 = vmul.f32 %v1078, %v992
    %v1133 = vmul.f32 %v1074, %v993
    %v1134 = vmul.f32 %v1078, %v994
    %v1135 = vmul.f32 %v1074, %v995
    %v1136 = vmul.f32 %v1078, %v996
    %v1137 = vmul.f32 %v1074, %v997
    %v1138 = vmul.f32 %v1078, %v998
    %v1139 = vmul.f32 %v1074, %v999
    %v1140 = vmul.f32 %v1078, %v1000
    %v1141 = vmul.f32 %v1074, %v1001
    %v1142 = vmul.f32 %v1078, %v1002
    %v1143 = vmul.f32 %v1074, %v1003
    %v1144 = vmul.f32 %v1078, %v1004
    %v1145 = vsel %vm1005, %v941, %v1081
    %v1146 = vsel %vm1006, %v942, %v1082
    %v1147 = vsel %vm1007, %v943, %v1083
    %v1148 = vsel %vm1008, %v944, %v1084
    %v1149 = vsel %vm1009, %v945, %v1085
    %v1150 = vsel %vm1010, %v946, %v1086
    %v1151 = vsel %vm1011, %v947, %v1087
    %v1152 = vsel %vm1012, %v948, %v1088
    %v1153 = vsel %vm1013, %v949, %v1089
    %v1154 = vsel %vm1014, %v950, %v1090
    %v1155 = vsel %vm1015, %v951, %v1091
    %v1156 = vsel %vm1016, %v952, %v1092
    %v1157 = vsel %vm1017, %v953, %v1093
    %v1158 = vsel %vm1018, %v954, %v1094
    %v1159 = vsel %vm1019, %v955, %v1095
    %v1160 = vsel %vm1020, %v956, %v1096
    %v1161 = vsel %vm1021, %v957, %v1097
    %v1162 = vsel %vm1022, %v958, %v1098
    %v1163 = vsel %vm1023, %v959, %v1099
    %v1164 = vsel %vm1024, %v960, %v1100
    %v1165 = vsel %vm1025, %v961, %v1101
    %v1166 = vsel %vm1026, %v962, %v1102
    %v1167 = vsel %vm1027, %v963, %v1103
    %v1168 = vsel %vm1028, %v964, %v1104
    %v1169 = vsel %vm1029, %v965, %v1105
    %v1170 = vsel %vm1030, %v966, %v1106
    %v1171 = vsel %vm1031, %v967, %v1107
    %v1172 = vsel %vm1032, %v968, %v1108
    %v1173 = vsel %vm1033, %v969, %v1109
    %v1174 = vsel %vm1034, %v970, %v1110
    %v1175 = vsel %vm1035, %v971, %v1111
    %v1176 = vsel %vm1036, %v972, %v1112
    %v1177 = vsel %vm1037, %v973, %v1113
    %v1178 = vsel %vm1038, %v974, %v1114
    %v1179 = vsel %vm1039, %v975, %v1115
    %v1180 = vsel %vm1040, %v976, %v1116
    %v1181 = vsel %vm1041, %v977, %v1117
    %v1182 = vsel %vm1042, %v978, %v1118
    %v1183 = vsel %vm1043, %v979, %v1119
    %v1184 = vsel %vm1044, %v980, %v1120
    %v1185 = vsel %vm1045, %v981, %v1121
    %v1186 = vsel %vm1046, %v982, %v1122
    %v1187 = vsel %vm1047, %v983, %v1123
    %v1188 = vsel %vm1048, %v984, %v1124
    %v1189 = vsel %vm1049, %v985, %v1125
    %v1190 = vsel %vm1050, %v986, %v1126
    %v1191 = vsel %vm1051, %v987, %v1127
    %v1192 = vsel %vm1052, %v988, %v1128
    %v1193 = vsel %vm1053, %v989, %v1129
    %v1194 = vsel %vm1054, %v990, %v1130
    %v1195 = vsel %vm1055, %v991, %v1131
    %v1196 = vsel %vm1056, %v992, %v1132
    %v1197 = vsel %vm1057, %v993, %v1133
    %v1198 = vsel %vm1058, %v994, %v1134
    %v1199 = vsel %vm1059, %v995, %v1135
    %v1200 = vsel %vm1060, %v996, %v1136
    %v1201 = vsel %vm1061, %v997, %v1137
    %v1202 = vsel %vm1062, %v998, %v1138
    %v1203 = vsel %vm1063, %v999, %v1139
    %v1204 = vsel %vm1064, %v1000, %v1140
    %v1205 = vsel %vm1065, %v1001, %v1141
    %v1206 = vsel %vm1066, %v1002, %v1142
    %v1207 = vsel %vm1067, %v1003, %v1143
    %v1208 = vsel %vm1068, %v1004, %v1144
    %v1209 = vpack.c.bf16 %v1147, %v1145
    %v1210 = vpack.c.bf16 %v1148, %v1146
    %v1211 = vpack.c.bf16 %v1151, %v1149
    %v1212 = vpack.c.bf16 %v1152, %v1150
    %v1213 = vpack.c.bf16 %v1155, %v1153
    %v1214 = vpack.c.bf16 %v1156, %v1154
    %v1215 = vpack.c.bf16 %v1159, %v1157
    %v1216 = vpack.c.bf16 %v1160, %v1158
    %v1217 = vpack.c.bf16 %v1163, %v1161
    %v1218 = vpack.c.bf16 %v1164, %v1162
    %v1219 = vpack.c.bf16 %v1167, %v1165
    %v1220 = vpack.c.bf16 %v1168, %v1166
    %v1221 = vpack.c.bf16 %v1171, %v1169
    %v1222 = vpack.c.bf16 %v1172, %v1170
    %v1223 = vpack.c.bf16 %v1175, %v1173
    %v1224 = vpack.c.bf16 %v1176, %v1174
    %v1225 = vpack.c.bf16 %v1179, %v1177
    %v1226 = vpack.c.bf16 %v1180, %v1178
    %v1227 = vpack.c.bf16 %v1183, %v1181
    %v1228 = vpack.c.bf16 %v1184, %v1182
    %v1229 = vpack.c.bf16 %v1187, %v1185
    %v1230 = vpack.c.bf16 %v1188, %v1186
    %v1231 = vpack.c.bf16 %v1191, %v1189
    %v1232 = vpack.c.bf16 %v1192, %v1190
    %v1233 = vpack.c.bf16 %v1195, %v1193
    %v1234 = vpack.c.bf16 %v1196, %v1194
    %v1235 = vpack.c.bf16 %v1199, %v1197
    %v1236 = vpack.c.bf16 %v1200, %v1198
    %v1237 = vpack.c.bf16 %v1203, %v1201
    %v1238 = vpack.c.bf16 %v1204, %v1202
    %v1239 = vpack.c.bf16 %v1207, %v1205
    %v1240 = vpack.c.bf16 %v1208, %v1206
    %v1273 = vunpack.c.l.b16 %v1209
    %v1274 = vunpack.c.l.b16 %v1210
    %v1275 = vunpack.c.h.b16 %v1209
    %v1276 = vunpack.c.h.b16 %v1210
    %v1277 = vunpack.c.l.b16 %v1211
    %v1278 = vunpack.c.l.b16 %v1212
    %v1279 = vunpack.c.h.b16 %v1211
    %v1280 = vunpack.c.h.b16 %v1212
    %v1281 = vunpack.c.l.b16 %v1213
    %v1282 = vunpack.c.l.b16 %v1214
    %v1283 = vunpack.c.h.b16 %v1213
    %v1284 = vunpack.c.h.b16 %v1214
    %v1285 = vunpack.c.l.b16 %v1215
    %v1286 = vunpack.c.l.b16 %v1216
    %v1287 = vunpack.c.h.b16 %v1215
    %v1288 = vunpack.c.h.b16 %v1216
    %v1289 = vunpack.c.l.b16 %v1217
    %v1290 = vunpack.c.l.b16 %v1218
    %v1291 = vunpack.c.h.b16 %v1217
    %v1292 = vunpack.c.h.b16 %v1218
    %v1293 = vunpack.c.l.b16 %v1219
    %v1294 = vunpack.c.l.b16 %v1220
    %v1295 = vunpack.c.h.b16 %v1219
    %v1296 = vunpack.c.h.b16 %v1220
    %v1297 = vunpack.c.l.b16 %v1221
    %v1298 = vunpack.c.l.b16 %v1222
    %v1299 = vunpack.c.h.b16 %v1221
    %v1300 = vunpack.c.h.b16 %v1222
    %v1301 = vunpack.c.l.b16 %v1223
    %v1302 = vunpack.c.l.b16 %v1224
    %v1303 = vunpack.c.h.b16 %v1223
    %v1304 = vunpack.c.h.b16 %v1224
    %v1305 = vunpack.c.l.b16 %v1225
    %v1306 = vunpack.c.l.b16 %v1226
    %v1307 = vunpack.c.h.b16 %v1225
    %v1308 = vunpack.c.h.b16 %v1226
    %v1309 = vunpack.c.l.b16 %v1227
    %v1310 = vunpack.c.l.b16 %v1228
    %v1311 = vunpack.c.h.b16 %v1227
    %v1312 = vunpack.c.h.b16 %v1228
    %v1313 = vunpack.c.l.b16 %v1229
    %v1314 = vunpack.c.l.b16 %v1230
    %v1315 = vunpack.c.h.b16 %v1229
    %v1316 = vunpack.c.h.b16 %v1230
    %v1317 = vunpack.c.l.b16 %v1231
    %v1318 = vunpack.c.l.b16 %v1232
    %v1319 = vunpack.c.h.b16 %v1231
    %v1320 = vunpack.c.h.b16 %v1232
    %v1321 = vunpack.c.l.b16 %v1233
    %v1322 = vunpack.c.l.b16 %v1234
    %v1323 = vunpack.c.h.b16 %v1233
    %v1324 = vunpack.c.h.b16 %v1234
    %v1325 = vunpack.c.l.b16 %v1235
    %v1326 = vunpack.c.l.b16 %v1236
    %v1327 = vunpack.c.h.b16 %v1235
    %v1328 = vunpack.c.h.b16 %v1236
    %v1329 = vunpack.c.l.b16 %v1237
    %v1330 = vunpack.c.l.b16 %v1238
    %v1331 = vunpack.c.h.b16 %v1237
    %v1332 = vunpack.c.h.b16 %v1238
    %v1333 = vunpack.c.l.b16 %v1239
    %v1334 = vunpack.c.l.b16 %v1240
    %v1335 = vunpack.c.h.b16 %v1239
    %v1336 = vunpack.c.h.b16 %v1240
    %v1337 = vpack.c.b16 %v1274, %v1273
    %v1338 = vpack.c.b16 %v1276, %v1275
    %v1339 = vpack.c.b16 %v1278, %v1277
    %v1340 = vpack.c.b16 %v1280, %v1279
    %v1341 = vpack.c.b16 %v1282, %v1281
    %v1342 = vpack.c.b16 %v1284, %v1283
    %v1343 = vpack.c.b16 %v1286, %v1285
    %v1344 = vpack.c.b16 %v1288, %v1287
    %v1345 = vpack.c.b16 %v1290, %v1289
    %v1346 = vpack.c.b16 %v1292, %v1291
    %v1347 = vpack.c.b16 %v1294, %v1293
    %v1348 = vpack.c.b16 %v1296, %v1295
    %v1349 = vpack.c.b16 %v1298, %v1297
    %v1350 = vpack.c.b16 %v1300, %v1299
    %v1351 = vpack.c.b16 %v1302, %v1301
    %v1352 = vpack.c.b16 %v1304, %v1303
    %v1353 = vpack.c.b16 %v1306, %v1305
    %v1354 = vpack.c.b16 %v1308, %v1307
    %v1355 = vpack.c.b16 %v1310, %v1309
    %v1356 = vpack.c.b16 %v1312, %v1311
    %v1357 = vpack.c.b16 %v1314, %v1313
    %v1358 = vpack.c.b16 %v1316, %v1315
    %v1359 = vpack.c.b16 %v1318, %v1317
    %v1360 = vpack.c.b16 %v1320, %v1319
    %v1361 = vpack.c.b16 %v1322, %v1321
    %v1362 = vpack.c.b16 %v1324, %v1323
    %v1363 = vpack.c.b16 %v1326, %v1325
    %v1364 = vpack.c.b16 %v1328, %v1327
    %v1365 = vpack.c.b16 %v1330, %v1329
    %v1366 = vpack.c.b16 %v1332, %v1331
    %v1367 = vpack.c.b16 %v1334, %v1333
    %v1368 = vpack.c.b16 %v1336, %v1335
    %1401 = vst [vmem:[%s4] sm:$0xff] %v1337
    %1402 = vst [vmem:[%s4 + $0x8] sm:$0xff] %v1338
    %1403 = vst [vmem:[%s4 + $0x10] sm:$0xff] %v1339
    %1404 = vst [vmem:[%s4 + $0x18] sm:$0xff] %v1340
    %1405 = vst [vmem:[%s4 + $0x20] sm:$0xff] %v1341
    %1406 = vst [vmem:[%s4 + $0x28] sm:$0xff] %v1342
    %1407 = vst [vmem:[%s4 + $0x30] sm:$0xff] %v1343
    %1408 = vst [vmem:[%s4 + $0x38] sm:$0xff] %v1344
    %1409 = vst [vmem:[%s4 + $0x40] sm:$0xff] %v1345
    %1410 = vst [vmem:[%s4 + $0x48] sm:$0xff] %v1346
    %1411 = vst [vmem:[%s4 + $0x50] sm:$0xff] %v1347
    %1412 = vst [vmem:[%s4 + $0x58] sm:$0xff] %v1348
    %1413 = vst [vmem:[%s4 + $0x60] sm:$0xff] %v1349
    %1414 = vst [vmem:[%s4 + $0x68] sm:$0xff] %v1350
    %1415 = vst [vmem:[%s4 + $0x70] sm:$0xff] %v1351
    %1416 = vst [vmem:[%s4 + $0x78] sm:$0xff] %v1352
    %1417 = vst [vmem:[%s4 + $0x80] sm:$0xff] %v1353
    %1418 = vst [vmem:[%s4 + $0x88] sm:$0xff] %v1354
    %1419 = vst [vmem:[%s4 + $0x90] sm:$0xff] %v1355
    %1420 = vst [vmem:[%s4 + $0x98] sm:$0xff] %v1356
    %1421 = vst [vmem:[%s4 + $0xa0] sm:$0xff] %v1357
    %1422 = vst [vmem:[%s4 + $0xa8] sm:$0xff] %v1358
    %1423 = vst [vmem:[%s4 + $0xb0] sm:$0xff] %v1359
    %1424 = vst [vmem:[%s4 + $0xb8] sm:$0xff] %v1360
    %1425 = vst [vmem:[%s4 + $0xc0] sm:$0xff] %v1361
    %1426 = vst [vmem:[%s4 + $0xc8] sm:$0xff] %v1362
    %1427 = vst [vmem:[%s4 + $0xd0] sm:$0xff] %v1363
    %1428 = vst [vmem:[%s4 + $0xd8] sm:$0xff] %v1364
    %1429 = vst [vmem:[%s4 + $0xe0] sm:$0xff] %v1365
    %1430 = vst [vmem:[%s4 + $0xe8] sm:$0xff] %v1366
    %1431 = vst [vmem:[%s4 + $0xf0] sm:$0xff] %v1367
    %1432 = vst [vmem:[%s4 + $0xf8] sm:$0xff] %v1368
    %v1433 = vadd.f32 %v1145, %v1147
    %v1434 = vadd.f32 %v1433, %v1149
    %v1435 = vadd.f32 %v1434, %v1151
    %v1436 = vadd.f32 %v1435, %v1153
    %v1437 = vadd.f32 %v1436, %v1155
    %v1438 = vadd.f32 %v1437, %v1157
    %v1439 = vadd.f32 %v1438, %v1159
    %v1440 = vadd.f32 %v1439, %v1161
    %v1441 = vadd.f32 %v1440, %v1163
    %v1442 = vadd.f32 %v1441, %v1165
    %v1443 = vadd.f32 %v1442, %v1167
    %v1444 = vadd.f32 %v1443, %v1169
    %v1445 = vadd.f32 %v1444, %v1171
    %v1446 = vadd.f32 %v1445, %v1173
    %v1447 = vadd.f32 %v1446, %v1175
    %v1448 = vadd.f32 %v1447, %v1177
    %v1449 = vadd.f32 %v1448, %v1179
    %v1450 = vadd.f32 %v1449, %v1181
    %v1451 = vadd.f32 %v1450, %v1183
    %v1452 = vadd.f32 %v1451, %v1185
    %v1453 = vadd.f32 %v1452, %v1187
    %v1454 = vadd.f32 %v1453, %v1189
    %v1455 = vadd.f32 %v1454, %v1191
    %v1456 = vadd.f32 %v1455, %v1193
    %v1457 = vadd.f32 %v1456, %v1195
    %v1458 = vadd.f32 %v1457, %v1197
    %v1459 = vadd.f32 %v1458, %v1199
    %v1460 = vadd.f32 %v1459, %v1201
    %v1461 = vadd.f32 %v1460, %v1203
    %v1462 = vadd.f32 %v1461, %v1205
    %v1463 = vadd.f32 %v1462, %v1207
    %v1464 = vrot.slane %v1463, 4
    %v1465 = vadd.f32 %v1463, %v1464
    %v1466 = vrot.slane %v1465, 2
    %v1467 = vadd.f32 %v1465, %v1466
    %v1468 = vrot.slane %v1467, 1
    %v1469 = vadd.f32 %v1467, %v1468
    %1470 = vst [vmem:[%s5] sm:$0x1] %v1469
  $region25: #{infomax_forward.4} parent=0 // pred_fallthru
    _
  // Predicated region
  $region26: #{infomax_forward.4} parent=0 // pred_check
    _
  $region27: #{infomax_forward.4} parent=0 // pred_check_branch
    %1472 = sbr.rel (0) target = $region29
  $region28: #{infomax_forward.4} parent=0 // pred_region
    _
  $region29: #{infomax_forward.4} parent=0 // pred_fallthru
    _
  // Predicated region
  $region30: #{infomax_forward.4} parent=0 // pred_check
    _
  $region31: #{infomax_forward.4} parent=0 // pred_check_branch
    %1474 = sbr.rel (0) target = $region33
  $region32: #{infomax_forward.4} parent=0 // pred_region
    _
  $region33: #{infomax_forward.4} parent=0 // pred_fallthru
    _
  // Predicated region
  $region34: #{infomax_forward.4} parent=0 // pred_check
    _
  $region35: #{infomax_forward.4} parent=0 // pred_check_branch
    %1476 = sbr.rel (0) target = $region37
  $region36: #{infomax_forward.4} parent=0 // pred_region
    _
  $region37: #{infomax_forward.4} parent=0 // pred_fallthru
    _
  // Predicated region
  $region38: #{infomax_forward.4} parent=0 // pred_check
    _
  $region39: #{infomax_forward.4} parent=0 // pred_check_branch
    %1478 = sbr.rel (0) target = $region41
  $region40: #{infomax_forward.4} parent=0 // pred_region
    _
  $region41: #{infomax_forward.4} parent=0 // pred_fallthru
    _

</llo_original>
